<compile_context>
chip_gen: v5e
topology: v5e:2x2
jax: 0.10.0
libtpu: 0.0.40
codegen_flags: <defaults>
</compile_context>

<pallas_src>
import jax
import jax.numpy as jnp
from jax.experimental import pallas as pl
from jax.experimental.pallas import tpu as pltpu

NUM_CLASS = 11
PADDING_CLASS = 0
EMB_DIM = 512
H1_DIM = 256
H2_DIM = 128
CLS_PAD = 128          # class axis of the fused table padded to a full lane width
TILE_N = 1024          # rows processed per grid step


def _vae_kernel(ids_ref, fw1_ref, b1_ref, w2_ref, b2_ref, wmu_ref, bmu_ref,
                eps_ref, out_ref):
    # one-hot class selection (bf16).  The PADDING_CLASS row of fw1 is zero, so a
    # padding id contributes nothing -- same effect as the custom embedding layer.
    ids = ids_ref[...]                                              # (TILE_N, 1) int32
    cls = jax.lax.broadcasted_iota(jnp.int32, (TILE_N, CLS_PAD), 1)
    onehot = (cls == ids).astype(jnp.bfloat16)                      # (TILE_N, 128)

    # fused custom_embedding + Linear(512,256): onehot @ (table @ W1) + b1, ReLU
    h1 = jnp.maximum(
        jnp.dot(onehot, fw1_ref[...], preferred_element_type=jnp.float32)
        + b1_ref[...], 0.0)                                         # (TILE_N, 256) f32

    # Linear(256,128) + ReLU
    h2 = jnp.maximum(
        jnp.dot(h1.astype(jnp.bfloat16), w2_ref[...],
                preferred_element_type=jnp.float32) + b2_ref[...], 0.0)

    # mu_layer (applied twice in the PyTorch code, so sigma == mu)
    mu = jnp.dot(h2.astype(jnp.bfloat16), wmu_ref[...],
                 preferred_element_type=jnp.float32) + bmu_ref[...]
    sigma = mu
    std = jnp.exp(0.5 * sigma)

    # reparameterization
    out_ref[...] = mu + std * eps_ref[...]


def vae_v1_forward(x_ids, kernel_params, eps):
    """x_ids: int32 (B, H, W); eps: f32 (B*H*W, 128). Returns latent (B, H, W, 128)."""
    B, Hs, Ws = x_ids.shape
    N = B * Hs * Ws
    n_tiles = pl.cdiv(N, TILE_N)
    n_pad = n_tiles * TILE_N

    ids2d = x_ids.reshape(N, 1).astype(jnp.int32)
    if n_pad != N:
        ids2d = jnp.pad(ids2d, ((0, n_pad - N), (0, 0)),
                        constant_values=PADDING_CLASS)
        eps = jnp.pad(eps, ((0, n_pad - N), (0, 0)))

    fw1, b1, w2, b2, wmu, bmu = kernel_params
    full = lambda i: (0, 0)

    latent = pl.pallas_call(
        _vae_kernel,
        out_shape=jax.ShapeDtypeStruct((n_pad, H2_DIM), jnp.float32),
        grid=(n_tiles,),
        in_specs=[
            pl.BlockSpec((TILE_N, 1), lambda i: (i, 0)),          # ids
            pl.BlockSpec((CLS_PAD, H1_DIM), full),                # fused table@W1 (bf16)
            pl.BlockSpec((1, H1_DIM), full),                      # b1
            pl.BlockSpec((H1_DIM, H2_DIM), full),                 # W2 (bf16)
            pl.BlockSpec((1, H2_DIM), full),                      # b2
            pl.BlockSpec((H2_DIM, H2_DIM), full),                 # Wmu (bf16)
            pl.BlockSpec((1, H2_DIM), full),                      # bmu
            pl.BlockSpec((TILE_N, H2_DIM), lambda i: (i, 0)),     # eps
        ],
        out_specs=pl.BlockSpec((TILE_N, H2_DIM), lambda i: (i, 0)),
        compiler_params=pltpu.CompilerParams(
            dimension_semantics=("parallel",),        # megacore sharding on v7x
            vmem_limit_bytes=16 * 1024 * 1024,        # ~5 MiB working set; safe on v5e
        ),
    )(ids2d, fw1, b1, w2, b2, wmu, bmu, eps)

    return latent[:N].reshape(B, Hs, Ws, H2_DIM)


def init_raw_params(key):
    """Deterministic synthetic f32 parameters, shapes per the module's __init__.

    Linear weights are stored transposed as (in_features, out_features)."""
    ks = jax.random.split(key, 7)
    emb = jax.random.normal(ks[0], (NUM_CLASS, EMB_DIM), jnp.float32) * 0.05
    w1 = jax.random.normal(ks[1], (EMB_DIM, H1_DIM), jnp.float32) * 0.05
    b1 = jax.random.normal(ks[2], (1, H1_DIM), jnp.float32) * 0.05
    w2 = jax.random.normal(ks[3], (H1_DIM, H2_DIM), jnp.float32) * 0.05
    b2 = jax.random.normal(ks[4], (1, H2_DIM), jnp.float32) * 0.05
    wmu = jax.random.normal(ks[5], (H2_DIM, H2_DIM), jnp.float32) * 0.05
    bmu = jax.random.normal(ks[6], (1, H2_DIM), jnp.float32) * 0.05
    return (emb, w1, b1, w2, b2, wmu, bmu)


def pack_kernel_params(raw):
    """Fuse table@W1, zero the padding row, pad to a lane width, cast weights to bf16."""
    emb, w1, b1, w2, b2, wmu, bmu = raw
    fused = emb @ w1                                   # (11, 256), exact linear fusion
    fused = fused.at[PADDING_CLASS].set(0.0)           # padding class contributes zero
    fused_p = jnp.zeros((CLS_PAD, H1_DIM), jnp.float32).at[:NUM_CLASS].set(fused)
    return (fused_p.astype(jnp.bfloat16), b1,
            w2.astype(jnp.bfloat16), b2,
            wmu.astype(jnp.bfloat16), bmu)


def vae_v1_reference(x_ids, raw, eps):
    """Pure-JAX f32 reference of the original (unfused) forward math."""
    emb, w1, b1, w2, b2, wmu, bmu = raw
    B, Hs, Ws = x_ids.shape
    ids = x_ids.reshape(-1).astype(jnp.int32)
    e = emb[ids] * (ids[:, None] != PADDING_CLASS).astype(jnp.float32)
    h1 = jax.nn.relu(e @ w1 + b1)
    h2 = jax.nn.relu(h1 @ w2 + b2)
    mu = h2 @ wmu + bmu
    std = jnp.exp(0.5 * mu)
    return (mu + std * eps).reshape(B, Hs, Ws, H2_DIM)


if __name__ == "__main__":
    key = jax.random.PRNGKey(0)
    k_param, k_ids, k_eps = jax.random.split(key, 3)

    # Integer class map (B, H, W); the module works on 30x30 grids (900 cells).
    B, Hs, Ws = 2, 30, 30
    x_ids = jax.random.randint(k_ids, (B, Hs, Ws), 0, NUM_CLASS, dtype=jnp.int32)

    raw = init_raw_params(k_param)
    kernel_params = pack_kernel_params(raw)
    eps = jax.random.normal(k_eps, (B * Hs * Ws, H2_DIM), jnp.float32)

    latent = vae_v1_forward(x_ids, kernel_params, eps)
    jax.block_until_ready(latent)

    assert latent.shape == (B, Hs, Ws, H2_DIM)
    assert latent.dtype == jnp.float32
    assert bool(jnp.all(jnp.isfinite(latent)))

    # correctness check vs. pure-JAX f32 reference (bf16 weights -> loose tolerance)
    ref = vae_v1_reference(x_ids, raw, eps)
    max_err = float(jnp.max(jnp.abs(latent - ref)))
    assert max_err < 2e-2, f"max abs error {max_err} too large"

    print("KERNEL_OK")
</pallas_src>

<mosaic_0001>
module attributes {stable_mosaic.version = 11 : i64} {
  func.func @_vae_kernel(%arg0: i32, %arg1: memref<1024x1xi32, #tpu.memory_space<vmem>>, %arg2: memref<128x256xbf16, #tpu.memory_space<vmem>>, %arg3: memref<1x256xf32, #tpu.memory_space<vmem>>, %arg4: memref<256x128xbf16, #tpu.memory_space<vmem>>, %arg5: memref<1x128xf32, #tpu.memory_space<vmem>>, %arg6: memref<128x128xbf16, #tpu.memory_space<vmem>>, %arg7: memref<1x128xf32, #tpu.memory_space<vmem>>, %arg8: memref<1024x128xf32, #tpu.memory_space<vmem>>, %arg9: memref<1024x128xf32, #tpu.memory_space<vmem>>) attributes {dimension_semantics = [#tpu.dimension_semantics<parallel>], iteration_bounds = array<i64: 2>, scalar_prefetch = 0 : i64, scratch_operands = 0 : i64, tpu.core_type = #tpu.core_type<tc>, window_params = [{transform_indices = @transform_0, window_bounds = array<i64: 1024, 1>}, {pipeline_mode = #tpu.pipeline_mode<synchronous>, transform_indices = @transform_1, window_bounds = array<i64: 128, 256>}, {pipeline_mode = #tpu.pipeline_mode<synchronous>, transform_indices = @transform_2, window_bounds = array<i64: 1, 256>}, {pipeline_mode = #tpu.pipeline_mode<synchronous>, transform_indices = @transform_3, window_bounds = array<i64: 256, 128>}, {pipeline_mode = #tpu.pipeline_mode<synchronous>, transform_indices = @transform_4, window_bounds = array<i64: 1, 128>}, {pipeline_mode = #tpu.pipeline_mode<synchronous>, transform_indices = @transform_5, window_bounds = array<i64: 128, 128>}, {pipeline_mode = #tpu.pipeline_mode<synchronous>, transform_indices = @transform_6, window_bounds = array<i64: 1, 128>}, {transform_indices = @transform_7, window_bounds = array<i64: 1024, 128>}, {transform_indices = @transform_8, window_bounds = array<i64: 1024, 128>}]} {
    %c0 = arith.constant 0 : index
    %c0_0 = arith.constant 0 : index
    %0 = vector.load %arg1[%c0, %c0_0] : memref<1024x1xi32, #tpu.memory_space<vmem>>, vector<1024x1xi32>
    %1 = tpu.iota {dimensions = array<i32: 1>} : vector<1024x128xi32>
    %2 = vector.broadcast %0 : vector<1024x1xi32> to vector<1024x128xi32>
    %3 = arith.cmpi eq, %1, %2 : vector<1024x128xi32>
    %4 = arith.extui %3 : vector<1024x128xi1> to vector<1024x128xi32>
    %5 = arith.sitofp %4 : vector<1024x128xi32> to vector<1024x128xf32>
    %6 = arith.truncf %5 : vector<1024x128xf32> to vector<1024x128xbf16>
    %c0_1 = arith.constant 0 : index
    %c0_2 = arith.constant 0 : index
    %7 = vector.load %arg2[%c0_1, %c0_2] : memref<128x256xbf16, #tpu.memory_space<vmem>>, vector<128x256xbf16>
    %cst = arith.constant dense<0.000000e+00> : vector<1024x256xf32>
    %8 = tpu.matmul %6, %7, %cst {dimension_numbers = #tpu.dot_dimension_numbers<[1], [0], [0], [1], [0, 0, 1, 1], [], []>} : vector<1024x128xbf16>, vector<128x256xbf16>, vector<1024x256xf32> -> vector<1024x256xf32>
    %c0_3 = arith.constant 0 : index
    %c0_4 = arith.constant 0 : index
    %9 = vector.load %arg3[%c0_3, %c0_4] : memref<1x256xf32, #tpu.memory_space<vmem>>, vector<1x256xf32>
    %10 = vector.broadcast %9 : vector<1x256xf32> to vector<1024x256xf32>
    %11 = arith.addf %8, %10 : vector<1024x256xf32>
    %cst_5 = arith.constant 0.000000e+00 : f32
    %12 = vector.broadcast %cst_5 : f32 to vector<1024x256xf32>
    %13 = arith.maximumf %11, %12 : vector<1024x256xf32>
    %14 = arith.truncf %13 : vector<1024x256xf32> to vector<1024x256xbf16>
    %c0_6 = arith.constant 0 : index
    %c0_7 = arith.constant 0 : index
    %15 = vector.load %arg4[%c0_6, %c0_7] : memref<256x128xbf16, #tpu.memory_space<vmem>>, vector<256x128xbf16>
    %cst_8 = arith.constant dense<0.000000e+00> : vector<1024x128xf32>
    %16 = tpu.matmul %14, %15, %cst_8 {dimension_numbers = #tpu.dot_dimension_numbers<[1], [0], [0], [1], [0, 0, 1, 1], [], []>} : vector<1024x256xbf16>, vector<256x128xbf16>, vector<1024x128xf32> -> vector<1024x128xf32>
    %c0_9 = arith.constant 0 : index
    %c0_10 = arith.constant 0 : index
    %17 = vector.load %arg5[%c0_9, %c0_10] : memref<1x128xf32, #tpu.memory_space<vmem>>, vector<1x128xf32>
    %18 = vector.broadcast %17 : vector<1x128xf32> to vector<1024x128xf32>
    %19 = arith.addf %16, %18 : vector<1024x128xf32>
    %cst_11 = arith.constant 0.000000e+00 : f32
    %20 = vector.broadcast %cst_11 : f32 to vector<1024x128xf32>
    %21 = arith.maximumf %19, %20 : vector<1024x128xf32>
    %22 = arith.truncf %21 : vector<1024x128xf32> to vector<1024x128xbf16>
    %c0_12 = arith.constant 0 : index
    %c0_13 = arith.constant 0 : index
    %23 = vector.load %arg6[%c0_12, %c0_13] : memref<128x128xbf16, #tpu.memory_space<vmem>>, vector<128x128xbf16>
    %cst_14 = arith.constant dense<0.000000e+00> : vector<1024x128xf32>
    %24 = tpu.matmul %22, %23, %cst_14 {dimension_numbers = #tpu.dot_dimension_numbers<[1], [0], [0], [1], [0, 0, 1, 1], [], []>} : vector<1024x128xbf16>, vector<128x128xbf16>, vector<1024x128xf32> -> vector<1024x128xf32>
    %c0_15 = arith.constant 0 : index
    %c0_16 = arith.constant 0 : index
    %25 = vector.load %arg7[%c0_15, %c0_16] : memref<1x128xf32, #tpu.memory_space<vmem>>, vector<1x128xf32>
    %26 = vector.broadcast %25 : vector<1x128xf32> to vector<1024x128xf32>
    %27 = arith.addf %24, %26 : vector<1024x128xf32>
    %cst_17 = arith.constant 5.000000e-01 : f32
    %28 = vector.broadcast %cst_17 : f32 to vector<1024x128xf32>
    %29 = arith.mulf %28, %27 : vector<1024x128xf32>
    %30 = math.exp %29 : vector<1024x128xf32>
    %c0_18 = arith.constant 0 : index
    %c0_19 = arith.constant 0 : index
    %31 = vector.load %arg8[%c0_18, %c0_19] : memref<1024x128xf32, #tpu.memory_space<vmem>>, vector<1024x128xf32>
    %32 = arith.mulf %30, %31 : vector<1024x128xf32>
    %33 = arith.addf %27, %32 : vector<1024x128xf32>
    %c0_20 = arith.constant 0 : index
    %c0_21 = arith.constant 0 : index
    %34 = vector.load %arg9[%c0_20, %c0_21] : memref<1024x128xf32, #tpu.memory_space<vmem>>, vector<1024x128xf32>
    tpu.vector_store %arg9[%c0_20, %c0_21], %33 {strides = array<i32>} : memref<1024x128xf32, #tpu.memory_space<vmem>>, vector<1024x128xf32>,
    return
  }
  func.func @transform_0(%arg0: i32) -> (i32, i32) {
    %c0_i32 = arith.constant 0 : i32
    %c0_i32_0 = arith.constant 0 : i32
    return %arg0, %c0_i32 : i32, i32
  }
  func.func @transform_1(%arg0: i32) -> (i32, i32) {
    %c0_i32 = arith.constant 0 : i32
    %c0_i32_0 = arith.constant 0 : i32
    %c0_i32_1 = arith.constant 0 : i32
    return %c0_i32, %c0_i32_0 : i32, i32
  }
  func.func @transform_2(%arg0: i32) -> (i32, i32) {
    %c0_i32 = arith.constant 0 : i32
    %c0_i32_0 = arith.constant 0 : i32
    %c0_i32_1 = arith.constant 0 : i32
    return %c0_i32, %c0_i32_0 : i32, i32
  }
  func.func @transform_3(%arg0: i32) -> (i32, i32) {
    %c0_i32 = arith.constant 0 : i32
    %c0_i32_0 = arith.constant 0 : i32
    %c0_i32_1 = arith.constant 0 : i32
    return %c0_i32, %c0_i32_0 : i32, i32
  }
  func.func @transform_4(%arg0: i32) -> (i32, i32) {
    %c0_i32 = arith.constant 0 : i32
    %c0_i32_0 = arith.constant 0 : i32
    %c0_i32_1 = arith.constant 0 : i32
    return %c0_i32, %c0_i32_0 : i32, i32
  }
  func.func @transform_5(%arg0: i32) -> (i32, i32) {
    %c0_i32 = arith.constant 0 : i32
    %c0_i32_0 = arith.constant 0 : i32
    %c0_i32_1 = arith.constant 0 : i32
    return %c0_i32, %c0_i32_0 : i32, i32
  }
  func.func @transform_6(%arg0: i32) -> (i32, i32) {
    %c0_i32 = arith.constant 0 : i32
    %c0_i32_0 = arith.constant 0 : i32
    %c0_i32_1 = arith.constant 0 : i32
    return %c0_i32, %c0_i32_0 : i32, i32
  }
  func.func @transform_7(%arg0: i32) -> (i32, i32) {
    %c0_i32 = arith.constant 0 : i32
    %c0_i32_0 = arith.constant 0 : i32
    return %arg0, %c0_i32 : i32, i32
  }
  func.func @transform_8(%arg0: i32) -> (i32, i32) {
    %c0_i32 = arith.constant 0 : i32
    %c0_i32_0 = arith.constant 0 : i32
    return %arg0, %c0_i32 : i32, i32
  }
}

</mosaic_0001>

<llo_original>
// kernel: tpu_custom_call.1
$region0: #{tpu_custom_call.1}
  #allocation0 [shape = 'u32[]', space=smem, size = 0x4, offset = 0x4, fixed_abs, tag = 'smem constant byte address 0x4 - core index']
  #allocation1 [shape = 'u32[72,128]{1,0:T(1,128)}', space=vmem, size = 0x9000, scoped, tag = 'internal scratch']
  %s0 = inlined_call_operand.vmem [shape: s32[2048,1], index: 0, kind: input, shape index: {}]
  %s1 = inlined_call_operand.hbm [shape: bf16[128,256], index: 1, kind: input, shape index: {}]
  %s2 = inlined_call_operand.vmem [shape: f32[1,256], index: 2, kind: input, shape index: {}]
  %s3 = inlined_call_operand.hbm [shape: bf16[256,128], index: 3, kind: input, shape index: {}]
  %s4 = inlined_call_operand.vmem [shape: f32[1,128], index: 4, kind: input, shape index: {}]
  %s5 = inlined_call_operand.hbm [shape: bf16[128,128], index: 5, kind: input, shape index: {}]
  %s6 = inlined_call_operand.vmem [shape: f32[1,128], index: 6, kind: input, shape index: {}]
  %s7 = inlined_call_operand.vmem [shape: f32[2048,128], index: 7, kind: input, shape index: {}]
  %s8 = inlined_call_operand.hbm [shape: f32[2048,128], index: 8, kind: output, shape index: {}]
  %s9 = sld [smem:[#allocation0]]
  $region77: #{tpu_custom_call.1} parent=0
    _
  %s11 = ssub.s32 1, %s9
  %s12 = scalar_select 0, %s11, %s9
  $region1: #{tpu_custom_call.1} parent=0
    #allocation2 [shape = 'u8[65536]{0}', space=vmem, size = 0x10000, scoped, tag = 'input window, operand 1, single buffered']
    #allocation3 [shape = 's32[2]{0}', space=sflag, size = 0x8, scoped, tag = 'scoped memory for tpu_custom_call.1']
    #allocation4 [shape = 's32[2]{0}', space=sflag, size = 0x8, scoped, tag = 'scoped memory for tpu_custom_call.1']
    #allocation5 [shape = 'u8[65536]{0}', space=vmem, size = 0x10000, scoped, tag = 'input window, operand 3, single buffered']
    #allocation6 [shape = 's32[1]{0}', space=sflag, size = 0x4, scoped, tag = 'scoped memory for tpu_custom_call.1']
    #allocation7 [shape = 'u8[32768]{0}', space=vmem, size = 0x8000, scoped, tag = 'input window, operand 5, single buffered']
    #allocation8 [shape = 'u8[1048576]{0}', space=vmem, size = 0x100000, scoped, tag = 'output window, operand 0']
    %13 = vsyncpa [#allocation3], 0
    %14 = vsyncpa [#allocation6], 0
    %15 = vsyncpa [#allocation4], 0
    %s16 = scalar_lea.sflag [#allocation4], 1
    %17 = vsyncpa %s16, 0
    loop: start=0, step=1, limit=4
    $region2: #{tpu_custom_call.1} parent=1 // loop_pre_header
      _
    $region3: #{tpu_custom_call.1} parent=1 // loop_header
      %s19 = sphi 0, %s23
      %p20 = scmp.ge.s32.totalorder %s19, 4
      %s29 = sphi 0, %s31
      %s32 = sphi 0, %s29
      %s33 = sphi 0, %s32
      %s49 = sphi 0, %s33
      %s53 = sphi 0, %s53
      %s55 = sphi 0, %s53
      %s56 = sphi 0, %s55
      %s70 = sphi 0, %s56
      %s74 = sphi 0, %s74
      %s76 = sphi 0, %s74
      %s77 = sphi 0, %s76
      %s91 = sphi 0, %s77
      %s95 = sphi 0, %s95
      %s97 = sphi 0, %s95
      %s98 = sphi 0, %s97
      %s112 = sphi 0, %s98
      %s116 = sphi 0, %s116
      %s118 = sphi 0, %s116
      %s119 = sphi 0, %s118
      %s133 = sphi 0, %s119
      %s137 = sphi 0, %s137
      %s139 = sphi 0, %s137
      %s140 = sphi 0, %s139
      %s154 = sphi 0, %s140
      %s158 = sphi 0, %s158
      %s160 = sphi 0, %s158
      %s161 = sphi 0, %s160
      %s175 = sphi 0, %s161
      %s181 = sphi 0, %s183
      %s184 = sphi 0, %s181
      %s185 = sphi 0, %s184
      %s201 = sphi 0, %s185
      %s207 = sphi 0, %s209
      %s210 = sphi 0, %s207
      %s211 = sphi 0, %s210
      %s227 = sphi 0, %s211
    $region4: #{tpu_custom_call.1} parent=1 // loop_header_branch
      %22 = sbr.rel (%p20) target = $region8
    $region5: #{tpu_custom_call.1} parent=1 // loop_body
      %s24 = ssub.s32 %s19, 1
      %s25 = ssub.s32 %s19, 2
      %s26 = sadd.s32 %s19, 1
      %s27 = ssub.s32 %s19, %s26
      %p28 = scmp.eq.s32.totalorder %s27, 0
      %s30 = sadd.s32 %s29, 1
      %s31 = scalar_select %p28, %s29, %s30
      %p34 = pneg %p28
      %p35 = scmp.eq.s32.totalorder %s19, 1
      %p36 = por %p34, %p35
      %p37 = scmp.ne.s32.totalorder %s29, %s32
      %p38 = scmp.eq.s32.totalorder %s19, 0
      %p39 = por %p37, %p38
      %p40 = scmp.ne.s32.totalorder %s29, %s32
      %p41 = scmp.eq.s32.totalorder %s24, 1
      %p42 = por %p40, %p41
      %p43 = scmp.ne.s32.totalorder %s32, %s33
      %p44 = scmp.eq.s32.totalorder %s24, 0
      %p45 = por %p43, %p44
      %p46 = scmp.ne.s32.totalorder %s32, %s33
      %p47 = scmp.eq.s32.totalorder %s25, 1
      %p48 = por %p46, %p47
      %p50 = scmp.ne.s32.totalorder %s33, %s49
      %p51 = scmp.eq.s32.totalorder %s25, 0
      %p52 = por %p50, %p51
      %s54 = sadd.s32 %s53, 1
      %p57 = scmp.eq.s32.totalorder %s19, 1
      %p58 = scmp.ne.s32.totalorder %s53, %s55
      %p59 = scmp.eq.s32.totalorder %s19, 0
      %p60 = por %p58, %p59
      %p61 = scmp.ne.s32.totalorder %s53, %s55
      %p62 = scmp.eq.s32.totalorder %s24, 1
      %p63 = por %p61, %p62
      %p64 = scmp.ne.s32.totalorder %s55, %s56
      %p65 = scmp.eq.s32.totalorder %s24, 0
      %p66 = por %p64, %p65
      %p67 = scmp.ne.s32.totalorder %s55, %s56
      %p68 = scmp.eq.s32.totalorder %s25, 1
      %p69 = por %p67, %p68
      %p71 = scmp.ne.s32.totalorder %s56, %s70
      %p72 = scmp.eq.s32.totalorder %s25, 0
      %p73 = por %p71, %p72
      %s75 = sadd.s32 %s74, 1
      %p78 = scmp.eq.s32.totalorder %s19, 1
      %p79 = scmp.ne.s32.totalorder %s74, %s76
      %p80 = scmp.eq.s32.totalorder %s19, 0
      %p81 = por %p79, %p80
      %p82 = scmp.ne.s32.totalorder %s74, %s76
      %p83 = scmp.eq.s32.totalorder %s24, 1
      %p84 = por %p82, %p83
      %p85 = scmp.ne.s32.totalorder %s76, %s77
      %p86 = scmp.eq.s32.totalorder %s24, 0
      %p87 = por %p85, %p86
      %p88 = scmp.ne.s32.totalorder %s76, %s77
      %p89 = scmp.eq.s32.totalorder %s25, 1
      %p90 = por %p88, %p89
      %p92 = scmp.ne.s32.totalorder %s77, %s91
      %p93 = scmp.eq.s32.totalorder %s25, 0
      %p94 = por %p92, %p93
      %s96 = sadd.s32 %s95, 1
      %p99 = scmp.eq.s32.totalorder %s19, 1
      %p100 = scmp.ne.s32.totalorder %s95, %s97
      %p101 = scmp.eq.s32.totalorder %s19, 0
      %p102 = por %p100, %p101
      %p103 = scmp.ne.s32.totalorder %s95, %s97
      %p104 = scmp.eq.s32.totalorder %s24, 1
      %p105 = por %p103, %p104
      %p106 = scmp.ne.s32.totalorder %s97, %s98
      %p107 = scmp.eq.s32.totalorder %s24, 0
      %p108 = por %p106, %p107
      %p109 = scmp.ne.s32.totalorder %s97, %s98
      %p110 = scmp.eq.s32.totalorder %s25, 1
      %p111 = por %p109, %p110
      %p113 = scmp.ne.s32.totalorder %s98, %s112
      %p114 = scmp.eq.s32.totalorder %s25, 0
      %p115 = por %p113, %p114
      %s117 = sadd.s32 %s116, 1
      %p120 = scmp.eq.s32.totalorder %s19, 1
      %p121 = scmp.ne.s32.totalorder %s116, %s118
      %p122 = scmp.eq.s32.totalorder %s19, 0
      %p123 = por %p121, %p122
      %p124 = scmp.ne.s32.totalorder %s116, %s118
      %p125 = scmp.eq.s32.totalorder %s24, 1
      %p126 = por %p124, %p125
      %p127 = scmp.ne.s32.totalorder %s118, %s119
      %p128 = scmp.eq.s32.totalorder %s24, 0
      %p129 = por %p127, %p128
      %p130 = scmp.ne.s32.totalorder %s118, %s119
      %p131 = scmp.eq.s32.totalorder %s25, 1
      %p132 = por %p130, %p131
      %p134 = scmp.ne.s32.totalorder %s119, %s133
      %p135 = scmp.eq.s32.totalorder %s25, 0
      %p136 = por %p134, %p135
      %s138 = sadd.s32 %s137, 1
      %p141 = scmp.eq.s32.totalorder %s19, 1
      %p142 = scmp.ne.s32.totalorder %s137, %s139
      %p143 = scmp.eq.s32.totalorder %s19, 0
      %p144 = por %p142, %p143
      %p145 = scmp.ne.s32.totalorder %s137, %s139
      %p146 = scmp.eq.s32.totalorder %s24, 1
      %p147 = por %p145, %p146
      %p148 = scmp.ne.s32.totalorder %s139, %s140
      %p149 = scmp.eq.s32.totalorder %s24, 0
      %p150 = por %p148, %p149
      %p151 = scmp.ne.s32.totalorder %s139, %s140
      %p152 = scmp.eq.s32.totalorder %s25, 1
      %p153 = por %p151, %p152
      %p155 = scmp.ne.s32.totalorder %s140, %s154
      %p156 = scmp.eq.s32.totalorder %s25, 0
      %p157 = por %p155, %p156
      %s159 = sadd.s32 %s158, 1
      %p162 = scmp.eq.s32.totalorder %s19, 1
      %p163 = scmp.ne.s32.totalorder %s158, %s160
      %p164 = scmp.eq.s32.totalorder %s19, 0
      %p165 = por %p163, %p164
      %p166 = scmp.ne.s32.totalorder %s158, %s160
      %p167 = scmp.eq.s32.totalorder %s24, 1
      %p168 = por %p166, %p167
      %p169 = scmp.ne.s32.totalorder %s160, %s161
      %p170 = scmp.eq.s32.totalorder %s24, 0
      %p171 = por %p169, %p170
      %p172 = scmp.ne.s32.totalorder %s160, %s161
      %p173 = scmp.eq.s32.totalorder %s25, 1
      %p174 = por %p172, %p173
      %p176 = scmp.ne.s32.totalorder %s161, %s175
      %p177 = scmp.eq.s32.totalorder %s25, 0
      %p178 = por %p176, %p177
      %s179 = ssub.s32 %s19, %s26
      %p180 = scmp.eq.s32.totalorder %s179, 0
      %s182 = sadd.s32 %s181, 1
      %s183 = scalar_select %p180, %s181, %s182
      %p186 = pneg %p180
      %p187 = scmp.eq.s32.totalorder %s19, 1
      %p188 = por %p186, %p187
      %p189 = scmp.ne.s32.totalorder %s181, %s184
      %p190 = scmp.eq.s32.totalorder %s19, 0
      %p191 = por %p189, %p190
      %p192 = scmp.ne.s32.totalorder %s181, %s184
      %p193 = scmp.eq.s32.totalorder %s24, 1
      %p194 = por %p192, %p193
      %p195 = scmp.ne.s32.totalorder %s184, %s185
      %p196 = scmp.eq.s32.totalorder %s24, 0
      %p197 = por %p195, %p196
      %p198 = scmp.ne.s32.totalorder %s184, %s185
      %p199 = scmp.eq.s32.totalorder %s25, 1
      %p200 = por %p198, %p199
      %p202 = scmp.ne.s32.totalorder %s185, %s201
      %p203 = scmp.eq.s32.totalorder %s25, 0
      %p204 = por %p202, %p203
      %s205 = ssub.s32 %s19, %s26
      %p206 = scmp.eq.s32.totalorder %s205, 0
      %s208 = sadd.s32 %s207, 1
      %s209 = scalar_select %p206, %s207, %s208
      %p212 = pneg %p206
      %p213 = scmp.eq.s32.totalorder %s19, 1
      %p214 = por %p212, %p213
      %p215 = scmp.ne.s32.totalorder %s207, %s210
      %p216 = scmp.eq.s32.totalorder %s19, 0
      %p217 = por %p215, %p216
      %p218 = scmp.ne.s32.totalorder %s207, %s210
      %p219 = scmp.eq.s32.totalorder %s24, 1
      %p220 = por %p218, %p219
      %p221 = scmp.ne.s32.totalorder %s210, %s211
      %p222 = scmp.eq.s32.totalorder %s24, 0
      %p223 = por %p221, %p222
      %p224 = scmp.ne.s32.totalorder %s210, %s211
      %p225 = scmp.eq.s32.totalorder %s25, 1
      %p226 = por %p224, %p225
      %p228 = scmp.ne.s32.totalorder %s211, %s227
      %p229 = scmp.eq.s32.totalorder %s25, 0
      %p230 = por %p228, %p229
      %p231 = scmp.le.s32.totalorder 1, %s19
      %p232 = scmp.lt.s32.totalorder %s19, 3
      %p233 = pnand %p231, %p232
      %p234 = pneg %p233
      // Predicated region
      $region9: #{tpu_custom_call.1} parent=5 // pred_check
        _
      $region10: #{tpu_custom_call.1} parent=5 // pred_check_branch
        %236 = sbr.rel (%p233) target = $region12
      $region11: #{tpu_custom_call.1} parent=5 // pred_region
        %s237 = ssub.s32 %s19, 1
        // Predicated region
        $region13: #{tpu_custom_call.1} parent=11 // pred_check
          %p238 = pneg %p66
        $region14: #{tpu_custom_call.1} parent=11 // pred_check_branch
          %240 = sbr.rel (%p238) target = $region16
        $region15: #{tpu_custom_call.1} parent=11 // pred_region
          %242 = vsyncadd [#allocation3], 0
          %s243 = sshll.u32 %s1, 4
          %s244 = int_to_ptr.hbm [resolvable:$true] %s243
          %s245 = sshll.u32 [#allocation2], 4
          %s246 = int_to_ptr.vmem [resolvable:$true] %s245
          %251 = dma.hbm_to_vmem [thread:$0]  %s244, 2048, %s246, [#allocation3], 128, 128, 8
        $region16: #{tpu_custom_call.1} parent=11 // pred_fallthru
          _
        // Predicated region
        $region17: #{tpu_custom_call.1} parent=11 // pred_check
          %p252 = pneg %p87
        $region18: #{tpu_custom_call.1} parent=11 // pred_check_branch
          %254 = sbr.rel (%p252) target = $region20
        $region19: #{tpu_custom_call.1} parent=11 // pred_region
          _
        $region20: #{tpu_custom_call.1} parent=11 // pred_fallthru
          _
        // Predicated region
        $region21: #{tpu_custom_call.1} parent=11 // pred_check
          %p255 = pneg %p108
        $region22: #{tpu_custom_call.1} parent=11 // pred_check_branch
          %257 = sbr.rel (%p255) target = $region24
        $region23: #{tpu_custom_call.1} parent=11 // pred_region
          %259 = vsyncadd [#allocation6], 0
          %s260 = sshll.u32 %s3, 4
          %s261 = int_to_ptr.hbm [resolvable:$true] %s260
          %s262 = sshll.u32 [#allocation5], 4
          %s263 = int_to_ptr.vmem [resolvable:$true] %s262
          %268 = dma.hbm_to_vmem [thread:$0]  %s261, 2048, %s263, [#allocation6], 64, 64, 4
        $region24: #{tpu_custom_call.1} parent=11 // pred_fallthru
          _
        // Predicated region
        $region25: #{tpu_custom_call.1} parent=11 // pred_check
          %p269 = pneg %p129
        $region26: #{tpu_custom_call.1} parent=11 // pred_check_branch
          %271 = sbr.rel (%p269) target = $region28
        $region27: #{tpu_custom_call.1} parent=11 // pred_region
          _
        $region28: #{tpu_custom_call.1} parent=11 // pred_fallthru
          _
        // Predicated region
        $region29: #{tpu_custom_call.1} parent=11 // pred_check
          %p272 = pneg %p150
        $region30: #{tpu_custom_call.1} parent=11 // pred_check_branch
          %274 = sbr.rel (%p272) target = $region32
        $region31: #{tpu_custom_call.1} parent=11 // pred_region
          %276 = vsyncadd [#allocation6], 0
          %s277 = sshll.u32 %s5, 4
          %s278 = int_to_ptr.hbm [resolvable:$true] %s277
          %s279 = sshll.u32 [#allocation7], 4
          %s280 = int_to_ptr.vmem [resolvable:$true] %s279
          %285 = dma.hbm_to_vmem [thread:$0]  %s278, 1024, %s280, [#allocation6], 64, 64, 4
        $region32: #{tpu_custom_call.1} parent=11 // pred_fallthru
          _
        // Predicated region
        $region33: #{tpu_custom_call.1} parent=11 // pred_check
          %p286 = pneg %p171
        $region34: #{tpu_custom_call.1} parent=11 // pred_check_branch
          %288 = sbr.rel (%p286) target = $region36
        $region35: #{tpu_custom_call.1} parent=11 // pred_region
          _
        $region36: #{tpu_custom_call.1} parent=11 // pred_fallthru
          _
      $region12: #{tpu_custom_call.1} parent=5 // pred_fallthru
        _
      %p289 = scmp.lt.s32.totalorder %s19, 2
      // Predicated region
      $region37: #{tpu_custom_call.1} parent=5 // pred_check
        %p290 = pneg %p289
      $region38: #{tpu_custom_call.1} parent=5 // pred_check_branch
        %292 = sbr.rel (%p290) target = $region40
      $region39: #{tpu_custom_call.1} parent=5 // pred_region
        // Predicated region
        $region41: #{tpu_custom_call.1} parent=39 // pred_check
          %p293 = pneg %p39
        $region42: #{tpu_custom_call.1} parent=39 // pred_check_branch
          %295 = sbr.rel (%p293) target = $region44
        $region43: #{tpu_custom_call.1} parent=39 // pred_region
          %s296 = smul.u32 128, %s19
          %p297 = scmp.lt.s32.totalorder %s296, 255
          %s298 = scalar_select %p297, %s296, 255
          %s299 = smul.addr %s298, 8
          %s300 = scalar_lea.vmem %s0, %s299
          %s301 = smul.u32 128, %s19
        $region44: #{tpu_custom_call.1} parent=39 // pred_fallthru
          _
        // Predicated region
        $region45: #{tpu_custom_call.1} parent=39 // pred_check
          %p302 = pneg %p191
        $region46: #{tpu_custom_call.1} parent=39 // pred_check_branch
          %304 = sbr.rel (%p302) target = $region48
        $region47: #{tpu_custom_call.1} parent=39 // pred_region
          %s305 = smul.u32 128, %s19
          %p306 = scmp.lt.s32.totalorder %s305, 255
          %s307 = scalar_select %p306, %s305, 255
          %s308 = smul.addr %s307, 8
          %s309 = scalar_lea.vmem %s7, %s308
          %s310 = smul.u32 128, %s19
        $region48: #{tpu_custom_call.1} parent=39 // pred_fallthru
          _
      $region40: #{tpu_custom_call.1} parent=5 // pred_fallthru
        _
      %p311 = scmp.le.s32.totalorder 1, %s19
      %p312 = scmp.lt.s32.totalorder %s19, 3
      %p313 = pnand %p311, %p312
      %p314 = pneg %p313
      // Predicated region
      $region49: #{tpu_custom_call.1} parent=5 // pred_check
        _
      $region50: #{tpu_custom_call.1} parent=5 // pred_check_branch
        %316 = sbr.rel (%p313) target = $region52
      $region51: #{tpu_custom_call.1} parent=5 // pred_region
        %s317 = ssub.s32 %s19, 1
        // Predicated region
        $region53: #{tpu_custom_call.1} parent=51 // pred_check
          %p318 = pneg %p66
        $region54: #{tpu_custom_call.1} parent=51 // pred_check_branch
          %320 = sbr.rel (%p318) target = $region56
        $region55: #{tpu_custom_call.1} parent=51 // pred_region
          %322 = dma.done [#allocation3], 2048
        $region56: #{tpu_custom_call.1} parent=51 // pred_fallthru
          _
        // Predicated region
        $region57: #{tpu_custom_call.1} parent=51 // pred_check
          %p323 = pneg %p108
        $region58: #{tpu_custom_call.1} parent=51 // pred_check_branch
          %325 = sbr.rel (%p323) target = $region60
        $region59: #{tpu_custom_call.1} parent=51 // pred_region
          %327 = dma.done [#allocation6], 2048
        $region60: #{tpu_custom_call.1} parent=51 // pred_fallthru
          _
        // Predicated region
        $region61: #{tpu_custom_call.1} parent=51 // pred_check
          %p328 = pneg %p150
        $region62: #{tpu_custom_call.1} parent=51 // pred_check_branch
          %330 = sbr.rel (%p328) target = $region64
        $region63: #{tpu_custom_call.1} parent=51 // pred_region
          %332 = dma.done [#allocation6], 1024
        $region64: #{tpu_custom_call.1} parent=51 // pred_fallthru
          _
        %s333 = smul.u32 128, %s24
        %p334 = scmp.lt.s32.totalorder %s333, 255
        %s335 = scalar_select %p334, %s333, 255
        %s336 = smul.addr %s335, 8
        %s337 = scalar_lea.vmem %s0, %s336
        %p338 = pneg %p45
        %p339 = pneg %p42
        %p340 = pneg %p66
        %p341 = pneg %p63
        %p342 = pneg %p87
        %p343 = pneg %p84
        %p344 = pneg %p108
        %p345 = pneg %p105
        %p346 = pneg %p129
        %p347 = pneg %p126
        %p348 = pneg %p150
        %p349 = pneg %p147
        %p350 = pneg %p171
        %p351 = pneg %p168
        %s352 = smul.u32 128, %s24
        %p353 = scmp.lt.s32.totalorder %s352, 255
        %s354 = scalar_select %p353, %s352, 255
        %s355 = smul.addr %s354, 8
        %s356 = scalar_lea.vmem %s7, %s355
        %p357 = pneg %p197
        %p358 = pneg %p194
        %p359 = pneg %p223
        %p360 = pneg %p220
        %s361 = sand.u32 %s210, 1
        %s362 = scalar_lea.sflag [#allocation4], %s361
        %s363 = sand.u32 %s210, 1
        %s364 = smul.addr %s363, 1024
        %s365 = scalar_lea.vmem [#allocation8], %s364
        %s366 = smul.u32 128, %s24
        %p367 = scmp.lt.s32.totalorder %s366, 255
        %s368 = scalar_select %p367, %s366, 255
        %s369 = smul.addr %s368, 8
        %s370 = scalar_lea.vmem %s0, %s369
        %s371 = smul.u32 128, %s24
        %s372 = smul.u32 128, %s24
        %p373 = scmp.lt.s32.totalorder %s372, 255
        %s374 = scalar_select %p373, %s372, 255
        %s375 = smul.addr %s374, 8
        %s376 = scalar_lea.vmem %s7, %s375
        %s377 = smul.u32 128, %s24
        %s378 = smul.u32 128, %s24
        %v379 = vld [vmem:[%s370] sm:$0xff]
        %v380 = vld [vmem:[%s370 + $0x8] sm:$0xff]
        %v381 = vld [vmem:[%s370 + $0x10] sm:$0xff]
        %v382 = vld [vmem:[%s370 + $0x18] sm:$0xff]
        %v383 = vld [vmem:[%s370 + $0x20] sm:$0xff]
        %v384 = vld [vmem:[%s370 + $0x28] sm:$0xff]
        %v385 = vld [vmem:[%s370 + $0x30] sm:$0xff]
        %v386 = vld [vmem:[%s370 + $0x38] sm:$0xff]
        %v387 = vld [vmem:[%s370 + $0x40] sm:$0xff]
        %v388 = vld [vmem:[%s370 + $0x48] sm:$0xff]
        %v389 = vld [vmem:[%s370 + $0x50] sm:$0xff]
        %v390 = vld [vmem:[%s370 + $0x58] sm:$0xff]
        %v391 = vld [vmem:[%s370 + $0x60] sm:$0xff]
        %v392 = vld [vmem:[%s370 + $0x68] sm:$0xff]
        %v393 = vld [vmem:[%s370 + $0x70] sm:$0xff]
        %v394 = vld [vmem:[%s370 + $0x78] sm:$0xff]
        %v395 = vld [vmem:[%s370 + $0x80] sm:$0xff]
        %v396 = vld [vmem:[%s370 + $0x88] sm:$0xff]
        %v397 = vld [vmem:[%s370 + $0x90] sm:$0xff]
        %v398 = vld [vmem:[%s370 + $0x98] sm:$0xff]
        %v399 = vld [vmem:[%s370 + $0xa0] sm:$0xff]
        %v400 = vld [vmem:[%s370 + $0xa8] sm:$0xff]
        %v401 = vld [vmem:[%s370 + $0xb0] sm:$0xff]
        %v402 = vld [vmem:[%s370 + $0xb8] sm:$0xff]
        %v403 = vld [vmem:[%s370 + $0xc0] sm:$0xff]
        %v404 = vld [vmem:[%s370 + $0xc8] sm:$0xff]
        %v405 = vld [vmem:[%s370 + $0xd0] sm:$0xff]
        %v406 = vld [vmem:[%s370 + $0xd8] sm:$0xff]
        %v407 = vld [vmem:[%s370 + $0xe0] sm:$0xff]
        %v408 = vld [vmem:[%s370 + $0xe8] sm:$0xff]
        %v409 = vld [vmem:[%s370 + $0xf0] sm:$0xff]
        %v410 = vld [vmem:[%s370 + $0xf8] sm:$0xff]
        %v411 = vld [vmem:[%s370 + $0x100] sm:$0xff]
        %v412 = vld [vmem:[%s370 + $0x108] sm:$0xff]
        %v413 = vld [vmem:[%s370 + $0x110] sm:$0xff]
        %v414 = vld [vmem:[%s370 + $0x118] sm:$0xff]
        %v415 = vld [vmem:[%s370 + $0x120] sm:$0xff]
        %v416 = vld [vmem:[%s370 + $0x128] sm:$0xff]
        %v417 = vld [vmem:[%s370 + $0x130] sm:$0xff]
        %v418 = vld [vmem:[%s370 + $0x138] sm:$0xff]
        %v419 = vld [vmem:[%s370 + $0x140] sm:$0xff]
        %v420 = vld [vmem:[%s370 + $0x148] sm:$0xff]
        %v421 = vld [vmem:[%s370 + $0x150] sm:$0xff]
        %v422 = vld [vmem:[%s370 + $0x158] sm:$0xff]
        %v423 = vld [vmem:[%s370 + $0x160] sm:$0xff]
        %v424 = vld [vmem:[%s370 + $0x168] sm:$0xff]
        %v425 = vld [vmem:[%s370 + $0x170] sm:$0xff]
        %v426 = vld [vmem:[%s370 + $0x178] sm:$0xff]
        %v427 = vld [vmem:[%s370 + $0x180] sm:$0xff]
        %v428 = vld [vmem:[%s370 + $0x188] sm:$0xff]
        %v429 = vld [vmem:[%s370 + $0x190] sm:$0xff]
        %v430 = vld [vmem:[%s370 + $0x198] sm:$0xff]
        %v431 = vld [vmem:[%s370 + $0x1a0] sm:$0xff]
        %v432 = vld [vmem:[%s370 + $0x1a8] sm:$0xff]
        %v433 = vld [vmem:[%s370 + $0x1b0] sm:$0xff]
        %v434 = vld [vmem:[%s370 + $0x1b8] sm:$0xff]
        %v435 = vld [vmem:[%s370 + $0x1c0] sm:$0xff]
        %v436 = vld [vmem:[%s370 + $0x1c8] sm:$0xff]
        %v437 = vld [vmem:[%s370 + $0x1d0] sm:$0xff]
        %v438 = vld [vmem:[%s370 + $0x1d8] sm:$0xff]
        %v439 = vld [vmem:[%s370 + $0x1e0] sm:$0xff]
        %v440 = vld [vmem:[%s370 + $0x1e8] sm:$0xff]
        %v441 = vld [vmem:[%s370 + $0x1f0] sm:$0xff]
        %v442 = vld [vmem:[%s370 + $0x1f8] sm:$0xff]
        %v443 = vld [vmem:[%s370 + $0x200] sm:$0xff]
        %v444 = vld [vmem:[%s370 + $0x208] sm:$0xff]
        %v445 = vld [vmem:[%s370 + $0x210] sm:$0xff]
        %v446 = vld [vmem:[%s370 + $0x218] sm:$0xff]
        %v447 = vld [vmem:[%s370 + $0x220] sm:$0xff]
        %v448 = vld [vmem:[%s370 + $0x228] sm:$0xff]
        %v449 = vld [vmem:[%s370 + $0x230] sm:$0xff]
        %v450 = vld [vmem:[%s370 + $0x238] sm:$0xff]
        %v451 = vld [vmem:[%s370 + $0x240] sm:$0xff]
        %v452 = vld [vmem:[%s370 + $0x248] sm:$0xff]
        %v453 = vld [vmem:[%s370 + $0x250] sm:$0xff]
        %v454 = vld [vmem:[%s370 + $0x258] sm:$0xff]
        %v455 = vld [vmem:[%s370 + $0x260] sm:$0xff]
        %v456 = vld [vmem:[%s370 + $0x268] sm:$0xff]
        %v457 = vld [vmem:[%s370 + $0x270] sm:$0xff]
        %v458 = vld [vmem:[%s370 + $0x278] sm:$0xff]
        %v459 = vld [vmem:[%s370 + $0x280] sm:$0xff]
        %v460 = vld [vmem:[%s370 + $0x288] sm:$0xff]
        %v461 = vld [vmem:[%s370 + $0x290] sm:$0xff]
        %v462 = vld [vmem:[%s370 + $0x298] sm:$0xff]
        %v463 = vld [vmem:[%s370 + $0x2a0] sm:$0xff]
        %v464 = vld [vmem:[%s370 + $0x2a8] sm:$0xff]
        %v465 = vld [vmem:[%s370 + $0x2b0] sm:$0xff]
        %v466 = vld [vmem:[%s370 + $0x2b8] sm:$0xff]
        %v467 = vld [vmem:[%s370 + $0x2c0] sm:$0xff]
        %v468 = vld [vmem:[%s370 + $0x2c8] sm:$0xff]
        %v469 = vld [vmem:[%s370 + $0x2d0] sm:$0xff]
        %v470 = vld [vmem:[%s370 + $0x2d8] sm:$0xff]
        %v471 = vld [vmem:[%s370 + $0x2e0] sm:$0xff]
        %v472 = vld [vmem:[%s370 + $0x2e8] sm:$0xff]
        %v473 = vld [vmem:[%s370 + $0x2f0] sm:$0xff]
        %v474 = vld [vmem:[%s370 + $0x2f8] sm:$0xff]
        %v475 = vld [vmem:[%s370 + $0x300] sm:$0xff]
        %v476 = vld [vmem:[%s370 + $0x308] sm:$0xff]
        %v477 = vld [vmem:[%s370 + $0x310] sm:$0xff]
        %v478 = vld [vmem:[%s370 + $0x318] sm:$0xff]
        %v479 = vld [vmem:[%s370 + $0x320] sm:$0xff]
        %v480 = vld [vmem:[%s370 + $0x328] sm:$0xff]
        %v481 = vld [vmem:[%s370 + $0x330] sm:$0xff]
        %v482 = vld [vmem:[%s370 + $0x338] sm:$0xff]
        %v483 = vld [vmem:[%s370 + $0x340] sm:$0xff]
        %v484 = vld [vmem:[%s370 + $0x348] sm:$0xff]
        %v485 = vld [vmem:[%s370 + $0x350] sm:$0xff]
        %v486 = vld [vmem:[%s370 + $0x358] sm:$0xff]
        %v487 = vld [vmem:[%s370 + $0x360] sm:$0xff]
        %v488 = vld [vmem:[%s370 + $0x368] sm:$0xff]
        %v489 = vld [vmem:[%s370 + $0x370] sm:$0xff]
        %v490 = vld [vmem:[%s370 + $0x378] sm:$0xff]
        %v491 = vld [vmem:[%s370 + $0x380] sm:$0xff]
        %v492 = vld [vmem:[%s370 + $0x388] sm:$0xff]
        %v493 = vld [vmem:[%s370 + $0x390] sm:$0xff]
        %v494 = vld [vmem:[%s370 + $0x398] sm:$0xff]
        %v495 = vld [vmem:[%s370 + $0x3a0] sm:$0xff]
        %v496 = vld [vmem:[%s370 + $0x3a8] sm:$0xff]
        %v497 = vld [vmem:[%s370 + $0x3b0] sm:$0xff]
        %v498 = vld [vmem:[%s370 + $0x3b8] sm:$0xff]
        %v499 = vld [vmem:[%s370 + $0x3c0] sm:$0xff]
        %v500 = vld [vmem:[%s370 + $0x3c8] sm:$0xff]
        %v501 = vld [vmem:[%s370 + $0x3d0] sm:$0xff]
        %v502 = vld [vmem:[%s370 + $0x3d8] sm:$0xff]
        %v503 = vld [vmem:[%s370 + $0x3e0] sm:$0xff]
        %v504 = vld [vmem:[%s370 + $0x3e8] sm:$0xff]
        %v505 = vld [vmem:[%s370 + $0x3f0] sm:$0xff]
        %v506 = vld [vmem:[%s370 + $0x3f8] sm:$0xff]
        %v507 = vlaneseq
        %v508 = vand.u32 %v507, 127
        %509 = vset.pattern.permute.xlu0 0
        %510 = vperm.xlu0 %509, %v379
        %v511 = vpop.permute.xlu0 %510
        %512 = vset.pattern.permute.xlu0 0
        %513 = vperm.xlu0 %512, %v380
        %v514 = vpop.permute.xlu0 %513
        %515 = vset.pattern.permute.xlu0 0
        %516 = vperm.xlu0 %515, %v381
        %v517 = vpop.permute.xlu0 %516
        %518 = vset.pattern.permute.xlu0 0
        %519 = vperm.xlu0 %518, %v382
        %v520 = vpop.permute.xlu0 %519
        %521 = vset.pattern.permute.xlu0 0
        %522 = vperm.xlu0 %521, %v383
        %v523 = vpop.permute.xlu0 %522
        %524 = vset.pattern.permute.xlu0 0
        %525 = vperm.xlu0 %524, %v384
        %v526 = vpop.permute.xlu0 %525
        %527 = vset.pattern.permute.xlu0 0
        %528 = vperm.xlu0 %527, %v385
        %v529 = vpop.permute.xlu0 %528
        %530 = vset.pattern.permute.xlu0 0
        %531 = vperm.xlu0 %530, %v386
        %v532 = vpop.permute.xlu0 %531
        %533 = vset.pattern.permute.xlu0 0
        %534 = vperm.xlu0 %533, %v387
        %v535 = vpop.permute.xlu0 %534
        %536 = vset.pattern.permute.xlu0 0
        %537 = vperm.xlu0 %536, %v388
        %v538 = vpop.permute.xlu0 %537
        %539 = vset.pattern.permute.xlu0 0
        %540 = vperm.xlu0 %539, %v389
        %v541 = vpop.permute.xlu0 %540
        %542 = vset.pattern.permute.xlu0 0
        %543 = vperm.xlu0 %542, %v390
        %v544 = vpop.permute.xlu0 %543
        %545 = vset.pattern.permute.xlu0 0
        %546 = vperm.xlu0 %545, %v391
        %v547 = vpop.permute.xlu0 %546
        %548 = vset.pattern.permute.xlu0 0
        %549 = vperm.xlu0 %548, %v392
        %v550 = vpop.permute.xlu0 %549
        %551 = vset.pattern.permute.xlu0 0
        %552 = vperm.xlu0 %551, %v393
        %v553 = vpop.permute.xlu0 %552
        %554 = vset.pattern.permute.xlu0 0
        %555 = vperm.xlu0 %554, %v394
        %v556 = vpop.permute.xlu0 %555
        %557 = vset.pattern.permute.xlu0 0
        %558 = vperm.xlu0 %557, %v395
        %v559 = vpop.permute.xlu0 %558
        %560 = vset.pattern.permute.xlu0 0
        %561 = vperm.xlu0 %560, %v396
        %v562 = vpop.permute.xlu0 %561
        %563 = vset.pattern.permute.xlu0 0
        %564 = vperm.xlu0 %563, %v397
        %v565 = vpop.permute.xlu0 %564
        %566 = vset.pattern.permute.xlu0 0
        %567 = vperm.xlu0 %566, %v398
        %v568 = vpop.permute.xlu0 %567
        %569 = vset.pattern.permute.xlu0 0
        %570 = vperm.xlu0 %569, %v399
        %v571 = vpop.permute.xlu0 %570
        %572 = vset.pattern.permute.xlu0 0
        %573 = vperm.xlu0 %572, %v400
        %v574 = vpop.permute.xlu0 %573
        %575 = vset.pattern.permute.xlu0 0
        %576 = vperm.xlu0 %575, %v401
        %v577 = vpop.permute.xlu0 %576
        %578 = vset.pattern.permute.xlu0 0
        %579 = vperm.xlu0 %578, %v402
        %v580 = vpop.permute.xlu0 %579
        %581 = vset.pattern.permute.xlu0 0
        %582 = vperm.xlu0 %581, %v403
        %v583 = vpop.permute.xlu0 %582
        %584 = vset.pattern.permute.xlu0 0
        %585 = vperm.xlu0 %584, %v404
        %v586 = vpop.permute.xlu0 %585
        %587 = vset.pattern.permute.xlu0 0
        %588 = vperm.xlu0 %587, %v405
        %v589 = vpop.permute.xlu0 %588
        %590 = vset.pattern.permute.xlu0 0
        %591 = vperm.xlu0 %590, %v406
        %v592 = vpop.permute.xlu0 %591
        %593 = vset.pattern.permute.xlu0 0
        %594 = vperm.xlu0 %593, %v407
        %v595 = vpop.permute.xlu0 %594
        %596 = vset.pattern.permute.xlu0 0
        %597 = vperm.xlu0 %596, %v408
        %v598 = vpop.permute.xlu0 %597
        %599 = vset.pattern.permute.xlu0 0
        %600 = vperm.xlu0 %599, %v409
        %v601 = vpop.permute.xlu0 %600
        %602 = vset.pattern.permute.xlu0 0
        %603 = vperm.xlu0 %602, %v410
        %v604 = vpop.permute.xlu0 %603
        %605 = vset.pattern.permute.xlu0 0
        %606 = vperm.xlu0 %605, %v411
        %v607 = vpop.permute.xlu0 %606
        %608 = vset.pattern.permute.xlu0 0
        %609 = vperm.xlu0 %608, %v412
        %v610 = vpop.permute.xlu0 %609
        %611 = vset.pattern.permute.xlu0 0
        %612 = vperm.xlu0 %611, %v413
        %v613 = vpop.permute.xlu0 %612
        %614 = vset.pattern.permute.xlu0 0
        %615 = vperm.xlu0 %614, %v414
        %v616 = vpop.permute.xlu0 %615
        %617 = vset.pattern.permute.xlu0 0
        %618 = vperm.xlu0 %617, %v415
        %v619 = vpop.permute.xlu0 %618
        %620 = vset.pattern.permute.xlu0 0
        %621 = vperm.xlu0 %620, %v416
        %v622 = vpop.permute.xlu0 %621
        %623 = vset.pattern.permute.xlu0 0
        %624 = vperm.xlu0 %623, %v417
        %v625 = vpop.permute.xlu0 %624
        %626 = vset.pattern.permute.xlu0 0
        %627 = vperm.xlu0 %626, %v418
        %v628 = vpop.permute.xlu0 %627
        %629 = vset.pattern.permute.xlu0 0
        %630 = vperm.xlu0 %629, %v419
        %v631 = vpop.permute.xlu0 %630
        %632 = vset.pattern.permute.xlu0 0
        %633 = vperm.xlu0 %632, %v420
        %v634 = vpop.permute.xlu0 %633
        %635 = vset.pattern.permute.xlu0 0
        %636 = vperm.xlu0 %635, %v421
        %v637 = vpop.permute.xlu0 %636
        %638 = vset.pattern.permute.xlu0 0
        %639 = vperm.xlu0 %638, %v422
        %v640 = vpop.permute.xlu0 %639
        %641 = vset.pattern.permute.xlu0 0
        %642 = vperm.xlu0 %641, %v423
        %v643 = vpop.permute.xlu0 %642
        %644 = vset.pattern.permute.xlu0 0
        %645 = vperm.xlu0 %644, %v424
        %v646 = vpop.permute.xlu0 %645
        %647 = vset.pattern.permute.xlu0 0
        %648 = vperm.xlu0 %647, %v425
        %v649 = vpop.permute.xlu0 %648
        %650 = vset.pattern.permute.xlu0 0
        %651 = vperm.xlu0 %650, %v426
        %v652 = vpop.permute.xlu0 %651
        %653 = vset.pattern.permute.xlu0 0
        %654 = vperm.xlu0 %653, %v427
        %v655 = vpop.permute.xlu0 %654
        %656 = vset.pattern.permute.xlu0 0
        %657 = vperm.xlu0 %656, %v428
        %v658 = vpop.permute.xlu0 %657
        %659 = vset.pattern.permute.xlu0 0
        %660 = vperm.xlu0 %659, %v429
        %v661 = vpop.permute.xlu0 %660
        %662 = vset.pattern.permute.xlu0 0
        %663 = vperm.xlu0 %662, %v430
        %v664 = vpop.permute.xlu0 %663
        %665 = vset.pattern.permute.xlu0 0
        %666 = vperm.xlu0 %665, %v431
        %v667 = vpop.permute.xlu0 %666
        %668 = vset.pattern.permute.xlu0 0
        %669 = vperm.xlu0 %668, %v432
        %v670 = vpop.permute.xlu0 %669
        %671 = vset.pattern.permute.xlu0 0
        %672 = vperm.xlu0 %671, %v433
        %v673 = vpop.permute.xlu0 %672
        %674 = vset.pattern.permute.xlu0 0
        %675 = vperm.xlu0 %674, %v434
        %v676 = vpop.permute.xlu0 %675
        %677 = vset.pattern.permute.xlu0 0
        %678 = vperm.xlu0 %677, %v435
        %v679 = vpop.permute.xlu0 %678
        %680 = vset.pattern.permute.xlu0 0
        %681 = vperm.xlu0 %680, %v436
        %v682 = vpop.permute.xlu0 %681
        %683 = vset.pattern.permute.xlu0 0
        %684 = vperm.xlu0 %683, %v437
        %v685 = vpop.permute.xlu0 %684
        %686 = vset.pattern.permute.xlu0 0
        %687 = vperm.xlu0 %686, %v438
        %v688 = vpop.permute.xlu0 %687
        %689 = vset.pattern.permute.xlu0 0
        %690 = vperm.xlu0 %689, %v439
        %v691 = vpop.permute.xlu0 %690
        %692 = vset.pattern.permute.xlu0 0
        %693 = vperm.xlu0 %692, %v440
        %v694 = vpop.permute.xlu0 %693
        %695 = vset.pattern.permute.xlu0 0
        %696 = vperm.xlu0 %695, %v441
        %v697 = vpop.permute.xlu0 %696
        %698 = vset.pattern.permute.xlu0 0
        %699 = vperm.xlu0 %698, %v442
        %v700 = vpop.permute.xlu0 %699
        %701 = vset.pattern.permute.xlu0 0
        %702 = vperm.xlu0 %701, %v443
        %v703 = vpop.permute.xlu0 %702
        %704 = vset.pattern.permute.xlu0 0
        %705 = vperm.xlu0 %704, %v444
        %v706 = vpop.permute.xlu0 %705
        %707 = vset.pattern.permute.xlu0 0
        %708 = vperm.xlu0 %707, %v445
        %v709 = vpop.permute.xlu0 %708
        %710 = vset.pattern.permute.xlu0 0
        %711 = vperm.xlu0 %710, %v446
        %v712 = vpop.permute.xlu0 %711
        %713 = vset.pattern.permute.xlu0 0
        %714 = vperm.xlu0 %713, %v447
        %v715 = vpop.permute.xlu0 %714
        %716 = vset.pattern.permute.xlu0 0
        %717 = vperm.xlu0 %716, %v448
        %v718 = vpop.permute.xlu0 %717
        %719 = vset.pattern.permute.xlu0 0
        %720 = vperm.xlu0 %719, %v449
        %v721 = vpop.permute.xlu0 %720
        %722 = vset.pattern.permute.xlu0 0
        %723 = vperm.xlu0 %722, %v450
        %v724 = vpop.permute.xlu0 %723
        %725 = vset.pattern.permute.xlu0 0
        %726 = vperm.xlu0 %725, %v451
        %v727 = vpop.permute.xlu0 %726
        %728 = vset.pattern.permute.xlu0 0
        %729 = vperm.xlu0 %728, %v452
        %v730 = vpop.permute.xlu0 %729
        %731 = vset.pattern.permute.xlu0 0
        %732 = vperm.xlu0 %731, %v453
        %v733 = vpop.permute.xlu0 %732
        %734 = vset.pattern.permute.xlu0 0
        %735 = vperm.xlu0 %734, %v454
        %v736 = vpop.permute.xlu0 %735
        %737 = vset.pattern.permute.xlu0 0
        %738 = vperm.xlu0 %737, %v455
        %v739 = vpop.permute.xlu0 %738
        %740 = vset.pattern.permute.xlu0 0
        %741 = vperm.xlu0 %740, %v456
        %v742 = vpop.permute.xlu0 %741
        %743 = vset.pattern.permute.xlu0 0
        %744 = vperm.xlu0 %743, %v457
        %v745 = vpop.permute.xlu0 %744
        %746 = vset.pattern.permute.xlu0 0
        %747 = vperm.xlu0 %746, %v458
        %v748 = vpop.permute.xlu0 %747
        %749 = vset.pattern.permute.xlu0 0
        %750 = vperm.xlu0 %749, %v459
        %v751 = vpop.permute.xlu0 %750
        %752 = vset.pattern.permute.xlu0 0
        %753 = vperm.xlu0 %752, %v460
        %v754 = vpop.permute.xlu0 %753
        %755 = vset.pattern.permute.xlu0 0
        %756 = vperm.xlu0 %755, %v461
        %v757 = vpop.permute.xlu0 %756
        %758 = vset.pattern.permute.xlu0 0
        %759 = vperm.xlu0 %758, %v462
        %v760 = vpop.permute.xlu0 %759
        %761 = vset.pattern.permute.xlu0 0
        %762 = vperm.xlu0 %761, %v463
        %v763 = vpop.permute.xlu0 %762
        %764 = vset.pattern.permute.xlu0 0
        %765 = vperm.xlu0 %764, %v464
        %v766 = vpop.permute.xlu0 %765
        %767 = vset.pattern.permute.xlu0 0
        %768 = vperm.xlu0 %767, %v465
        %v769 = vpop.permute.xlu0 %768
        %770 = vset.pattern.permute.xlu0 0
        %771 = vperm.xlu0 %770, %v466
        %v772 = vpop.permute.xlu0 %771
        %773 = vset.pattern.permute.xlu0 0
        %774 = vperm.xlu0 %773, %v467
        %v775 = vpop.permute.xlu0 %774
        %776 = vset.pattern.permute.xlu0 0
        %777 = vperm.xlu0 %776, %v468
        %v778 = vpop.permute.xlu0 %777
        %779 = vset.pattern.permute.xlu0 0
        %780 = vperm.xlu0 %779, %v469
        %v781 = vpop.permute.xlu0 %780
        %782 = vset.pattern.permute.xlu0 0
        %783 = vperm.xlu0 %782, %v470
        %v784 = vpop.permute.xlu0 %783
        %785 = vset.pattern.permute.xlu0 0
        %786 = vperm.xlu0 %785, %v471
        %v787 = vpop.permute.xlu0 %786
        %788 = vset.pattern.permute.xlu0 0
        %789 = vperm.xlu0 %788, %v472
        %v790 = vpop.permute.xlu0 %789
        %791 = vset.pattern.permute.xlu0 0
        %792 = vperm.xlu0 %791, %v473
        %v793 = vpop.permute.xlu0 %792
        %794 = vset.pattern.permute.xlu0 0
        %795 = vperm.xlu0 %794, %v474
        %v796 = vpop.permute.xlu0 %795
        %797 = vset.pattern.permute.xlu0 0
        %798 = vperm.xlu0 %797, %v475
        %v799 = vpop.permute.xlu0 %798
        %800 = vset.pattern.permute.xlu0 0
        %801 = vperm.xlu0 %800, %v476
        %v802 = vpop.permute.xlu0 %801
        %803 = vset.pattern.permute.xlu0 0
        %804 = vperm.xlu0 %803, %v477
        %v805 = vpop.permute.xlu0 %804
        %806 = vset.pattern.permute.xlu0 0
        %807 = vperm.xlu0 %806, %v478
        %v808 = vpop.permute.xlu0 %807
        %809 = vset.pattern.permute.xlu0 0
        %810 = vperm.xlu0 %809, %v479
        %v811 = vpop.permute.xlu0 %810
        %812 = vset.pattern.permute.xlu0 0
        %813 = vperm.xlu0 %812, %v480
        %v814 = vpop.permute.xlu0 %813
        %815 = vset.pattern.permute.xlu0 0
        %816 = vperm.xlu0 %815, %v481
        %v817 = vpop.permute.xlu0 %816
        %818 = vset.pattern.permute.xlu0 0
        %819 = vperm.xlu0 %818, %v482
        %v820 = vpop.permute.xlu0 %819
        %821 = vset.pattern.permute.xlu0 0
        %822 = vperm.xlu0 %821, %v483
        %v823 = vpop.permute.xlu0 %822
        %824 = vset.pattern.permute.xlu0 0
        %825 = vperm.xlu0 %824, %v484
        %v826 = vpop.permute.xlu0 %825
        %827 = vset.pattern.permute.xlu0 0
        %828 = vperm.xlu0 %827, %v485
        %v829 = vpop.permute.xlu0 %828
        %830 = vset.pattern.permute.xlu0 0
        %831 = vperm.xlu0 %830, %v486
        %v832 = vpop.permute.xlu0 %831
        %833 = vset.pattern.permute.xlu0 0
        %834 = vperm.xlu0 %833, %v487
        %v835 = vpop.permute.xlu0 %834
        %836 = vset.pattern.permute.xlu0 0
        %837 = vperm.xlu0 %836, %v488
        %v838 = vpop.permute.xlu0 %837
        %839 = vset.pattern.permute.xlu0 0
        %840 = vperm.xlu0 %839, %v489
        %v841 = vpop.permute.xlu0 %840
        %842 = vset.pattern.permute.xlu0 0
        %843 = vperm.xlu0 %842, %v490
        %v844 = vpop.permute.xlu0 %843
        %845 = vset.pattern.permute.xlu0 0
        %846 = vperm.xlu0 %845, %v491
        %v847 = vpop.permute.xlu0 %846
        %848 = vset.pattern.permute.xlu0 0
        %849 = vperm.xlu0 %848, %v492
        %v850 = vpop.permute.xlu0 %849
        %851 = vset.pattern.permute.xlu0 0
        %852 = vperm.xlu0 %851, %v493
        %v853 = vpop.permute.xlu0 %852
        %854 = vset.pattern.permute.xlu0 0
        %855 = vperm.xlu0 %854, %v494
        %v856 = vpop.permute.xlu0 %855
        %857 = vset.pattern.permute.xlu0 0
        %858 = vperm.xlu0 %857, %v495
        %v859 = vpop.permute.xlu0 %858
        %860 = vset.pattern.permute.xlu0 0
        %861 = vperm.xlu0 %860, %v496
        %v862 = vpop.permute.xlu0 %861
        %863 = vset.pattern.permute.xlu0 0
        %864 = vperm.xlu0 %863, %v497
        %v865 = vpop.permute.xlu0 %864
        %866 = vset.pattern.permute.xlu0 0
        %867 = vperm.xlu0 %866, %v498
        %v868 = vpop.permute.xlu0 %867
        %869 = vset.pattern.permute.xlu0 0
        %870 = vperm.xlu0 %869, %v499
        %v871 = vpop.permute.xlu0 %870
        %872 = vset.pattern.permute.xlu0 0
        %873 = vperm.xlu0 %872, %v500
        %v874 = vpop.permute.xlu0 %873
        %875 = vset.pattern.permute.xlu0 0
        %876 = vperm.xlu0 %875, %v501
        %v877 = vpop.permute.xlu0 %876
        %878 = vset.pattern.permute.xlu0 0
        %879 = vperm.xlu0 %878, %v502
        %v880 = vpop.permute.xlu0 %879
        %881 = vset.pattern.permute.xlu0 0
        %882 = vperm.xlu0 %881, %v503
        %v883 = vpop.permute.xlu0 %882
        %884 = vset.pattern.permute.xlu0 0
        %885 = vperm.xlu0 %884, %v504
        %v886 = vpop.permute.xlu0 %885
        %887 = vset.pattern.permute.xlu0 0
        %888 = vperm.xlu0 %887, %v505
        %v889 = vpop.permute.xlu0 %888
        %890 = vset.pattern.permute.xlu0 0
        %891 = vperm.xlu0 %890, %v506
        %v892 = vpop.permute.xlu0 %891
        %vm893 = vcmp.eq.s32.totalorder %v508, %v511
        %vm894 = vcmp.eq.s32.totalorder %v508, %v514
        %vm895 = vcmp.eq.s32.totalorder %v508, %v517
        %vm896 = vcmp.eq.s32.totalorder %v508, %v520
        %vm897 = vcmp.eq.s32.totalorder %v508, %v523
        %vm898 = vcmp.eq.s32.totalorder %v508, %v526
        %vm899 = vcmp.eq.s32.totalorder %v508, %v529
        %vm900 = vcmp.eq.s32.totalorder %v508, %v532
        %vm901 = vcmp.eq.s32.totalorder %v508, %v535
        %vm902 = vcmp.eq.s32.totalorder %v508, %v538
        %vm903 = vcmp.eq.s32.totalorder %v508, %v541
        %vm904 = vcmp.eq.s32.totalorder %v508, %v544
        %vm905 = vcmp.eq.s32.totalorder %v508, %v547
        %vm906 = vcmp.eq.s32.totalorder %v508, %v550
        %vm907 = vcmp.eq.s32.totalorder %v508, %v553
        %vm908 = vcmp.eq.s32.totalorder %v508, %v556
        %vm909 = vcmp.eq.s32.totalorder %v508, %v559
        %vm910 = vcmp.eq.s32.totalorder %v508, %v562
        %vm911 = vcmp.eq.s32.totalorder %v508, %v565
        %vm912 = vcmp.eq.s32.totalorder %v508, %v568
        %vm913 = vcmp.eq.s32.totalorder %v508, %v571
        %vm914 = vcmp.eq.s32.totalorder %v508, %v574
        %vm915 = vcmp.eq.s32.totalorder %v508, %v577
        %vm916 = vcmp.eq.s32.totalorder %v508, %v580
        %vm917 = vcmp.eq.s32.totalorder %v508, %v583
        %vm918 = vcmp.eq.s32.totalorder %v508, %v586
        %vm919 = vcmp.eq.s32.totalorder %v508, %v589
        %vm920 = vcmp.eq.s32.totalorder %v508, %v592
        %vm921 = vcmp.eq.s32.totalorder %v508, %v595
        %vm922 = vcmp.eq.s32.totalorder %v508, %v598
        %vm923 = vcmp.eq.s32.totalorder %v508, %v601
        %vm924 = vcmp.eq.s32.totalorder %v508, %v604
        %vm925 = vcmp.eq.s32.totalorder %v508, %v607
        %vm926 = vcmp.eq.s32.totalorder %v508, %v610
        %vm927 = vcmp.eq.s32.totalorder %v508, %v613
        %vm928 = vcmp.eq.s32.totalorder %v508, %v616
        %vm929 = vcmp.eq.s32.totalorder %v508, %v619
        %vm930 = vcmp.eq.s32.totalorder %v508, %v622
        %vm931 = vcmp.eq.s32.totalorder %v508, %v625
        %vm932 = vcmp.eq.s32.totalorder %v508, %v628
        %vm933 = vcmp.eq.s32.totalorder %v508, %v631
        %vm934 = vcmp.eq.s32.totalorder %v508, %v634
        %vm935 = vcmp.eq.s32.totalorder %v508, %v637
        %vm936 = vcmp.eq.s32.totalorder %v508, %v640
        %vm937 = vcmp.eq.s32.totalorder %v508, %v643
        %vm938 = vcmp.eq.s32.totalorder %v508, %v646
        %vm939 = vcmp.eq.s32.totalorder %v508, %v649
        %vm940 = vcmp.eq.s32.totalorder %v508, %v652
        %vm941 = vcmp.eq.s32.totalorder %v508, %v655
        %vm942 = vcmp.eq.s32.totalorder %v508, %v658
        %vm943 = vcmp.eq.s32.totalorder %v508, %v661
        %vm944 = vcmp.eq.s32.totalorder %v508, %v664
        %vm945 = vcmp.eq.s32.totalorder %v508, %v667
        %vm946 = vcmp.eq.s32.totalorder %v508, %v670
        %vm947 = vcmp.eq.s32.totalorder %v508, %v673
        %vm948 = vcmp.eq.s32.totalorder %v508, %v676
        %vm949 = vcmp.eq.s32.totalorder %v508, %v679
        %vm950 = vcmp.eq.s32.totalorder %v508, %v682
        %vm951 = vcmp.eq.s32.totalorder %v508, %v685
        %vm952 = vcmp.eq.s32.totalorder %v508, %v688
        %vm953 = vcmp.eq.s32.totalorder %v508, %v691
        %vm954 = vcmp.eq.s32.totalorder %v508, %v694
        %vm955 = vcmp.eq.s32.totalorder %v508, %v697
        %vm956 = vcmp.eq.s32.totalorder %v508, %v700
        %vm957 = vcmp.eq.s32.totalorder %v508, %v703
        %vm958 = vcmp.eq.s32.totalorder %v508, %v706
        %vm959 = vcmp.eq.s32.totalorder %v508, %v709
        %vm960 = vcmp.eq.s32.totalorder %v508, %v712
        %vm961 = vcmp.eq.s32.totalorder %v508, %v715
        %vm962 = vcmp.eq.s32.totalorder %v508, %v718
        %vm963 = vcmp.eq.s32.totalorder %v508, %v721
        %vm964 = vcmp.eq.s32.totalorder %v508, %v724
        %vm965 = vcmp.eq.s32.totalorder %v508, %v727
        %vm966 = vcmp.eq.s32.totalorder %v508, %v730
        %vm967 = vcmp.eq.s32.totalorder %v508, %v733
        %vm968 = vcmp.eq.s32.totalorder %v508, %v736
        %vm969 = vcmp.eq.s32.totalorder %v508, %v739
        %vm970 = vcmp.eq.s32.totalorder %v508, %v742
        %vm971 = vcmp.eq.s32.totalorder %v508, %v745
        %vm972 = vcmp.eq.s32.totalorder %v508, %v748
        %vm973 = vcmp.eq.s32.totalorder %v508, %v751
        %vm974 = vcmp.eq.s32.totalorder %v508, %v754
        %vm975 = vcmp.eq.s32.totalorder %v508, %v757
        %vm976 = vcmp.eq.s32.totalorder %v508, %v760
        %vm977 = vcmp.eq.s32.totalorder %v508, %v763
        %vm978 = vcmp.eq.s32.totalorder %v508, %v766
        %vm979 = vcmp.eq.s32.totalorder %v508, %v769
        %vm980 = vcmp.eq.s32.totalorder %v508, %v772
        %vm981 = vcmp.eq.s32.totalorder %v508, %v775
        %vm982 = vcmp.eq.s32.totalorder %v508, %v778
        %vm983 = vcmp.eq.s32.totalorder %v508, %v781
        %vm984 = vcmp.eq.s32.totalorder %v508, %v784
        %vm985 = vcmp.eq.s32.totalorder %v508, %v787
        %vm986 = vcmp.eq.s32.totalorder %v508, %v790
        %vm987 = vcmp.eq.s32.totalorder %v508, %v793
        %vm988 = vcmp.eq.s32.totalorder %v508, %v796
        %vm989 = vcmp.eq.s32.totalorder %v508, %v799
        %vm990 = vcmp.eq.s32.totalorder %v508, %v802
        %vm991 = vcmp.eq.s32.totalorder %v508, %v805
        %vm992 = vcmp.eq.s32.totalorder %v508, %v808
        %vm993 = vcmp.eq.s32.totalorder %v508, %v811
        %vm994 = vcmp.eq.s32.totalorder %v508, %v814
        %vm995 = vcmp.eq.s32.totalorder %v508, %v817
        %vm996 = vcmp.eq.s32.totalorder %v508, %v820
        %vm997 = vcmp.eq.s32.totalorder %v508, %v823
        %vm998 = vcmp.eq.s32.totalorder %v508, %v826
        %vm999 = vcmp.eq.s32.totalorder %v508, %v829
        %vm1000 = vcmp.eq.s32.totalorder %v508, %v832
        %vm1001 = vcmp.eq.s32.totalorder %v508, %v835
        %vm1002 = vcmp.eq.s32.totalorder %v508, %v838
        %vm1003 = vcmp.eq.s32.totalorder %v508, %v841
        %vm1004 = vcmp.eq.s32.totalorder %v508, %v844
        %vm1005 = vcmp.eq.s32.totalorder %v508, %v847
        %vm1006 = vcmp.eq.s32.totalorder %v508, %v850
        %vm1007 = vcmp.eq.s32.totalorder %v508, %v853
        %vm1008 = vcmp.eq.s32.totalorder %v508, %v856
        %vm1009 = vcmp.eq.s32.totalorder %v508, %v859
        %vm1010 = vcmp.eq.s32.totalorder %v508, %v862
        %vm1011 = vcmp.eq.s32.totalorder %v508, %v865
        %vm1012 = vcmp.eq.s32.totalorder %v508, %v868
        %vm1013 = vcmp.eq.s32.totalorder %v508, %v871
        %vm1014 = vcmp.eq.s32.totalorder %v508, %v874
        %vm1015 = vcmp.eq.s32.totalorder %v508, %v877
        %vm1016 = vcmp.eq.s32.totalorder %v508, %v880
        %vm1017 = vcmp.eq.s32.totalorder %v508, %v883
        %vm1018 = vcmp.eq.s32.totalorder %v508, %v886
        %vm1019 = vcmp.eq.s32.totalorder %v508, %v889
        %vm1020 = vcmp.eq.s32.totalorder %v508, %v892
        %v1021 = vsel %vm893, 1, 0
        %v1022 = vsel %vm894, 1, 0
        %v1023 = vsel %vm895, 1, 0
        %v1024 = vsel %vm896, 1, 0
        %v1025 = vsel %vm897, 1, 0
        %v1026 = vsel %vm898, 1, 0
        %v1027 = vsel %vm899, 1, 0
        %v1028 = vsel %vm900, 1, 0
        %v1029 = vsel %vm901, 1, 0
        %v1030 = vsel %vm902, 1, 0
        %v1031 = vsel %vm903, 1, 0
        %v1032 = vsel %vm904, 1, 0
        %v1033 = vsel %vm905, 1, 0
        %v1034 = vsel %vm906, 1, 0
        %v1035 = vsel %vm907, 1, 0
        %v1036 = vsel %vm908, 1, 0
        %v1037 = vsel %vm909, 1, 0
        %v1038 = vsel %vm910, 1, 0
        %v1039 = vsel %vm911, 1, 0
        %v1040 = vsel %vm912, 1, 0
        %v1041 = vsel %vm913, 1, 0
        %v1042 = vsel %vm914, 1, 0
        %v1043 = vsel %vm915, 1, 0
        %v1044 = vsel %vm916, 1, 0
        %v1045 = vsel %vm917, 1, 0
        %v1046 = vsel %vm918, 1, 0
        %v1047 = vsel %vm919, 1, 0
        %v1048 = vsel %vm920, 1, 0
        %v1049 = vsel %vm921, 1, 0
        %v1050 = vsel %vm922, 1, 0
        %v1051 = vsel %vm923, 1, 0
        %v1052 = vsel %vm924, 1, 0
        %v1053 = vsel %vm925, 1, 0
        %v1054 = vsel %vm926, 1, 0
        %v1055 = vsel %vm927, 1, 0
        %v1056 = vsel %vm928, 1, 0
        %v1057 = vsel %vm929, 1, 0
        %v1058 = vsel %vm930, 1, 0
        %v1059 = vsel %vm931, 1, 0
        %v1060 = vsel %vm932, 1, 0
        %v1061 = vsel %vm933, 1, 0
        %v1062 = vsel %vm934, 1, 0
        %v1063 = vsel %vm935, 1, 0
        %v1064 = vsel %vm936, 1, 0
        %v1065 = vsel %vm937, 1, 0
        %v1066 = vsel %vm938, 1, 0
        %v1067 = vsel %vm939, 1, 0
        %v1068 = vsel %vm940, 1, 0
        %v1069 = vsel %vm941, 1, 0
        %v1070 = vsel %vm942, 1, 0
        %v1071 = vsel %vm943, 1, 0
        %v1072 = vsel %vm944, 1, 0
        %v1073 = vsel %vm945, 1, 0
        %v1074 = vsel %vm946, 1, 0
        %v1075 = vsel %vm947, 1, 0
        %v1076 = vsel %vm948, 1, 0
        %v1077 = vsel %vm949, 1, 0
        %v1078 = vsel %vm950, 1, 0
        %v1079 = vsel %vm951, 1, 0
        %v1080 = vsel %vm952, 1, 0
        %v1081 = vsel %vm953, 1, 0
        %v1082 = vsel %vm954, 1, 0
        %v1083 = vsel %vm955, 1, 0
        %v1084 = vsel %vm956, 1, 0
        %v1085 = vsel %vm957, 1, 0
        %v1086 = vsel %vm958, 1, 0
        %v1087 = vsel %vm959, 1, 0
        %v1088 = vsel %vm960, 1, 0
        %v1089 = vsel %vm961, 1, 0
        %v1090 = vsel %vm962, 1, 0
        %v1091 = vsel %vm963, 1, 0
        %v1092 = vsel %vm964, 1, 0
        %v1093 = vsel %vm965, 1, 0
        %v1094 = vsel %vm966, 1, 0
        %v1095 = vsel %vm967, 1, 0
        %v1096 = vsel %vm968, 1, 0
        %v1097 = vsel %vm969, 1, 0
        %v1098 = vsel %vm970, 1, 0
        %v1099 = vsel %vm971, 1, 0
        %v1100 = vsel %vm972, 1, 0
        %v1101 = vsel %vm973, 1, 0
        %v1102 = vsel %vm974, 1, 0
        %v1103 = vsel %vm975, 1, 0
        %v1104 = vsel %vm976, 1, 0
        %v1105 = vsel %vm977, 1, 0
        %v1106 = vsel %vm978, 1, 0
        %v1107 = vsel %vm979, 1, 0
        %v1108 = vsel %vm980, 1, 0
        %v1109 = vsel %vm981, 1, 0
        %v1110 = vsel %vm982, 1, 0
        %v1111 = vsel %vm983, 1, 0
        %v1112 = vsel %vm984, 1, 0
        %v1113 = vsel %vm985, 1, 0
        %v1114 = vsel %vm986, 1, 0
        %v1115 = vsel %vm987, 1, 0
        %v1116 = vsel %vm988, 1, 0
        %v1117 = vsel %vm989, 1, 0
        %v1118 = vsel %vm990, 1, 0
        %v1119 = vsel %vm991, 1, 0
        %v1120 = vsel %vm992, 1, 0
        %v1121 = vsel %vm993, 1, 0
        %v1122 = vsel %vm994, 1, 0
        %v1123 = vsel %vm995, 1, 0
        %v1124 = vsel %vm996, 1, 0
        %v1125 = vsel %vm997, 1, 0
        %v1126 = vsel %vm998, 1, 0
        %v1127 = vsel %vm999, 1, 0
        %v1128 = vsel %vm1000, 1, 0
        %v1129 = vsel %vm1001, 1, 0
        %v1130 = vsel %vm1002, 1, 0
        %v1131 = vsel %vm1003, 1, 0
        %v1132 = vsel %vm1004, 1, 0
        %v1133 = vsel %vm1005, 1, 0
        %v1134 = vsel %vm1006, 1, 0
        %v1135 = vsel %vm1007, 1, 0
        %v1136 = vsel %vm1008, 1, 0
        %v1137 = vsel %vm1009, 1, 0
        %v1138 = vsel %vm1010, 1, 0
        %v1139 = vsel %vm1011, 1, 0
        %v1140 = vsel %vm1012, 1, 0
        %v1141 = vsel %vm1013, 1, 0
        %v1142 = vsel %vm1014, 1, 0
        %v1143 = vsel %vm1015, 1, 0
        %v1144 = vsel %vm1016, 1, 0
        %v1145 = vsel %vm1017, 1, 0
        %v1146 = vsel %vm1018, 1, 0
        %v1147 = vsel %vm1019, 1, 0
        %v1148 = vsel %vm1020, 1, 0
        %v1149 = vcvt.s32.f32 %v1021
        %v1150 = vcvt.s32.f32 %v1022
        %v1151 = vcvt.s32.f32 %v1023
        %v1152 = vcvt.s32.f32 %v1024
        %v1153 = vcvt.s32.f32 %v1025
        %v1154 = vcvt.s32.f32 %v1026
        %v1155 = vcvt.s32.f32 %v1027
        %v1156 = vcvt.s32.f32 %v1028
        %v1157 = vcvt.s32.f32 %v1029
        %v1158 = vcvt.s32.f32 %v1030
        %v1159 = vcvt.s32.f32 %v1031
        %v1160 = vcvt.s32.f32 %v1032
        %v1161 = vcvt.s32.f32 %v1033
        %v1162 = vcvt.s32.f32 %v1034
        %v1163 = vcvt.s32.f32 %v1035
        %v1164 = vcvt.s32.f32 %v1036
        %v1165 = vcvt.s32.f32 %v1037
        %v1166 = vcvt.s32.f32 %v1038
        %v1167 = vcvt.s32.f32 %v1039
        %v1168 = vcvt.s32.f32 %v1040
        %v1169 = vcvt.s32.f32 %v1041
        %v1170 = vcvt.s32.f32 %v1042
        %v1171 = vcvt.s32.f32 %v1043
        %v1172 = vcvt.s32.f32 %v1044
        %v1173 = vcvt.s32.f32 %v1045
        %v1174 = vcvt.s32.f32 %v1046
        %v1175 = vcvt.s32.f32 %v1047
        %v1176 = vcvt.s32.f32 %v1048
        %v1177 = vcvt.s32.f32 %v1049
        %v1178 = vcvt.s32.f32 %v1050
        %v1179 = vcvt.s32.f32 %v1051
        %v1180 = vcvt.s32.f32 %v1052
        %v1181 = vcvt.s32.f32 %v1053
        %v1182 = vcvt.s32.f32 %v1054
        %v1183 = vcvt.s32.f32 %v1055
        %v1184 = vcvt.s32.f32 %v1056
        %v1185 = vcvt.s32.f32 %v1057
        %v1186 = vcvt.s32.f32 %v1058
        %v1187 = vcvt.s32.f32 %v1059
        %v1188 = vcvt.s32.f32 %v1060
        %v1189 = vcvt.s32.f32 %v1061
        %v1190 = vcvt.s32.f32 %v1062
        %v1191 = vcvt.s32.f32 %v1063
        %v1192 = vcvt.s32.f32 %v1064
        %v1193 = vcvt.s32.f32 %v1065
        %v1194 = vcvt.s32.f32 %v1066
        %v1195 = vcvt.s32.f32 %v1067
        %v1196 = vcvt.s32.f32 %v1068
        %v1197 = vcvt.s32.f32 %v1069
        %v1198 = vcvt.s32.f32 %v1070
        %v1199 = vcvt.s32.f32 %v1071
        %v1200 = vcvt.s32.f32 %v1072
        %v1201 = vcvt.s32.f32 %v1073
        %v1202 = vcvt.s32.f32 %v1074
        %v1203 = vcvt.s32.f32 %v1075
        %v1204 = vcvt.s32.f32 %v1076
        %v1205 = vcvt.s32.f32 %v1077
        %v1206 = vcvt.s32.f32 %v1078
        %v1207 = vcvt.s32.f32 %v1079
        %v1208 = vcvt.s32.f32 %v1080
        %v1209 = vcvt.s32.f32 %v1081
        %v1210 = vcvt.s32.f32 %v1082
        %v1211 = vcvt.s32.f32 %v1083
        %v1212 = vcvt.s32.f32 %v1084
        %v1213 = vcvt.s32.f32 %v1085
        %v1214 = vcvt.s32.f32 %v1086
        %v1215 = vcvt.s32.f32 %v1087
        %v1216 = vcvt.s32.f32 %v1088
        %v1217 = vcvt.s32.f32 %v1089
        %v1218 = vcvt.s32.f32 %v1090
        %v1219 = vcvt.s32.f32 %v1091
        %v1220 = vcvt.s32.f32 %v1092
        %v1221 = vcvt.s32.f32 %v1093
        %v1222 = vcvt.s32.f32 %v1094
        %v1223 = vcvt.s32.f32 %v1095
        %v1224 = vcvt.s32.f32 %v1096
        %v1225 = vcvt.s32.f32 %v1097
        %v1226 = vcvt.s32.f32 %v1098
        %v1227 = vcvt.s32.f32 %v1099
        %v1228 = vcvt.s32.f32 %v1100
        %v1229 = vcvt.s32.f32 %v1101
        %v1230 = vcvt.s32.f32 %v1102
        %v1231 = vcvt.s32.f32 %v1103
        %v1232 = vcvt.s32.f32 %v1104
        %v1233 = vcvt.s32.f32 %v1105
        %v1234 = vcvt.s32.f32 %v1106
        %v1235 = vcvt.s32.f32 %v1107
        %v1236 = vcvt.s32.f32 %v1108
        %v1237 = vcvt.s32.f32 %v1109
        %v1238 = vcvt.s32.f32 %v1110
        %v1239 = vcvt.s32.f32 %v1111
        %v1240 = vcvt.s32.f32 %v1112
        %v1241 = vcvt.s32.f32 %v1113
        %v1242 = vcvt.s32.f32 %v1114
        %v1243 = vcvt.s32.f32 %v1115
        %v1244 = vcvt.s32.f32 %v1116
        %v1245 = vcvt.s32.f32 %v1117
        %v1246 = vcvt.s32.f32 %v1118
        %v1247 = vcvt.s32.f32 %v1119
        %v1248 = vcvt.s32.f32 %v1120
        %v1249 = vcvt.s32.f32 %v1121
        %v1250 = vcvt.s32.f32 %v1122
        %v1251 = vcvt.s32.f32 %v1123
        %v1252 = vcvt.s32.f32 %v1124
        %v1253 = vcvt.s32.f32 %v1125
        %v1254 = vcvt.s32.f32 %v1126
        %v1255 = vcvt.s32.f32 %v1127
        %v1256 = vcvt.s32.f32 %v1128
        %v1257 = vcvt.s32.f32 %v1129
        %v1258 = vcvt.s32.f32 %v1130
        %v1259 = vcvt.s32.f32 %v1131
        %v1260 = vcvt.s32.f32 %v1132
        %v1261 = vcvt.s32.f32 %v1133
        %v1262 = vcvt.s32.f32 %v1134
        %v1263 = vcvt.s32.f32 %v1135
        %v1264 = vcvt.s32.f32 %v1136
        %v1265 = vcvt.s32.f32 %v1137
        %v1266 = vcvt.s32.f32 %v1138
        %v1267 = vcvt.s32.f32 %v1139
        %v1268 = vcvt.s32.f32 %v1140
        %v1269 = vcvt.s32.f32 %v1141
        %v1270 = vcvt.s32.f32 %v1142
        %v1271 = vcvt.s32.f32 %v1143
        %v1272 = vcvt.s32.f32 %v1144
        %v1273 = vcvt.s32.f32 %v1145
        %v1274 = vcvt.s32.f32 %v1146
        %v1275 = vcvt.s32.f32 %v1147
        %v1276 = vcvt.s32.f32 %v1148
        %v1277 = vpack.c.bf16 %v1150, %v1149
        %v1278 = vpack.c.bf16 %v1152, %v1151
        %v1279 = vpack.c.bf16 %v1154, %v1153
        %v1280 = vpack.c.bf16 %v1156, %v1155
        %v1281 = vpack.c.bf16 %v1158, %v1157
        %v1282 = vpack.c.bf16 %v1160, %v1159
        %v1283 = vpack.c.bf16 %v1162, %v1161
        %v1284 = vpack.c.bf16 %v1164, %v1163
        %v1285 = vpack.c.bf16 %v1166, %v1165
        %v1286 = vpack.c.bf16 %v1168, %v1167
        %v1287 = vpack.c.bf16 %v1170, %v1169
        %v1288 = vpack.c.bf16 %v1172, %v1171
        %v1289 = vpack.c.bf16 %v1174, %v1173
        %v1290 = vpack.c.bf16 %v1176, %v1175
        %v1291 = vpack.c.bf16 %v1178, %v1177
        %v1292 = vpack.c.bf16 %v1180, %v1179
        %v1293 = vpack.c.bf16 %v1182, %v1181
        %v1294 = vpack.c.bf16 %v1184, %v1183
        %v1295 = vpack.c.bf16 %v1186, %v1185
        %v1296 = vpack.c.bf16 %v1188, %v1187
        %v1297 = vpack.c.bf16 %v1190, %v1189
        %v1298 = vpack.c.bf16 %v1192, %v1191
        %v1299 = vpack.c.bf16 %v1194, %v1193
        %v1300 = vpack.c.bf16 %v1196, %v1195
        %v1301 = vpack.c.bf16 %v1198, %v1197
        %v1302 = vpack.c.bf16 %v1200, %v1199
        %v1303 = vpack.c.bf16 %v1202, %v1201
        %v1304 = vpack.c.bf16 %v1204, %v1203
        %v1305 = vpack.c.bf16 %v1206, %v1205
        %v1306 = vpack.c.bf16 %v1208, %v1207
        %v1307 = vpack.c.bf16 %v1210, %v1209
        %v1308 = vpack.c.bf16 %v1212, %v1211
        %v1309 = vpack.c.bf16 %v1214, %v1213
        %v1310 = vpack.c.bf16 %v1216, %v1215
        %v1311 = vpack.c.bf16 %v1218, %v1217
        %v1312 = vpack.c.bf16 %v1220, %v1219
        %v1313 = vpack.c.bf16 %v1222, %v1221
        %v1314 = vpack.c.bf16 %v1224, %v1223
        %v1315 = vpack.c.bf16 %v1226, %v1225
        %v1316 = vpack.c.bf16 %v1228, %v1227
        %v1317 = vpack.c.bf16 %v1230, %v1229
        %v1318 = vpack.c.bf16 %v1232, %v1231
        %v1319 = vpack.c.bf16 %v1234, %v1233
        %v1320 = vpack.c.bf16 %v1236, %v1235
        %v1321 = vpack.c.bf16 %v1238, %v1237
        %v1322 = vpack.c.bf16 %v1240, %v1239
        %v1323 = vpack.c.bf16 %v1242, %v1241
        %v1324 = vpack.c.bf16 %v1244, %v1243
        %v1325 = vpack.c.bf16 %v1246, %v1245
        %v1326 = vpack.c.bf16 %v1248, %v1247
        %v1327 = vpack.c.bf16 %v1250, %v1249
        %v1328 = vpack.c.bf16 %v1252, %v1251
        %v1329 = vpack.c.bf16 %v1254, %v1253
        %v1330 = vpack.c.bf16 %v1256, %v1255
        %v1331 = vpack.c.bf16 %v1258, %v1257
        %v1332 = vpack.c.bf16 %v1260, %v1259
        %v1333 = vpack.c.bf16 %v1262, %v1261
        %v1334 = vpack.c.bf16 %v1264, %v1263
        %v1335 = vpack.c.bf16 %v1266, %v1265
        %v1336 = vpack.c.bf16 %v1268, %v1267
        %v1337 = vpack.c.bf16 %v1270, %v1269
        %v1338 = vpack.c.bf16 %v1272, %v1271
        %v1339 = vpack.c.bf16 %v1274, %v1273
        %v1340 = vpack.c.bf16 %v1276, %v1275
        %v1341 = vld [vmem:[#allocation2] sm:$0xff]
        %v1342 = vld [vmem:[#allocation2 + $0x8] sm:$0xff]
        %v1343 = vld [vmem:[#allocation2 + $0x10] sm:$0xff]
        %v1344 = vld [vmem:[#allocation2 + $0x18] sm:$0xff]
        %v1345 = vld [vmem:[#allocation2 + $0x20] sm:$0xff]
        %v1346 = vld [vmem:[#allocation2 + $0x28] sm:$0xff]
        %v1347 = vld [vmem:[#allocation2 + $0x30] sm:$0xff]
        %v1348 = vld [vmem:[#allocation2 + $0x38] sm:$0xff]
        %v1349 = vld [vmem:[#allocation2 + $0x40] sm:$0xff]
        %v1350 = vld [vmem:[#allocation2 + $0x48] sm:$0xff]
        %v1351 = vld [vmem:[#allocation2 + $0x50] sm:$0xff]
        %v1352 = vld [vmem:[#allocation2 + $0x58] sm:$0xff]
        %v1353 = vld [vmem:[#allocation2 + $0x60] sm:$0xff]
        %v1354 = vld [vmem:[#allocation2 + $0x68] sm:$0xff]
        %v1355 = vld [vmem:[#allocation2 + $0x70] sm:$0xff]
        %v1356 = vld [vmem:[#allocation2 + $0x78] sm:$0xff]
        %v1357 = vld [vmem:[%s2] sm:$0x3]
        %v1359 = vperm.slane %v1357, 0
        %v1360 = vperm.slane %v1357, 1
        %v1379 = vunpack.c.l.b16 %v1341
        %v1380 = vunpack.c.h.b16 %v1341
        %v1381 = vunpack.c.l.b16 %v1342
        %v1382 = vunpack.c.h.b16 %v1342
        %v1383 = vunpack.c.l.b16 %v1343
        %v1384 = vunpack.c.h.b16 %v1343
        %v1385 = vunpack.c.l.b16 %v1344
        %v1386 = vunpack.c.h.b16 %v1344
        %v1387 = vunpack.c.l.b16 %v1345
        %v1388 = vunpack.c.h.b16 %v1345
        %v1389 = vunpack.c.l.b16 %v1346
        %v1390 = vunpack.c.h.b16 %v1346
        %v1391 = vunpack.c.l.b16 %v1347
        %v1392 = vunpack.c.h.b16 %v1347
        %v1393 = vunpack.c.l.b16 %v1348
        %v1394 = vunpack.c.h.b16 %v1348
        %v1395 = vunpack.c.l.b16 %v1349
        %v1396 = vunpack.c.h.b16 %v1349
        %v1397 = vunpack.c.l.b16 %v1350
        %v1398 = vunpack.c.h.b16 %v1350
        %v1399 = vunpack.c.l.b16 %v1351
        %v1400 = vunpack.c.h.b16 %v1351
        %v1401 = vunpack.c.l.b16 %v1352
        %v1402 = vunpack.c.h.b16 %v1352
        %v1403 = vunpack.c.l.b16 %v1353
        %v1404 = vunpack.c.h.b16 %v1353
        %v1405 = vunpack.c.l.b16 %v1354
        %v1406 = vunpack.c.h.b16 %v1354
        %v1407 = vunpack.c.l.b16 %v1355
        %v1408 = vunpack.c.h.b16 %v1355
        %v1409 = vunpack.c.l.b16 %v1356
        %v1410 = vunpack.c.h.b16 %v1356
        %v1411 = vpack.c.b16 %v1381, %v1379
        %v1412 = vpack.c.b16 %v1382, %v1380
        %v1413 = vpack.c.b16 %v1385, %v1383
        %v1414 = vpack.c.b16 %v1386, %v1384
        %v1415 = vpack.c.b16 %v1389, %v1387
        %v1416 = vpack.c.b16 %v1390, %v1388
        %v1417 = vpack.c.b16 %v1393, %v1391
        %v1418 = vpack.c.b16 %v1394, %v1392
        %v1419 = vpack.c.b16 %v1397, %v1395
        %v1420 = vpack.c.b16 %v1398, %v1396
        %v1421 = vpack.c.b16 %v1401, %v1399
        %v1422 = vpack.c.b16 %v1402, %v1400
        %v1423 = vpack.c.b16 %v1405, %v1403
        %v1424 = vpack.c.b16 %v1406, %v1404
        %v1425 = vpack.c.b16 %v1409, %v1407
        %v1426 = vpack.c.b16 %v1410, %v1408
        %1443 = vmatpush.bf16.msra.mxu0 %v1425
        %1444 = vmatpush.bf16.msra.mxu0 %v1423
        %1445 = vmatpush.bf16.msra.mxu0 %v1421
        %1446 = vmatpush.bf16.msra.mxu0 %v1419
        %1447 = vmatpush.bf16.msra.mxu0 %v1417
        %1448 = vmatpush.bf16.msra.mxu0 %v1415
        %1449 = vmatpush.bf16.msra.mxu0 %v1413
        %1450 = vmatpush.bf16.msra.mxu0 %v1411
        %1451 = vmatmul.bf16.gmra.mxu0 %v1277
        %v1452 = vpop.f32.mrf.mxu0
        %v1453 = vadd.f32 %v1359, %v1452
        %v1454 = vpop.f32.mrf.mxu0
        %v1455 = vadd.f32 %v1359, %v1454
        %1456 = vmatmul.bf16.gmra.mxu0 %v1278
        %v1457 = vpop.f32.mrf.mxu0
        %v1458 = vadd.f32 %v1359, %v1457
        %v1459 = vpop.f32.mrf.mxu0
        %v1460 = vadd.f32 %v1359, %v1459
        %1461 = vmatmul.bf16.gmra.mxu0 %v1279
        %v1462 = vpop.f32.mrf.mxu0
        %v1463 = vadd.f32 %v1359, %v1462
        %v1464 = vpop.f32.mrf.mxu0
        %v1465 = vadd.f32 %v1359, %v1464
        %1466 = vmatmul.bf16.gmra.mxu0 %v1280
        %v1467 = vpop.f32.mrf.mxu0
        %v1468 = vadd.f32 %v1359, %v1467
        %v1469 = vpop.f32.mrf.mxu0
        %v1470 = vadd.f32 %v1359, %v1469
        %1471 = vmatmul.bf16.gmra.mxu0 %v1281
        %v1472 = vpop.f32.mrf.mxu0
        %v1473 = vadd.f32 %v1359, %v1472
        %v1474 = vpop.f32.mrf.mxu0
        %v1475 = vadd.f32 %v1359, %v1474
        %1476 = vmatmul.bf16.gmra.mxu0 %v1282
        %v1477 = vpop.f32.mrf.mxu0
        %v1478 = vadd.f32 %v1359, %v1477
        %v1479 = vpop.f32.mrf.mxu0
        %v1480 = vadd.f32 %v1359, %v1479
        %1481 = vmatmul.bf16.gmra.mxu0 %v1283
        %v1482 = vpop.f32.mrf.mxu0
        %v1483 = vadd.f32 %v1359, %v1482
        %v1484 = vpop.f32.mrf.mxu0
        %v1485 = vadd.f32 %v1359, %v1484
        %1486 = vmatmul.bf16.gmra.mxu0 %v1284
        %v1487 = vpop.f32.mrf.mxu0
        %v1488 = vadd.f32 %v1359, %v1487
        %v1489 = vpop.f32.mrf.mxu0
        %v1490 = vadd.f32 %v1359, %v1489
        %1491 = vmatmul.bf16.gmra.mxu0 %v1285
        %v1492 = vpop.f32.mrf.mxu0
        %v1493 = vadd.f32 %v1359, %v1492
        %v1494 = vpop.f32.mrf.mxu0
        %v1495 = vadd.f32 %v1359, %v1494
        %1496 = vmatmul.bf16.gmra.mxu0 %v1286
        %v1497 = vpop.f32.mrf.mxu0
        %v1498 = vadd.f32 %v1359, %v1497
        %v1499 = vpop.f32.mrf.mxu0
        %v1500 = vadd.f32 %v1359, %v1499
        %1501 = vmatmul.bf16.gmra.mxu0 %v1287
        %v1502 = vpop.f32.mrf.mxu0
        %v1503 = vadd.f32 %v1359, %v1502
        %v1504 = vpop.f32.mrf.mxu0
        %v1505 = vadd.f32 %v1359, %v1504
        %1506 = vmatmul.bf16.gmra.mxu0 %v1288
        %v1507 = vpop.f32.mrf.mxu0
        %v1508 = vadd.f32 %v1359, %v1507
        %v1509 = vpop.f32.mrf.mxu0
        %v1510 = vadd.f32 %v1359, %v1509
        %1511 = vmatmul.bf16.gmra.mxu0 %v1289
        %v1512 = vpop.f32.mrf.mxu0
        %v1513 = vadd.f32 %v1359, %v1512
        %v1514 = vpop.f32.mrf.mxu0
        %v1515 = vadd.f32 %v1359, %v1514
        %1516 = vmatmul.bf16.gmra.mxu0 %v1290
        %v1517 = vpop.f32.mrf.mxu0
        %v1518 = vadd.f32 %v1359, %v1517
        %v1519 = vpop.f32.mrf.mxu0
        %v1520 = vadd.f32 %v1359, %v1519
        %1521 = vmatmul.bf16.gmra.mxu0 %v1291
        %v1522 = vpop.f32.mrf.mxu0
        %v1523 = vadd.f32 %v1359, %v1522
        %v1524 = vpop.f32.mrf.mxu0
        %v1525 = vadd.f32 %v1359, %v1524
        %1526 = vmatmul.bf16.gmra.mxu0 %v1292
        %v1527 = vpop.f32.mrf.mxu0
        %v1528 = vadd.f32 %v1359, %v1527
        %v1529 = vpop.f32.mrf.mxu0
        %v1530 = vadd.f32 %v1359, %v1529
        %1531 = vmatmul.bf16.gmra.mxu0 %v1293
        %v1532 = vpop.f32.mrf.mxu0
        %v1533 = vadd.f32 %v1359, %v1532
        %v1534 = vpop.f32.mrf.mxu0
        %v1535 = vadd.f32 %v1359, %v1534
        %1536 = vmatmul.bf16.gmra.mxu0 %v1294
        %v1537 = vpop.f32.mrf.mxu0
        %v1538 = vadd.f32 %v1359, %v1537
        %v1539 = vpop.f32.mrf.mxu0
        %v1540 = vadd.f32 %v1359, %v1539
        %1541 = vmatmul.bf16.gmra.mxu0 %v1295
        %v1542 = vpop.f32.mrf.mxu0
        %v1543 = vadd.f32 %v1359, %v1542
        %v1544 = vpop.f32.mrf.mxu0
        %v1545 = vadd.f32 %v1359, %v1544
        %1546 = vmatmul.bf16.gmra.mxu0 %v1296
        %v1547 = vpop.f32.mrf.mxu0
        %v1548 = vadd.f32 %v1359, %v1547
        %v1549 = vpop.f32.mrf.mxu0
        %v1550 = vadd.f32 %v1359, %v1549
        %1551 = vmatmul.bf16.gmra.mxu0 %v1297
        %v1552 = vpop.f32.mrf.mxu0
        %v1553 = vadd.f32 %v1359, %v1552
        %v1554 = vpop.f32.mrf.mxu0
        %v1555 = vadd.f32 %v1359, %v1554
        %1556 = vmatmul.bf16.gmra.mxu0 %v1298
        %v1557 = vpop.f32.mrf.mxu0
        %v1558 = vadd.f32 %v1359, %v1557
        %v1559 = vpop.f32.mrf.mxu0
        %v1560 = vadd.f32 %v1359, %v1559
        %1561 = vmatmul.bf16.gmra.mxu0 %v1299
        %v1562 = vpop.f32.mrf.mxu0
        %v1563 = vadd.f32 %v1359, %v1562
        %v1564 = vpop.f32.mrf.mxu0
        %v1565 = vadd.f32 %v1359, %v1564
        %1566 = vmatmul.bf16.gmra.mxu0 %v1300
        %v1567 = vpop.f32.mrf.mxu0
        %v1568 = vadd.f32 %v1359, %v1567
        %v1569 = vpop.f32.mrf.mxu0
        %v1570 = vadd.f32 %v1359, %v1569
        %1571 = vmatmul.bf16.gmra.mxu0 %v1301
        %v1572 = vpop.f32.mrf.mxu0
        %v1573 = vadd.f32 %v1359, %v1572
        %v1574 = vpop.f32.mrf.mxu0
        %v1575 = vadd.f32 %v1359, %v1574
        %1576 = vmatmul.bf16.gmra.mxu0 %v1302
        %v1577 = vpop.f32.mrf.mxu0
        %v1578 = vadd.f32 %v1359, %v1577
        %v1579 = vpop.f32.mrf.mxu0
        %v1580 = vadd.f32 %v1359, %v1579
        %1581 = vmatmul.bf16.gmra.mxu0 %v1303
        %v1582 = vpop.f32.mrf.mxu0
        %v1583 = vadd.f32 %v1359, %v1582
        %v1584 = vpop.f32.mrf.mxu0
        %v1585 = vadd.f32 %v1359, %v1584
        %1586 = vmatmul.bf16.gmra.mxu0 %v1304
        %v1587 = vpop.f32.mrf.mxu0
        %v1588 = vadd.f32 %v1359, %v1587
        %v1589 = vpop.f32.mrf.mxu0
        %v1590 = vadd.f32 %v1359, %v1589
        %1591 = vmatmul.bf16.gmra.mxu0 %v1305
        %v1592 = vpop.f32.mrf.mxu0
        %v1593 = vadd.f32 %v1359, %v1592
        %v1594 = vpop.f32.mrf.mxu0
        %v1595 = vadd.f32 %v1359, %v1594
        %1596 = vmatmul.bf16.gmra.mxu0 %v1306
        %v1597 = vpop.f32.mrf.mxu0
        %v1598 = vadd.f32 %v1359, %v1597
        %v1599 = vpop.f32.mrf.mxu0
        %v1600 = vadd.f32 %v1359, %v1599
        %1601 = vmatmul.bf16.gmra.mxu0 %v1307
        %v1602 = vpop.f32.mrf.mxu0
        %v1603 = vadd.f32 %v1359, %v1602
        %v1604 = vpop.f32.mrf.mxu0
        %v1605 = vadd.f32 %v1359, %v1604
        %1606 = vmatmul.bf16.gmra.mxu0 %v1308
        %v1607 = vpop.f32.mrf.mxu0
        %v1608 = vadd.f32 %v1359, %v1607
        %v1609 = vpop.f32.mrf.mxu0
        %v1610 = vadd.f32 %v1359, %v1609
        %1611 = vmatmul.bf16.gmra.mxu0 %v1309
        %v1612 = vpop.f32.mrf.mxu0
        %v1613 = vadd.f32 %v1359, %v1612
        %v1614 = vpop.f32.mrf.mxu0
        %v1615 = vadd.f32 %v1359, %v1614
        %1616 = vmatmul.bf16.gmra.mxu0 %v1310
        %v1617 = vpop.f32.mrf.mxu0
        %v1618 = vadd.f32 %v1359, %v1617
        %v1619 = vpop.f32.mrf.mxu0
        %v1620 = vadd.f32 %v1359, %v1619
        %1621 = vmatmul.bf16.gmra.mxu0 %v1311
        %v1622 = vpop.f32.mrf.mxu0
        %v1623 = vadd.f32 %v1359, %v1622
        %v1624 = vpop.f32.mrf.mxu0
        %v1625 = vadd.f32 %v1359, %v1624
        %1626 = vmatmul.bf16.gmra.mxu0 %v1312
        %v1627 = vpop.f32.mrf.mxu0
        %v1628 = vadd.f32 %v1359, %v1627
        %v1629 = vpop.f32.mrf.mxu0
        %v1630 = vadd.f32 %v1359, %v1629
        %1631 = vmatmul.bf16.gmra.mxu0 %v1313
        %v1632 = vpop.f32.mrf.mxu0
        %v1633 = vadd.f32 %v1359, %v1632
        %v1634 = vpop.f32.mrf.mxu0
        %v1635 = vadd.f32 %v1359, %v1634
        %1636 = vmatmul.bf16.gmra.mxu0 %v1314
        %v1637 = vpop.f32.mrf.mxu0
        %v1638 = vadd.f32 %v1359, %v1637
        %v1639 = vpop.f32.mrf.mxu0
        %v1640 = vadd.f32 %v1359, %v1639
        %1641 = vmatmul.bf16.gmra.mxu0 %v1315
        %v1642 = vpop.f32.mrf.mxu0
        %v1643 = vadd.f32 %v1359, %v1642
        %v1644 = vpop.f32.mrf.mxu0
        %v1645 = vadd.f32 %v1359, %v1644
        %1646 = vmatmul.bf16.gmra.mxu0 %v1316
        %v1647 = vpop.f32.mrf.mxu0
        %v1648 = vadd.f32 %v1359, %v1647
        %v1649 = vpop.f32.mrf.mxu0
        %v1650 = vadd.f32 %v1359, %v1649
        %1651 = vmatmul.bf16.gmra.mxu0 %v1317
        %v1652 = vpop.f32.mrf.mxu0
        %v1653 = vadd.f32 %v1359, %v1652
        %v1654 = vpop.f32.mrf.mxu0
        %v1655 = vadd.f32 %v1359, %v1654
        %1656 = vmatmul.bf16.gmra.mxu0 %v1318
        %v1657 = vpop.f32.mrf.mxu0
        %v1658 = vadd.f32 %v1359, %v1657
        %v1659 = vpop.f32.mrf.mxu0
        %v1660 = vadd.f32 %v1359, %v1659
        %1661 = vmatmul.bf16.gmra.mxu0 %v1319
        %v1662 = vpop.f32.mrf.mxu0
        %v1663 = vadd.f32 %v1359, %v1662
        %v1664 = vpop.f32.mrf.mxu0
        %v1665 = vadd.f32 %v1359, %v1664
        %1666 = vmatmul.bf16.gmra.mxu0 %v1320
        %v1667 = vpop.f32.mrf.mxu0
        %v1668 = vadd.f32 %v1359, %v1667
        %v1669 = vpop.f32.mrf.mxu0
        %v1670 = vadd.f32 %v1359, %v1669
        %1671 = vmatmul.bf16.gmra.mxu0 %v1321
        %v1672 = vpop.f32.mrf.mxu0
        %v1673 = vadd.f32 %v1359, %v1672
        %v1674 = vpop.f32.mrf.mxu0
        %v1675 = vadd.f32 %v1359, %v1674
        %1676 = vmatmul.bf16.gmra.mxu0 %v1322
        %v1677 = vpop.f32.mrf.mxu0
        %v1678 = vadd.f32 %v1359, %v1677
        %v1679 = vpop.f32.mrf.mxu0
        %v1680 = vadd.f32 %v1359, %v1679
        %1681 = vmatmul.bf16.gmra.mxu0 %v1323
        %v1682 = vpop.f32.mrf.mxu0
        %v1683 = vadd.f32 %v1359, %v1682
        %v1684 = vpop.f32.mrf.mxu0
        %v1685 = vadd.f32 %v1359, %v1684
        %1686 = vmatmul.bf16.gmra.mxu0 %v1324
        %v1687 = vpop.f32.mrf.mxu0
        %v1688 = vadd.f32 %v1359, %v1687
        %v1689 = vpop.f32.mrf.mxu0
        %v1690 = vadd.f32 %v1359, %v1689
        %1691 = vmatmul.bf16.gmra.mxu0 %v1325
        %v1692 = vpop.f32.mrf.mxu0
        %v1693 = vadd.f32 %v1359, %v1692
        %v1694 = vpop.f32.mrf.mxu0
        %v1695 = vadd.f32 %v1359, %v1694
        %1696 = vmatmul.bf16.gmra.mxu0 %v1326
        %v1697 = vpop.f32.mrf.mxu0
        %v1698 = vadd.f32 %v1359, %v1697
        %v1699 = vpop.f32.mrf.mxu0
        %v1700 = vadd.f32 %v1359, %v1699
        %1701 = vmatmul.bf16.gmra.mxu0 %v1327
        %v1702 = vpop.f32.mrf.mxu0
        %v1703 = vadd.f32 %v1359, %v1702
        %v1704 = vpop.f32.mrf.mxu0
        %v1705 = vadd.f32 %v1359, %v1704
        %1706 = vmatmul.bf16.gmra.mxu0 %v1328
        %v1707 = vpop.f32.mrf.mxu0
        %v1708 = vadd.f32 %v1359, %v1707
        %v1709 = vpop.f32.mrf.mxu0
        %v1710 = vadd.f32 %v1359, %v1709
        %1711 = vmatmul.bf16.gmra.mxu0 %v1329
        %v1712 = vpop.f32.mrf.mxu0
        %v1713 = vadd.f32 %v1359, %v1712
        %v1714 = vpop.f32.mrf.mxu0
        %v1715 = vadd.f32 %v1359, %v1714
        %1716 = vmatmul.bf16.gmra.mxu0 %v1330
        %v1717 = vpop.f32.mrf.mxu0
        %v1718 = vadd.f32 %v1359, %v1717
        %v1719 = vpop.f32.mrf.mxu0
        %v1720 = vadd.f32 %v1359, %v1719
        %1721 = vmatmul.bf16.gmra.mxu0 %v1331
        %v1722 = vpop.f32.mrf.mxu0
        %v1723 = vadd.f32 %v1359, %v1722
        %v1724 = vpop.f32.mrf.mxu0
        %v1725 = vadd.f32 %v1359, %v1724
        %1726 = vmatmul.bf16.gmra.mxu0 %v1332
        %v1727 = vpop.f32.mrf.mxu0
        %v1728 = vadd.f32 %v1359, %v1727
        %v1729 = vpop.f32.mrf.mxu0
        %v1730 = vadd.f32 %v1359, %v1729
        %1731 = vmatmul.bf16.gmra.mxu0 %v1333
        %v1732 = vpop.f32.mrf.mxu0
        %v1733 = vadd.f32 %v1359, %v1732
        %v1734 = vpop.f32.mrf.mxu0
        %v1735 = vadd.f32 %v1359, %v1734
        %1736 = vmatmul.bf16.gmra.mxu0 %v1334
        %v1737 = vpop.f32.mrf.mxu0
        %v1738 = vadd.f32 %v1359, %v1737
        %v1739 = vpop.f32.mrf.mxu0
        %v1740 = vadd.f32 %v1359, %v1739
        %1741 = vmatmul.bf16.gmra.mxu0 %v1335
        %v1742 = vpop.f32.mrf.mxu0
        %v1743 = vadd.f32 %v1359, %v1742
        %v1744 = vpop.f32.mrf.mxu0
        %v1745 = vadd.f32 %v1359, %v1744
        %1746 = vmatmul.bf16.gmra.mxu0 %v1336
        %v1747 = vpop.f32.mrf.mxu0
        %v1748 = vadd.f32 %v1359, %v1747
        %v1749 = vpop.f32.mrf.mxu0
        %v1750 = vadd.f32 %v1359, %v1749
        %1751 = vmatmul.bf16.gmra.mxu0 %v1337
        %v1752 = vpop.f32.mrf.mxu0
        %v1753 = vadd.f32 %v1359, %v1752
        %v1754 = vpop.f32.mrf.mxu0
        %v1755 = vadd.f32 %v1359, %v1754
        %1756 = vmatmul.bf16.gmra.mxu0 %v1338
        %v1757 = vpop.f32.mrf.mxu0
        %v1758 = vadd.f32 %v1359, %v1757
        %v1759 = vpop.f32.mrf.mxu0
        %v1760 = vadd.f32 %v1359, %v1759
        %1761 = vmatmul.bf16.gmra.mxu0 %v1339
        %v1762 = vpop.f32.mrf.mxu0
        %v1763 = vadd.f32 %v1359, %v1762
        %v1764 = vpop.f32.mrf.mxu0
        %v1765 = vadd.f32 %v1359, %v1764
        %1766 = vmatmul.bf16.gmra.mxu0 %v1340
        %v1767 = vpop.f32.mrf.mxu0
        %v1768 = vadd.f32 %v1359, %v1767
        %v1769 = vpop.f32.mrf.mxu0
        %v1770 = vadd.f32 %v1359, %v1769
        %1771 = vdwg.mxu0
        %1772 = vmatpush.bf16.msra.mxu0 %v1426
        %1773 = vmatpush.bf16.msra.mxu0 %v1424
        %1774 = vmatpush.bf16.msra.mxu0 %v1422
        %1775 = vmatpush.bf16.msra.mxu0 %v1420
        %1776 = vmatpush.bf16.msra.mxu0 %v1418
        %1777 = vmatpush.bf16.msra.mxu0 %v1416
        %1778 = vmatpush.bf16.msra.mxu0 %v1414
        %1779 = vmatpush.bf16.msra.mxu0 %v1412
        %1780 = vmatmul.bf16.gmra.mxu0 %v1277
        %v1781 = vpop.f32.mrf.mxu0
        %v1782 = vadd.f32 %v1360, %v1781
        %v1783 = vpop.f32.mrf.mxu0
        %v1784 = vadd.f32 %v1360, %v1783
        %1785 = vmatmul.bf16.gmra.mxu0 %v1278
        %v1786 = vpop.f32.mrf.mxu0
        %v1787 = vadd.f32 %v1360, %v1786
        %v1788 = vpop.f32.mrf.mxu0
        %v1789 = vadd.f32 %v1360, %v1788
        %1790 = vmatmul.bf16.gmra.mxu0 %v1279
        %v1791 = vpop.f32.mrf.mxu0
        %v1792 = vadd.f32 %v1360, %v1791
        %v1793 = vpop.f32.mrf.mxu0
        %v1794 = vadd.f32 %v1360, %v1793
        %1795 = vmatmul.bf16.gmra.mxu0 %v1280
        %v1796 = vpop.f32.mrf.mxu0
        %v1797 = vadd.f32 %v1360, %v1796
        %v1798 = vpop.f32.mrf.mxu0
        %v1799 = vadd.f32 %v1360, %v1798
        %1800 = vmatmul.bf16.gmra.mxu0 %v1281
        %v1801 = vpop.f32.mrf.mxu0
        %v1802 = vadd.f32 %v1360, %v1801
        %v1803 = vpop.f32.mrf.mxu0
        %v1804 = vadd.f32 %v1360, %v1803
        %1805 = vmatmul.bf16.gmra.mxu0 %v1282
        %v1806 = vpop.f32.mrf.mxu0
        %v1807 = vadd.f32 %v1360, %v1806
        %v1808 = vpop.f32.mrf.mxu0
        %v1809 = vadd.f32 %v1360, %v1808
        %1810 = vmatmul.bf16.gmra.mxu0 %v1283
        %v1811 = vpop.f32.mrf.mxu0
        %v1812 = vadd.f32 %v1360, %v1811
        %v1813 = vpop.f32.mrf.mxu0
        %v1814 = vadd.f32 %v1360, %v1813
        %1815 = vmatmul.bf16.gmra.mxu0 %v1284
        %v1816 = vpop.f32.mrf.mxu0
        %v1817 = vadd.f32 %v1360, %v1816
        %v1818 = vpop.f32.mrf.mxu0
        %v1819 = vadd.f32 %v1360, %v1818
        %1820 = vmatmul.bf16.gmra.mxu0 %v1285
        %v1821 = vpop.f32.mrf.mxu0
        %v1822 = vadd.f32 %v1360, %v1821
        %v1823 = vpop.f32.mrf.mxu0
        %v1824 = vadd.f32 %v1360, %v1823
        %1825 = vmatmul.bf16.gmra.mxu0 %v1286
        %v1826 = vpop.f32.mrf.mxu0
        %v1827 = vadd.f32 %v1360, %v1826
        %v1828 = vpop.f32.mrf.mxu0
        %v1829 = vadd.f32 %v1360, %v1828
        %1830 = vmatmul.bf16.gmra.mxu0 %v1287
        %v1831 = vpop.f32.mrf.mxu0
        %v1832 = vadd.f32 %v1360, %v1831
        %v1833 = vpop.f32.mrf.mxu0
        %v1834 = vadd.f32 %v1360, %v1833
        %1835 = vmatmul.bf16.gmra.mxu0 %v1288
        %v1836 = vpop.f32.mrf.mxu0
        %v1837 = vadd.f32 %v1360, %v1836
        %v1838 = vpop.f32.mrf.mxu0
        %v1839 = vadd.f32 %v1360, %v1838
        %1840 = vmatmul.bf16.gmra.mxu0 %v1289
        %v1841 = vpop.f32.mrf.mxu0
        %v1842 = vadd.f32 %v1360, %v1841
        %v1843 = vpop.f32.mrf.mxu0
        %v1844 = vadd.f32 %v1360, %v1843
        %1845 = vmatmul.bf16.gmra.mxu0 %v1290
        %v1846 = vpop.f32.mrf.mxu0
        %v1847 = vadd.f32 %v1360, %v1846
        %v1848 = vpop.f32.mrf.mxu0
        %v1849 = vadd.f32 %v1360, %v1848
        %1850 = vmatmul.bf16.gmra.mxu0 %v1291
        %v1851 = vpop.f32.mrf.mxu0
        %v1852 = vadd.f32 %v1360, %v1851
        %v1853 = vpop.f32.mrf.mxu0
        %v1854 = vadd.f32 %v1360, %v1853
        %1855 = vmatmul.bf16.gmra.mxu0 %v1292
        %v1856 = vpop.f32.mrf.mxu0
        %v1857 = vadd.f32 %v1360, %v1856
        %v1858 = vpop.f32.mrf.mxu0
        %v1859 = vadd.f32 %v1360, %v1858
        %1860 = vmatmul.bf16.gmra.mxu0 %v1293
        %v1861 = vpop.f32.mrf.mxu0
        %v1862 = vadd.f32 %v1360, %v1861
        %v1863 = vpop.f32.mrf.mxu0
        %v1864 = vadd.f32 %v1360, %v1863
        %1865 = vmatmul.bf16.gmra.mxu0 %v1294
        %v1866 = vpop.f32.mrf.mxu0
        %v1867 = vadd.f32 %v1360, %v1866
        %v1868 = vpop.f32.mrf.mxu0
        %v1869 = vadd.f32 %v1360, %v1868
        %1870 = vmatmul.bf16.gmra.mxu0 %v1295
        %v1871 = vpop.f32.mrf.mxu0
        %v1872 = vadd.f32 %v1360, %v1871
        %v1873 = vpop.f32.mrf.mxu0
        %v1874 = vadd.f32 %v1360, %v1873
        %1875 = vmatmul.bf16.gmra.mxu0 %v1296
        %v1876 = vpop.f32.mrf.mxu0
        %v1877 = vadd.f32 %v1360, %v1876
        %v1878 = vpop.f32.mrf.mxu0
        %v1879 = vadd.f32 %v1360, %v1878
        %1880 = vmatmul.bf16.gmra.mxu0 %v1297
        %v1881 = vpop.f32.mrf.mxu0
        %v1882 = vadd.f32 %v1360, %v1881
        %v1883 = vpop.f32.mrf.mxu0
        %v1884 = vadd.f32 %v1360, %v1883
        %1885 = vmatmul.bf16.gmra.mxu0 %v1298
        %v1886 = vpop.f32.mrf.mxu0
        %v1887 = vadd.f32 %v1360, %v1886
        %v1888 = vpop.f32.mrf.mxu0
        %v1889 = vadd.f32 %v1360, %v1888
        %1890 = vmatmul.bf16.gmra.mxu0 %v1299
        %v1891 = vpop.f32.mrf.mxu0
        %v1892 = vadd.f32 %v1360, %v1891
        %v1893 = vpop.f32.mrf.mxu0
        %v1894 = vadd.f32 %v1360, %v1893
        %1895 = vmatmul.bf16.gmra.mxu0 %v1300
        %v1896 = vpop.f32.mrf.mxu0
        %v1897 = vadd.f32 %v1360, %v1896
        %v1898 = vpop.f32.mrf.mxu0
        %v1899 = vadd.f32 %v1360, %v1898
        %1900 = vmatmul.bf16.gmra.mxu0 %v1301
        %v1901 = vpop.f32.mrf.mxu0
        %v1902 = vadd.f32 %v1360, %v1901
        %v1903 = vpop.f32.mrf.mxu0
        %v1904 = vadd.f32 %v1360, %v1903
        %1905 = vmatmul.bf16.gmra.mxu0 %v1302
        %v1906 = vpop.f32.mrf.mxu0
        %v1907 = vadd.f32 %v1360, %v1906
        %v1908 = vpop.f32.mrf.mxu0
        %v1909 = vadd.f32 %v1360, %v1908
        %1910 = vmatmul.bf16.gmra.mxu0 %v1303
        %v1911 = vpop.f32.mrf.mxu0
        %v1912 = vadd.f32 %v1360, %v1911
        %v1913 = vpop.f32.mrf.mxu0
        %v1914 = vadd.f32 %v1360, %v1913
        %1915 = vmatmul.bf16.gmra.mxu0 %v1304
        %v1916 = vpop.f32.mrf.mxu0
        %v1917 = vadd.f32 %v1360, %v1916
        %v1918 = vpop.f32.mrf.mxu0
        %v1919 = vadd.f32 %v1360, %v1918
        %1920 = vmatmul.bf16.gmra.mxu0 %v1305
        %v1921 = vpop.f32.mrf.mxu0
        %v1922 = vadd.f32 %v1360, %v1921
        %v1923 = vpop.f32.mrf.mxu0
        %v1924 = vadd.f32 %v1360, %v1923
        %1925 = vmatmul.bf16.gmra.mxu0 %v1306
        %v1926 = vpop.f32.mrf.mxu0
        %v1927 = vadd.f32 %v1360, %v1926
        %v1928 = vpop.f32.mrf.mxu0
        %v1929 = vadd.f32 %v1360, %v1928
        %1930 = vmatmul.bf16.gmra.mxu0 %v1307
        %v1931 = vpop.f32.mrf.mxu0
        %v1932 = vadd.f32 %v1360, %v1931
        %v1933 = vpop.f32.mrf.mxu0
        %v1934 = vadd.f32 %v1360, %v1933
        %1935 = vmatmul.bf16.gmra.mxu0 %v1308
        %v1936 = vpop.f32.mrf.mxu0
        %v1937 = vadd.f32 %v1360, %v1936
        %v1938 = vpop.f32.mrf.mxu0
        %v1939 = vadd.f32 %v1360, %v1938
        %1940 = vmatmul.bf16.gmra.mxu0 %v1309
        %v1941 = vpop.f32.mrf.mxu0
        %v1942 = vadd.f32 %v1360, %v1941
        %v1943 = vpop.f32.mrf.mxu0
        %v1944 = vadd.f32 %v1360, %v1943
        %1945 = vmatmul.bf16.gmra.mxu0 %v1310
        %v1946 = vpop.f32.mrf.mxu0
        %v1947 = vadd.f32 %v1360, %v1946
        %v1948 = vpop.f32.mrf.mxu0
        %v1949 = vadd.f32 %v1360, %v1948
        %1950 = vmatmul.bf16.gmra.mxu0 %v1311
        %v1951 = vpop.f32.mrf.mxu0
        %v1952 = vadd.f32 %v1360, %v1951
        %v1953 = vpop.f32.mrf.mxu0
        %v1954 = vadd.f32 %v1360, %v1953
        %1955 = vmatmul.bf16.gmra.mxu0 %v1312
        %v1956 = vpop.f32.mrf.mxu0
        %v1957 = vadd.f32 %v1360, %v1956
        %v1958 = vpop.f32.mrf.mxu0
        %v1959 = vadd.f32 %v1360, %v1958
        %1960 = vmatmul.bf16.gmra.mxu0 %v1313
        %v1961 = vpop.f32.mrf.mxu0
        %v1962 = vadd.f32 %v1360, %v1961
        %v1963 = vpop.f32.mrf.mxu0
        %v1964 = vadd.f32 %v1360, %v1963
        %1965 = vmatmul.bf16.gmra.mxu0 %v1314
        %v1966 = vpop.f32.mrf.mxu0
        %v1967 = vadd.f32 %v1360, %v1966
        %v1968 = vpop.f32.mrf.mxu0
        %v1969 = vadd.f32 %v1360, %v1968
        %1970 = vmatmul.bf16.gmra.mxu0 %v1315
        %v1971 = vpop.f32.mrf.mxu0
        %v1972 = vadd.f32 %v1360, %v1971
        %v1973 = vpop.f32.mrf.mxu0
        %v1974 = vadd.f32 %v1360, %v1973
        %1975 = vmatmul.bf16.gmra.mxu0 %v1316
        %v1976 = vpop.f32.mrf.mxu0
        %v1977 = vadd.f32 %v1360, %v1976
        %v1978 = vpop.f32.mrf.mxu0
        %v1979 = vadd.f32 %v1360, %v1978
        %1980 = vmatmul.bf16.gmra.mxu0 %v1317
        %v1981 = vpop.f32.mrf.mxu0
        %v1982 = vadd.f32 %v1360, %v1981
        %v1983 = vpop.f32.mrf.mxu0
        %v1984 = vadd.f32 %v1360, %v1983
        %1985 = vmatmul.bf16.gmra.mxu0 %v1318
        %v1986 = vpop.f32.mrf.mxu0
        %v1987 = vadd.f32 %v1360, %v1986
        %v1988 = vpop.f32.mrf.mxu0
        %v1989 = vadd.f32 %v1360, %v1988
        %1990 = vmatmul.bf16.gmra.mxu0 %v1319
        %v1991 = vpop.f32.mrf.mxu0
        %v1992 = vadd.f32 %v1360, %v1991
        %v1993 = vpop.f32.mrf.mxu0
        %v1994 = vadd.f32 %v1360, %v1993
        %1995 = vmatmul.bf16.gmra.mxu0 %v1320
        %v1996 = vpop.f32.mrf.mxu0
        %v1997 = vadd.f32 %v1360, %v1996
        %v1998 = vpop.f32.mrf.mxu0
        %v1999 = vadd.f32 %v1360, %v1998
        %2000 = vmatmul.bf16.gmra.mxu0 %v1321
        %v2001 = vpop.f32.mrf.mxu0
        %v2002 = vadd.f32 %v1360, %v2001
        %v2003 = vpop.f32.mrf.mxu0
        %v2004 = vadd.f32 %v1360, %v2003
        %2005 = vmatmul.bf16.gmra.mxu0 %v1322
        %v2006 = vpop.f32.mrf.mxu0
        %v2007 = vadd.f32 %v1360, %v2006
        %v2008 = vpop.f32.mrf.mxu0
        %v2009 = vadd.f32 %v1360, %v2008
        %2010 = vmatmul.bf16.gmra.mxu0 %v1323
        %v2011 = vpop.f32.mrf.mxu0
        %v2012 = vadd.f32 %v1360, %v2011
        %v2013 = vpop.f32.mrf.mxu0
        %v2014 = vadd.f32 %v1360, %v2013
        %2015 = vmatmul.bf16.gmra.mxu0 %v1324
        %v2016 = vpop.f32.mrf.mxu0
        %v2017 = vadd.f32 %v1360, %v2016
        %v2018 = vpop.f32.mrf.mxu0
        %v2019 = vadd.f32 %v1360, %v2018
        %2020 = vmatmul.bf16.gmra.mxu0 %v1325
        %v2021 = vpop.f32.mrf.mxu0
        %v2022 = vadd.f32 %v1360, %v2021
        %v2023 = vpop.f32.mrf.mxu0
        %v2024 = vadd.f32 %v1360, %v2023
        %2025 = vmatmul.bf16.gmra.mxu0 %v1326
        %v2026 = vpop.f32.mrf.mxu0
        %v2027 = vadd.f32 %v1360, %v2026
        %v2028 = vpop.f32.mrf.mxu0
        %v2029 = vadd.f32 %v1360, %v2028
        %2030 = vmatmul.bf16.gmra.mxu0 %v1327
        %v2031 = vpop.f32.mrf.mxu0
        %v2032 = vadd.f32 %v1360, %v2031
        %v2033 = vpop.f32.mrf.mxu0
        %v2034 = vadd.f32 %v1360, %v2033
        %2035 = vmatmul.bf16.gmra.mxu0 %v1328
        %v2036 = vpop.f32.mrf.mxu0
        %v2037 = vadd.f32 %v1360, %v2036
        %v2038 = vpop.f32.mrf.mxu0
        %v2039 = vadd.f32 %v1360, %v2038
        %2040 = vmatmul.bf16.gmra.mxu0 %v1329
        %v2041 = vpop.f32.mrf.mxu0
        %v2042 = vadd.f32 %v1360, %v2041
        %v2043 = vpop.f32.mrf.mxu0
        %v2044 = vadd.f32 %v1360, %v2043
        %2045 = vmatmul.bf16.gmra.mxu0 %v1330
        %v2046 = vpop.f32.mrf.mxu0
        %v2047 = vadd.f32 %v1360, %v2046
        %v2048 = vpop.f32.mrf.mxu0
        %v2049 = vadd.f32 %v1360, %v2048
        %2050 = vmatmul.bf16.gmra.mxu0 %v1331
        %v2051 = vpop.f32.mrf.mxu0
        %v2052 = vadd.f32 %v1360, %v2051
        %v2053 = vpop.f32.mrf.mxu0
        %v2054 = vadd.f32 %v1360, %v2053
        %2055 = vmatmul.bf16.gmra.mxu0 %v1332
        %v2056 = vpop.f32.mrf.mxu0
        %v2057 = vadd.f32 %v1360, %v2056
        %v2058 = vpop.f32.mrf.mxu0
        %v2059 = vadd.f32 %v1360, %v2058
        %2060 = vmatmul.bf16.gmra.mxu0 %v1333
        %v2061 = vpop.f32.mrf.mxu0
        %v2062 = vadd.f32 %v1360, %v2061
        %v2063 = vpop.f32.mrf.mxu0
        %v2064 = vadd.f32 %v1360, %v2063
        %2065 = vmatmul.bf16.gmra.mxu0 %v1334
        %v2066 = vpop.f32.mrf.mxu0
        %v2067 = vadd.f32 %v1360, %v2066
        %v2068 = vpop.f32.mrf.mxu0
        %v2069 = vadd.f32 %v1360, %v2068
        %2070 = vmatmul.bf16.gmra.mxu0 %v1335
        %v2071 = vpop.f32.mrf.mxu0
        %v2072 = vadd.f32 %v1360, %v2071
        %v2073 = vpop.f32.mrf.mxu0
        %v2074 = vadd.f32 %v1360, %v2073
        %2075 = vmatmul.bf16.gmra.mxu0 %v1336
        %v2076 = vpop.f32.mrf.mxu0
        %v2077 = vadd.f32 %v1360, %v2076
        %v2078 = vpop.f32.mrf.mxu0
        %v2079 = vadd.f32 %v1360, %v2078
        %2080 = vmatmul.bf16.gmra.mxu0 %v1337
        %v2081 = vpop.f32.mrf.mxu0
        %v2082 = vadd.f32 %v1360, %v2081
        %v2083 = vpop.f32.mrf.mxu0
        %v2084 = vadd.f32 %v1360, %v2083
        %2085 = vmatmul.bf16.gmra.mxu0 %v1338
        %v2086 = vpop.f32.mrf.mxu0
        %v2087 = vadd.f32 %v1360, %v2086
        %v2088 = vpop.f32.mrf.mxu0
        %v2089 = vadd.f32 %v1360, %v2088
        %2090 = vmatmul.bf16.gmra.mxu0 %v1339
        %v2091 = vpop.f32.mrf.mxu0
        %v2092 = vadd.f32 %v1360, %v2091
        %v2093 = vpop.f32.mrf.mxu0
        %v2094 = vadd.f32 %v1360, %v2093
        %2095 = vmatmul.bf16.gmra.mxu0 %v1340
        %v2096 = vpop.f32.mrf.mxu0
        %v2097 = vadd.f32 %v1360, %v2096
        %v2098 = vpop.f32.mrf.mxu0
        %v2099 = vadd.f32 %v1360, %v2098
        %2100 = vdwg.mxu0
        %v2101 = vmax.f32 %v1453, 0.0
        %v2102 = vmax.f32 %v1782, 0.0
        %v2103 = vmax.f32 %v1455, 0.0
        %v2104 = vmax.f32 %v1784, 0.0
        %v2105 = vmax.f32 %v1458, 0.0
        %v2106 = vmax.f32 %v1787, 0.0
        %v2107 = vmax.f32 %v1460, 0.0
        %v2108 = vmax.f32 %v1789, 0.0
        %v2109 = vmax.f32 %v1463, 0.0
        %v2110 = vmax.f32 %v1792, 0.0
        %v2111 = vmax.f32 %v1465, 0.0
        %v2112 = vmax.f32 %v1794, 0.0
        %v2113 = vmax.f32 %v1468, 0.0
        %v2114 = vmax.f32 %v1797, 0.0
        %v2115 = vmax.f32 %v1470, 0.0
        %v2116 = vmax.f32 %v1799, 0.0
        %v2117 = vmax.f32 %v1473, 0.0
        %v2118 = vmax.f32 %v1802, 0.0
        %v2119 = vmax.f32 %v1475, 0.0
        %v2120 = vmax.f32 %v1804, 0.0
        %v2121 = vmax.f32 %v1478, 0.0
        %v2122 = vmax.f32 %v1807, 0.0
        %v2123 = vmax.f32 %v1480, 0.0
        %v2124 = vmax.f32 %v1809, 0.0
        %v2125 = vmax.f32 %v1483, 0.0
        %v2126 = vmax.f32 %v1812, 0.0
        %v2127 = vmax.f32 %v1485, 0.0
        %v2128 = vmax.f32 %v1814, 0.0
        %v2129 = vmax.f32 %v1488, 0.0
        %v2130 = vmax.f32 %v1817, 0.0
        %v2131 = vmax.f32 %v1490, 0.0
        %v2132 = vmax.f32 %v1819, 0.0
        %v2133 = vmax.f32 %v1493, 0.0
        %v2134 = vmax.f32 %v1822, 0.0
        %v2135 = vmax.f32 %v1495, 0.0
        %v2136 = vmax.f32 %v1824, 0.0
        %v2137 = vmax.f32 %v1498, 0.0
        %v2138 = vmax.f32 %v1827, 0.0
        %v2139 = vmax.f32 %v1500, 0.0
        %v2140 = vmax.f32 %v1829, 0.0
        %v2141 = vmax.f32 %v1503, 0.0
        %v2142 = vmax.f32 %v1832, 0.0
        %v2143 = vmax.f32 %v1505, 0.0
        %v2144 = vmax.f32 %v1834, 0.0
        %v2145 = vmax.f32 %v1508, 0.0
        %v2146 = vmax.f32 %v1837, 0.0
        %v2147 = vmax.f32 %v1510, 0.0
        %v2148 = vmax.f32 %v1839, 0.0
        %v2149 = vmax.f32 %v1513, 0.0
        %v2150 = vmax.f32 %v1842, 0.0
        %v2151 = vmax.f32 %v1515, 0.0
        %v2152 = vmax.f32 %v1844, 0.0
        %v2153 = vmax.f32 %v1518, 0.0
        %v2154 = vmax.f32 %v1847, 0.0
        %v2155 = vmax.f32 %v1520, 0.0
        %v2156 = vmax.f32 %v1849, 0.0
        %v2157 = vmax.f32 %v1523, 0.0
        %v2158 = vmax.f32 %v1852, 0.0
        %v2159 = vmax.f32 %v1525, 0.0
        %v2160 = vmax.f32 %v1854, 0.0
        %v2161 = vmax.f32 %v1528, 0.0
        %v2162 = vmax.f32 %v1857, 0.0
        %v2163 = vmax.f32 %v1530, 0.0
        %v2164 = vmax.f32 %v1859, 0.0
        %v2165 = vmax.f32 %v1533, 0.0
        %v2166 = vmax.f32 %v1862, 0.0
        %v2167 = vmax.f32 %v1535, 0.0
        %v2168 = vmax.f32 %v1864, 0.0
        %v2169 = vmax.f32 %v1538, 0.0
        %v2170 = vmax.f32 %v1867, 0.0
        %v2171 = vmax.f32 %v1540, 0.0
        %v2172 = vmax.f32 %v1869, 0.0
        %v2173 = vmax.f32 %v1543, 0.0
        %v2174 = vmax.f32 %v1872, 0.0
        %v2175 = vmax.f32 %v1545, 0.0
        %v2176 = vmax.f32 %v1874, 0.0
        %v2177 = vmax.f32 %v1548, 0.0
        %v2178 = vmax.f32 %v1877, 0.0
        %v2179 = vmax.f32 %v1550, 0.0
        %v2180 = vmax.f32 %v1879, 0.0
        %v2181 = vmax.f32 %v1553, 0.0
        %v2182 = vmax.f32 %v1882, 0.0
        %v2183 = vmax.f32 %v1555, 0.0
        %v2184 = vmax.f32 %v1884, 0.0
        %v2185 = vmax.f32 %v1558, 0.0
        %v2186 = vmax.f32 %v1887, 0.0
        %v2187 = vmax.f32 %v1560, 0.0
        %v2188 = vmax.f32 %v1889, 0.0
        %v2189 = vmax.f32 %v1563, 0.0
        %v2190 = vmax.f32 %v1892, 0.0
        %v2191 = vmax.f32 %v1565, 0.0
        %v2192 = vmax.f32 %v1894, 0.0
        %v2193 = vmax.f32 %v1568, 0.0
        %v2194 = vmax.f32 %v1897, 0.0
        %v2195 = vmax.f32 %v1570, 0.0
        %v2196 = vmax.f32 %v1899, 0.0
        %v2197 = vmax.f32 %v1573, 0.0
        %v2198 = vmax.f32 %v1902, 0.0
        %v2199 = vmax.f32 %v1575, 0.0
        %v2200 = vmax.f32 %v1904, 0.0
        %v2201 = vmax.f32 %v1578, 0.0
        %v2202 = vmax.f32 %v1907, 0.0
        %v2203 = vmax.f32 %v1580, 0.0
        %v2204 = vmax.f32 %v1909, 0.0
        %v2205 = vmax.f32 %v1583, 0.0
        %v2206 = vmax.f32 %v1912, 0.0
        %v2207 = vmax.f32 %v1585, 0.0
        %v2208 = vmax.f32 %v1914, 0.0
        %v2209 = vmax.f32 %v1588, 0.0
        %v2210 = vmax.f32 %v1917, 0.0
        %v2211 = vmax.f32 %v1590, 0.0
        %v2212 = vmax.f32 %v1919, 0.0
        %v2213 = vmax.f32 %v1593, 0.0
        %v2214 = vmax.f32 %v1922, 0.0
        %v2215 = vmax.f32 %v1595, 0.0
        %v2216 = vmax.f32 %v1924, 0.0
        %v2217 = vmax.f32 %v1598, 0.0
        %v2218 = vmax.f32 %v1927, 0.0
        %v2219 = vmax.f32 %v1600, 0.0
        %v2220 = vmax.f32 %v1929, 0.0
        %v2221 = vmax.f32 %v1603, 0.0
        %v2222 = vmax.f32 %v1932, 0.0
        %v2223 = vmax.f32 %v1605, 0.0
        %v2224 = vmax.f32 %v1934, 0.0
        %v2225 = vmax.f32 %v1608, 0.0
        %v2226 = vmax.f32 %v1937, 0.0
        %v2227 = vmax.f32 %v1610, 0.0
        %v2228 = vmax.f32 %v1939, 0.0
        %v2229 = vmax.f32 %v1613, 0.0
        %v2230 = vmax.f32 %v1942, 0.0
        %v2231 = vmax.f32 %v1615, 0.0
        %v2232 = vmax.f32 %v1944, 0.0
        %v2233 = vmax.f32 %v1618, 0.0
        %v2234 = vmax.f32 %v1947, 0.0
        %v2235 = vmax.f32 %v1620, 0.0
        %v2236 = vmax.f32 %v1949, 0.0
        %v2237 = vmax.f32 %v1623, 0.0
        %v2238 = vmax.f32 %v1952, 0.0
        %v2239 = vmax.f32 %v1625, 0.0
        %v2240 = vmax.f32 %v1954, 0.0
        %v2241 = vmax.f32 %v1628, 0.0
        %v2242 = vmax.f32 %v1957, 0.0
        %v2243 = vmax.f32 %v1630, 0.0
        %v2244 = vmax.f32 %v1959, 0.0
        %v2245 = vmax.f32 %v1633, 0.0
        %v2246 = vmax.f32 %v1962, 0.0
        %v2247 = vmax.f32 %v1635, 0.0
        %v2248 = vmax.f32 %v1964, 0.0
        %v2249 = vmax.f32 %v1638, 0.0
        %v2250 = vmax.f32 %v1967, 0.0
        %v2251 = vmax.f32 %v1640, 0.0
        %v2252 = vmax.f32 %v1969, 0.0
        %v2253 = vmax.f32 %v1643, 0.0
        %v2254 = vmax.f32 %v1972, 0.0
        %v2255 = vmax.f32 %v1645, 0.0
        %v2256 = vmax.f32 %v1974, 0.0
        %v2257 = vmax.f32 %v1648, 0.0
        %v2258 = vmax.f32 %v1977, 0.0
        %v2259 = vmax.f32 %v1650, 0.0
        %v2260 = vmax.f32 %v1979, 0.0
        %v2261 = vmax.f32 %v1653, 0.0
        %v2262 = vmax.f32 %v1982, 0.0
        %v2263 = vmax.f32 %v1655, 0.0
        %v2264 = vmax.f32 %v1984, 0.0
        %v2265 = vmax.f32 %v1658, 0.0
        %v2266 = vmax.f32 %v1987, 0.0
        %v2267 = vmax.f32 %v1660, 0.0
        %v2268 = vmax.f32 %v1989, 0.0
        %v2269 = vmax.f32 %v1663, 0.0
        %v2270 = vmax.f32 %v1992, 0.0
        %v2271 = vmax.f32 %v1665, 0.0
        %v2272 = vmax.f32 %v1994, 0.0
        %v2273 = vmax.f32 %v1668, 0.0
        %v2274 = vmax.f32 %v1997, 0.0
        %v2275 = vmax.f32 %v1670, 0.0
        %v2276 = vmax.f32 %v1999, 0.0
        %v2277 = vmax.f32 %v1673, 0.0
        %v2278 = vmax.f32 %v2002, 0.0
        %v2279 = vmax.f32 %v1675, 0.0
        %v2280 = vmax.f32 %v2004, 0.0
        %v2281 = vmax.f32 %v1678, 0.0
        %v2282 = vmax.f32 %v2007, 0.0
        %v2283 = vmax.f32 %v1680, 0.0
        %v2284 = vmax.f32 %v2009, 0.0
        %v2285 = vmax.f32 %v1683, 0.0
        %v2286 = vmax.f32 %v2012, 0.0
        %v2287 = vmax.f32 %v1685, 0.0
        %v2288 = vmax.f32 %v2014, 0.0
        %v2289 = vmax.f32 %v1688, 0.0
        %v2290 = vmax.f32 %v2017, 0.0
        %v2291 = vmax.f32 %v1690, 0.0
        %v2292 = vmax.f32 %v2019, 0.0
        %v2293 = vmax.f32 %v1693, 0.0
        %v2294 = vmax.f32 %v2022, 0.0
        %v2295 = vmax.f32 %v1695, 0.0
        %v2296 = vmax.f32 %v2024, 0.0
        %v2297 = vmax.f32 %v1698, 0.0
        %v2298 = vmax.f32 %v2027, 0.0
        %v2299 = vmax.f32 %v1700, 0.0
        %v2300 = vmax.f32 %v2029, 0.0
        %v2301 = vmax.f32 %v1703, 0.0
        %v2302 = vmax.f32 %v2032, 0.0
        %v2303 = vmax.f32 %v1705, 0.0
        %v2304 = vmax.f32 %v2034, 0.0
        %v2305 = vmax.f32 %v1708, 0.0
        %v2306 = vmax.f32 %v2037, 0.0
        %v2307 = vmax.f32 %v1710, 0.0
        %v2308 = vmax.f32 %v2039, 0.0
        %v2309 = vmax.f32 %v1713, 0.0
        %v2310 = vmax.f32 %v2042, 0.0
        %v2311 = vmax.f32 %v1715, 0.0
        %v2312 = vmax.f32 %v2044, 0.0
        %v2313 = vmax.f32 %v1718, 0.0
        %v2314 = vmax.f32 %v2047, 0.0
        %v2315 = vmax.f32 %v1720, 0.0
        %v2316 = vmax.f32 %v2049, 0.0
        %v2317 = vmax.f32 %v1723, 0.0
        %v2318 = vmax.f32 %v2052, 0.0
        %v2319 = vmax.f32 %v1725, 0.0
        %v2320 = vmax.f32 %v2054, 0.0
        %v2321 = vmax.f32 %v1728, 0.0
        %v2322 = vmax.f32 %v2057, 0.0
        %v2323 = vmax.f32 %v1730, 0.0
        %v2324 = vmax.f32 %v2059, 0.0
        %v2325 = vmax.f32 %v1733, 0.0
        %v2326 = vmax.f32 %v2062, 0.0
        %v2327 = vmax.f32 %v1735, 0.0
        %v2328 = vmax.f32 %v2064, 0.0
        %v2329 = vmax.f32 %v1738, 0.0
        %v2330 = vmax.f32 %v2067, 0.0
        %v2331 = vmax.f32 %v1740, 0.0
        %v2332 = vmax.f32 %v2069, 0.0
        %v2333 = vmax.f32 %v1743, 0.0
        %v2334 = vmax.f32 %v2072, 0.0
        %v2335 = vmax.f32 %v1745, 0.0
        %v2336 = vmax.f32 %v2074, 0.0
        %v2337 = vmax.f32 %v1748, 0.0
        %v2338 = vmax.f32 %v2077, 0.0
        %v2339 = vmax.f32 %v1750, 0.0
        %v2340 = vmax.f32 %v2079, 0.0
        %v2341 = vmax.f32 %v1753, 0.0
        %v2342 = vmax.f32 %v2082, 0.0
        %v2343 = vmax.f32 %v1755, 0.0
        %v2344 = vmax.f32 %v2084, 0.0
        %v2345 = vmax.f32 %v1758, 0.0
        %v2346 = vmax.f32 %v2087, 0.0
        %v2347 = vmax.f32 %v1760, 0.0
        %v2348 = vmax.f32 %v2089, 0.0
        %v2349 = vmax.f32 %v1763, 0.0
        %v2350 = vmax.f32 %v2092, 0.0
        %v2351 = vmax.f32 %v1765, 0.0
        %v2352 = vmax.f32 %v2094, 0.0
        %v2353 = vmax.f32 %v1768, 0.0
        %v2354 = vmax.f32 %v2097, 0.0
        %v2355 = vmax.f32 %v1770, 0.0
        %v2356 = vmax.f32 %v2099, 0.0
        %v2357 = vpack.c.bf16 %v2103, %v2101
        %v2358 = vpack.c.bf16 %v2104, %v2102
        %v2359 = vpack.c.bf16 %v2107, %v2105
        %v2360 = vpack.c.bf16 %v2108, %v2106
        %v2361 = vpack.c.bf16 %v2111, %v2109
        %v2362 = vpack.c.bf16 %v2112, %v2110
        %v2363 = vpack.c.bf16 %v2115, %v2113
        %v2364 = vpack.c.bf16 %v2116, %v2114
        %v2365 = vpack.c.bf16 %v2119, %v2117
        %v2366 = vpack.c.bf16 %v2120, %v2118
        %v2367 = vpack.c.bf16 %v2123, %v2121
        %v2368 = vpack.c.bf16 %v2124, %v2122
        %v2369 = vpack.c.bf16 %v2127, %v2125
        %v2370 = vpack.c.bf16 %v2128, %v2126
        %v2371 = vpack.c.bf16 %v2131, %v2129
        %v2372 = vpack.c.bf16 %v2132, %v2130
        %v2373 = vpack.c.bf16 %v2135, %v2133
        %v2374 = vpack.c.bf16 %v2136, %v2134
        %v2375 = vpack.c.bf16 %v2139, %v2137
        %v2376 = vpack.c.bf16 %v2140, %v2138
        %v2377 = vpack.c.bf16 %v2143, %v2141
        %v2378 = vpack.c.bf16 %v2144, %v2142
        %v2379 = vpack.c.bf16 %v2147, %v2145
        %v2380 = vpack.c.bf16 %v2148, %v2146
        %v2381 = vpack.c.bf16 %v2151, %v2149
        %v2382 = vpack.c.bf16 %v2152, %v2150
        %v2383 = vpack.c.bf16 %v2155, %v2153
        %v2384 = vpack.c.bf16 %v2156, %v2154
        %v2385 = vpack.c.bf16 %v2159, %v2157
        %v2386 = vpack.c.bf16 %v2160, %v2158
        %v2387 = vpack.c.bf16 %v2163, %v2161
        %v2388 = vpack.c.bf16 %v2164, %v2162
        %v2389 = vpack.c.bf16 %v2167, %v2165
        %v2390 = vpack.c.bf16 %v2168, %v2166
        %v2391 = vpack.c.bf16 %v2171, %v2169
        %v2392 = vpack.c.bf16 %v2172, %v2170
        %v2393 = vpack.c.bf16 %v2175, %v2173
        %v2394 = vpack.c.bf16 %v2176, %v2174
        %v2395 = vpack.c.bf16 %v2179, %v2177
        %v2396 = vpack.c.bf16 %v2180, %v2178
        %v2397 = vpack.c.bf16 %v2183, %v2181
        %v2398 = vpack.c.bf16 %v2184, %v2182
        %v2399 = vpack.c.bf16 %v2187, %v2185
        %v2400 = vpack.c.bf16 %v2188, %v2186
        %v2401 = vpack.c.bf16 %v2191, %v2189
        %v2402 = vpack.c.bf16 %v2192, %v2190
        %v2403 = vpack.c.bf16 %v2195, %v2193
        %v2404 = vpack.c.bf16 %v2196, %v2194
        %v2405 = vpack.c.bf16 %v2199, %v2197
        %v2406 = vpack.c.bf16 %v2200, %v2198
        %v2407 = vpack.c.bf16 %v2203, %v2201
        %v2408 = vpack.c.bf16 %v2204, %v2202
        %v2409 = vpack.c.bf16 %v2207, %v2205
        %v2410 = vpack.c.bf16 %v2208, %v2206
        %v2411 = vpack.c.bf16 %v2211, %v2209
        %v2412 = vpack.c.bf16 %v2212, %v2210
        %v2413 = vpack.c.bf16 %v2215, %v2213
        %v2414 = vpack.c.bf16 %v2216, %v2214
        %v2415 = vpack.c.bf16 %v2219, %v2217
        %v2416 = vpack.c.bf16 %v2220, %v2218
        %v2417 = vpack.c.bf16 %v2223, %v2221
        %v2418 = vpack.c.bf16 %v2224, %v2222
        %v2419 = vpack.c.bf16 %v2227, %v2225
        %v2420 = vpack.c.bf16 %v2228, %v2226
        %v2421 = vpack.c.bf16 %v2231, %v2229
        %v2422 = vpack.c.bf16 %v2232, %v2230
        %v2423 = vpack.c.bf16 %v2235, %v2233
        %v2424 = vpack.c.bf16 %v2236, %v2234
        %v2425 = vpack.c.bf16 %v2239, %v2237
        %v2426 = vpack.c.bf16 %v2240, %v2238
        %v2427 = vpack.c.bf16 %v2243, %v2241
        %v2428 = vpack.c.bf16 %v2244, %v2242
        %v2429 = vpack.c.bf16 %v2247, %v2245
        %v2430 = vpack.c.bf16 %v2248, %v2246
        %v2431 = vpack.c.bf16 %v2251, %v2249
        %v2432 = vpack.c.bf16 %v2252, %v2250
        %v2433 = vpack.c.bf16 %v2255, %v2253
        %v2434 = vpack.c.bf16 %v2256, %v2254
        %v2435 = vpack.c.bf16 %v2259, %v2257
        %v2436 = vpack.c.bf16 %v2260, %v2258
        %v2437 = vpack.c.bf16 %v2263, %v2261
        %v2438 = vpack.c.bf16 %v2264, %v2262
        %v2439 = vpack.c.bf16 %v2267, %v2265
        %v2440 = vpack.c.bf16 %v2268, %v2266
        %v2441 = vpack.c.bf16 %v2271, %v2269
        %v2442 = vpack.c.bf16 %v2272, %v2270
        %v2443 = vpack.c.bf16 %v2275, %v2273
        %v2444 = vpack.c.bf16 %v2276, %v2274
        %v2445 = vpack.c.bf16 %v2279, %v2277
        %v2446 = vpack.c.bf16 %v2280, %v2278
        %v2447 = vpack.c.bf16 %v2283, %v2281
        %v2448 = vpack.c.bf16 %v2284, %v2282
        %v2449 = vpack.c.bf16 %v2287, %v2285
        %v2450 = vpack.c.bf16 %v2288, %v2286
        %v2451 = vpack.c.bf16 %v2291, %v2289
        %v2452 = vpack.c.bf16 %v2292, %v2290
        %v2453 = vpack.c.bf16 %v2295, %v2293
        %v2454 = vpack.c.bf16 %v2296, %v2294
        %v2455 = vpack.c.bf16 %v2299, %v2297
        %v2456 = vpack.c.bf16 %v2300, %v2298
        %v2457 = vpack.c.bf16 %v2303, %v2301
        %v2458 = vpack.c.bf16 %v2304, %v2302
        %v2459 = vpack.c.bf16 %v2307, %v2305
        %v2460 = vpack.c.bf16 %v2308, %v2306
        %v2461 = vpack.c.bf16 %v2311, %v2309
        %v2462 = vpack.c.bf16 %v2312, %v2310
        %v2463 = vpack.c.bf16 %v2315, %v2313
        %v2464 = vpack.c.bf16 %v2316, %v2314
        %v2465 = vpack.c.bf16 %v2319, %v2317
        %v2466 = vpack.c.bf16 %v2320, %v2318
        %v2467 = vpack.c.bf16 %v2323, %v2321
        %v2468 = vpack.c.bf16 %v2324, %v2322
        %v2469 = vpack.c.bf16 %v2327, %v2325
        %v2470 = vpack.c.bf16 %v2328, %v2326
        %v2471 = vpack.c.bf16 %v2331, %v2329
        %v2472 = vpack.c.bf16 %v2332, %v2330
        %v2473 = vpack.c.bf16 %v2335, %v2333
        %v2474 = vpack.c.bf16 %v2336, %v2334
        %v2475 = vpack.c.bf16 %v2339, %v2337
        %v2476 = vpack.c.bf16 %v2340, %v2338
        %v2477 = vpack.c.bf16 %v2343, %v2341
        %v2478 = vpack.c.bf16 %v2344, %v2342
        %v2479 = vpack.c.bf16 %v2347, %v2345
        %v2480 = vpack.c.bf16 %v2348, %v2346
        %v2481 = vpack.c.bf16 %v2351, %v2349
        %v2482 = vpack.c.bf16 %v2352, %v2350
        %v2483 = vpack.c.bf16 %v2355, %v2353
        %v2484 = vpack.c.bf16 %v2356, %v2354
        %v2485 = vld [vmem:[#allocation5] sm:$0xf]
        %v2486 = vld [vmem:[#allocation5 + $0x4] sm:$0xf]
        %v2487 = vld [vmem:[#allocation5 + $0x8] sm:$0xf]
        %v2488 = vld [vmem:[#allocation5 + $0xc] sm:$0xf]
        %v2489 = vld [vmem:[#allocation5 + $0x10] sm:$0xf]
        %v2490 = vld [vmem:[#allocation5 + $0x14] sm:$0xf]
        %v2491 = vld [vmem:[#allocation5 + $0x18] sm:$0xf]
        %v2492 = vld [vmem:[#allocation5 + $0x1c] sm:$0xf]
        %v2493 = vld [vmem:[#allocation5 + $0x20] sm:$0xf]
        %v2494 = vld [vmem:[#allocation5 + $0x24] sm:$0xf]
        %v2495 = vld [vmem:[#allocation5 + $0x28] sm:$0xf]
        %v2496 = vld [vmem:[#allocation5 + $0x2c] sm:$0xf]
        %v2497 = vld [vmem:[#allocation5 + $0x30] sm:$0xf]
        %v2498 = vld [vmem:[#allocation5 + $0x34] sm:$0xf]
        %v2499 = vld [vmem:[#allocation5 + $0x38] sm:$0xf]
        %v2500 = vld [vmem:[#allocation5 + $0x3c] sm:$0xf]
        %v2501 = vld [vmem:[#allocation5 + $0x40] sm:$0xf]
        %v2502 = vld [vmem:[#allocation5 + $0x44] sm:$0xf]
        %v2503 = vld [vmem:[#allocation5 + $0x48] sm:$0xf]
        %v2504 = vld [vmem:[#allocation5 + $0x4c] sm:$0xf]
        %v2505 = vld [vmem:[#allocation5 + $0x50] sm:$0xf]
        %v2506 = vld [vmem:[#allocation5 + $0x54] sm:$0xf]
        %v2507 = vld [vmem:[#allocation5 + $0x58] sm:$0xf]
        %v2508 = vld [vmem:[#allocation5 + $0x5c] sm:$0xf]
        %v2509 = vld [vmem:[#allocation5 + $0x60] sm:$0xf]
        %v2510 = vld [vmem:[#allocation5 + $0x64] sm:$0xf]
        %v2511 = vld [vmem:[#allocation5 + $0x68] sm:$0xf]
        %v2512 = vld [vmem:[#allocation5 + $0x6c] sm:$0xf]
        %v2513 = vld [vmem:[#allocation5 + $0x70] sm:$0xf]
        %v2514 = vld [vmem:[#allocation5 + $0x74] sm:$0xf]
        %v2515 = vld [vmem:[#allocation5 + $0x78] sm:$0xf]
        %v2516 = vld [vmem:[#allocation5 + $0x7c] sm:$0xf]
        %v2517 = vld [vmem:[%s4] sm:$0x1]
        %v2519 = vperm.slane %v2517, 0
        %v2553 = vunpack.c.l.b16 %v2485
        %v2554 = vunpack.c.l.b16 %v2486
        %v2555 = vunpack.c.l.b16 %v2487
        %v2556 = vunpack.c.l.b16 %v2488
        %v2557 = vunpack.c.l.b16 %v2489
        %v2558 = vunpack.c.l.b16 %v2490
        %v2559 = vunpack.c.l.b16 %v2491
        %v2560 = vunpack.c.l.b16 %v2492
        %v2561 = vunpack.c.l.b16 %v2493
        %v2562 = vunpack.c.l.b16 %v2494
        %v2563 = vunpack.c.l.b16 %v2495
        %v2564 = vunpack.c.l.b16 %v2496
        %v2565 = vunpack.c.l.b16 %v2497
        %v2566 = vunpack.c.l.b16 %v2498
        %v2567 = vunpack.c.l.b16 %v2499
        %v2568 = vunpack.c.l.b16 %v2500
        %v2569 = vunpack.c.l.b16 %v2501
        %v2570 = vunpack.c.l.b16 %v2502
        %v2571 = vunpack.c.l.b16 %v2503
        %v2572 = vunpack.c.l.b16 %v2504
        %v2573 = vunpack.c.l.b16 %v2505
        %v2574 = vunpack.c.l.b16 %v2506
        %v2575 = vunpack.c.l.b16 %v2507
        %v2576 = vunpack.c.l.b16 %v2508
        %v2577 = vunpack.c.l.b16 %v2509
        %v2578 = vunpack.c.l.b16 %v2510
        %v2579 = vunpack.c.l.b16 %v2511
        %v2580 = vunpack.c.l.b16 %v2512
        %v2581 = vunpack.c.l.b16 %v2513
        %v2582 = vunpack.c.l.b16 %v2514
        %v2583 = vunpack.c.l.b16 %v2515
        %v2584 = vunpack.c.l.b16 %v2516
        %v2585 = vpack.c.b16 %v2554, %v2553
        %v2586 = vpack.c.b16 %v2556, %v2555
        %v2587 = vpack.c.b16 %v2558, %v2557
        %v2588 = vpack.c.b16 %v2560, %v2559
        %v2589 = vpack.c.b16 %v2562, %v2561
        %v2590 = vpack.c.b16 %v2564, %v2563
        %v2591 = vpack.c.b16 %v2566, %v2565
        %v2592 = vpack.c.b16 %v2568, %v2567
        %v2593 = vpack.c.b16 %v2570, %v2569
        %v2594 = vpack.c.b16 %v2572, %v2571
        %v2595 = vpack.c.b16 %v2574, %v2573
        %v2596 = vpack.c.b16 %v2576, %v2575
        %v2597 = vpack.c.b16 %v2578, %v2577
        %v2598 = vpack.c.b16 %v2580, %v2579
        %v2599 = vpack.c.b16 %v2582, %v2581
        %v2600 = vpack.c.b16 %v2584, %v2583
        %2617 = vmatpush.bf16.msra.mxu0 %v2592
        %2618 = vmatpush.bf16.msra.mxu0 %v2591
        %2619 = vmatpush.bf16.msra.mxu0 %v2590
        %2620 = vmatpush.bf16.msra.mxu0 %v2589
        %2621 = vmatpush.bf16.msra.mxu0 %v2588
        %2622 = vmatpush.bf16.msra.mxu0 %v2587
        %2623 = vmatpush.bf16.msra.mxu0 %v2586
        %2624 = vmatpush.bf16.msra.mxu0 %v2585
        %2625 = vmatmul.bf16.gmra.mxu0 %v2357
        %v2626 = vpop.f32.mrf.mxu0
        %v2627 = vadd.f32 %v2519, %v2626
        %v2628 = vpop.f32.mrf.mxu0
        %v2629 = vadd.f32 %v2519, %v2628
        %2630 = vmatmul.bf16.gmra.mxu0 %v2359
        %v2631 = vpop.f32.mrf.mxu0
        %v2632 = vadd.f32 %v2519, %v2631
        %v2633 = vpop.f32.mrf.mxu0
        %v2634 = vadd.f32 %v2519, %v2633
        %2635 = vmatmul.bf16.gmra.mxu0 %v2361
        %v2636 = vpop.f32.mrf.mxu0
        %v2637 = vadd.f32 %v2519, %v2636
        %v2638 = vpop.f32.mrf.mxu0
        %v2639 = vadd.f32 %v2519, %v2638
        %2640 = vmatmul.bf16.gmra.mxu0 %v2363
        %v2641 = vpop.f32.mrf.mxu0
        %v2642 = vadd.f32 %v2519, %v2641
        %v2643 = vpop.f32.mrf.mxu0
        %v2644 = vadd.f32 %v2519, %v2643
        %2645 = vmatmul.bf16.gmra.mxu0 %v2365
        %v2646 = vpop.f32.mrf.mxu0
        %v2647 = vadd.f32 %v2519, %v2646
        %v2648 = vpop.f32.mrf.mxu0
        %v2649 = vadd.f32 %v2519, %v2648
        %2650 = vmatmul.bf16.gmra.mxu0 %v2367
        %v2651 = vpop.f32.mrf.mxu0
        %v2652 = vadd.f32 %v2519, %v2651
        %v2653 = vpop.f32.mrf.mxu0
        %v2654 = vadd.f32 %v2519, %v2653
        %2655 = vmatmul.bf16.gmra.mxu0 %v2369
        %v2656 = vpop.f32.mrf.mxu0
        %v2657 = vadd.f32 %v2519, %v2656
        %v2658 = vpop.f32.mrf.mxu0
        %v2659 = vadd.f32 %v2519, %v2658
        %2660 = vmatmul.bf16.gmra.mxu0 %v2371
        %v2661 = vpop.f32.mrf.mxu0
        %v2662 = vadd.f32 %v2519, %v2661
        %v2663 = vpop.f32.mrf.mxu0
        %v2664 = vadd.f32 %v2519, %v2663
        %2665 = vmatmul.bf16.gmra.mxu0 %v2373
        %v2666 = vpop.f32.mrf.mxu0
        %v2667 = vadd.f32 %v2519, %v2666
        %v2668 = vpop.f32.mrf.mxu0
        %v2669 = vadd.f32 %v2519, %v2668
        %2670 = vmatmul.bf16.gmra.mxu0 %v2375
        %v2671 = vpop.f32.mrf.mxu0
        %v2672 = vadd.f32 %v2519, %v2671
        %v2673 = vpop.f32.mrf.mxu0
        %v2674 = vadd.f32 %v2519, %v2673
        %2675 = vmatmul.bf16.gmra.mxu0 %v2377
        %v2676 = vpop.f32.mrf.mxu0
        %v2677 = vadd.f32 %v2519, %v2676
        %v2678 = vpop.f32.mrf.mxu0
        %v2679 = vadd.f32 %v2519, %v2678
        %2680 = vmatmul.bf16.gmra.mxu0 %v2379
        %v2681 = vpop.f32.mrf.mxu0
        %v2682 = vadd.f32 %v2519, %v2681
        %v2683 = vpop.f32.mrf.mxu0
        %v2684 = vadd.f32 %v2519, %v2683
        %2685 = vmatmul.bf16.gmra.mxu0 %v2381
        %v2686 = vpop.f32.mrf.mxu0
        %v2687 = vadd.f32 %v2519, %v2686
        %v2688 = vpop.f32.mrf.mxu0
        %v2689 = vadd.f32 %v2519, %v2688
        %2690 = vmatmul.bf16.gmra.mxu0 %v2383
        %v2691 = vpop.f32.mrf.mxu0
        %v2692 = vadd.f32 %v2519, %v2691
        %v2693 = vpop.f32.mrf.mxu0
        %v2694 = vadd.f32 %v2519, %v2693
        %2695 = vmatmul.bf16.gmra.mxu0 %v2385
        %v2696 = vpop.f32.mrf.mxu0
        %v2697 = vadd.f32 %v2519, %v2696
        %v2698 = vpop.f32.mrf.mxu0
        %v2699 = vadd.f32 %v2519, %v2698
        %2700 = vmatmul.bf16.gmra.mxu0 %v2387
        %v2701 = vpop.f32.mrf.mxu0
        %v2702 = vadd.f32 %v2519, %v2701
        %v2703 = vpop.f32.mrf.mxu0
        %v2704 = vadd.f32 %v2519, %v2703
        %2705 = vmatmul.bf16.gmra.mxu0 %v2389
        %v2706 = vpop.f32.mrf.mxu0
        %v2707 = vadd.f32 %v2519, %v2706
        %v2708 = vpop.f32.mrf.mxu0
        %v2709 = vadd.f32 %v2519, %v2708
        %2710 = vmatmul.bf16.gmra.mxu0 %v2391
        %v2711 = vpop.f32.mrf.mxu0
        %v2712 = vadd.f32 %v2519, %v2711
        %v2713 = vpop.f32.mrf.mxu0
        %v2714 = vadd.f32 %v2519, %v2713
        %2715 = vmatmul.bf16.gmra.mxu0 %v2393
        %v2716 = vpop.f32.mrf.mxu0
        %v2717 = vadd.f32 %v2519, %v2716
        %v2718 = vpop.f32.mrf.mxu0
        %v2719 = vadd.f32 %v2519, %v2718
        %2720 = vmatmul.bf16.gmra.mxu0 %v2395
        %v2721 = vpop.f32.mrf.mxu0
        %v2722 = vadd.f32 %v2519, %v2721
        %v2723 = vpop.f32.mrf.mxu0
        %v2724 = vadd.f32 %v2519, %v2723
        %2725 = vmatmul.bf16.gmra.mxu0 %v2397
        %v2726 = vpop.f32.mrf.mxu0
        %v2727 = vadd.f32 %v2519, %v2726
        %v2728 = vpop.f32.mrf.mxu0
        %v2729 = vadd.f32 %v2519, %v2728
        %2730 = vmatmul.bf16.gmra.mxu0 %v2399
        %v2731 = vpop.f32.mrf.mxu0
        %v2732 = vadd.f32 %v2519, %v2731
        %v2733 = vpop.f32.mrf.mxu0
        %v2734 = vadd.f32 %v2519, %v2733
        %2735 = vmatmul.bf16.gmra.mxu0 %v2401
        %v2736 = vpop.f32.mrf.mxu0
        %v2737 = vadd.f32 %v2519, %v2736
        %v2738 = vpop.f32.mrf.mxu0
        %v2739 = vadd.f32 %v2519, %v2738
        %2740 = vmatmul.bf16.gmra.mxu0 %v2403
        %v2741 = vpop.f32.mrf.mxu0
        %v2742 = vadd.f32 %v2519, %v2741
        %v2743 = vpop.f32.mrf.mxu0
        %v2744 = vadd.f32 %v2519, %v2743
        %2745 = vmatmul.bf16.gmra.mxu0 %v2405
        %v2746 = vpop.f32.mrf.mxu0
        %v2747 = vadd.f32 %v2519, %v2746
        %v2748 = vpop.f32.mrf.mxu0
        %v2749 = vadd.f32 %v2519, %v2748
        %2750 = vmatmul.bf16.gmra.mxu0 %v2407
        %v2751 = vpop.f32.mrf.mxu0
        %v2752 = vadd.f32 %v2519, %v2751
        %v2753 = vpop.f32.mrf.mxu0
        %v2754 = vadd.f32 %v2519, %v2753
        %2755 = vmatmul.bf16.gmra.mxu0 %v2409
        %v2756 = vpop.f32.mrf.mxu0
        %v2757 = vadd.f32 %v2519, %v2756
        %v2758 = vpop.f32.mrf.mxu0
        %v2759 = vadd.f32 %v2519, %v2758
        %2760 = vmatmul.bf16.gmra.mxu0 %v2411
        %v2761 = vpop.f32.mrf.mxu0
        %v2762 = vadd.f32 %v2519, %v2761
        %v2763 = vpop.f32.mrf.mxu0
        %v2764 = vadd.f32 %v2519, %v2763
        %2765 = vmatmul.bf16.gmra.mxu0 %v2413
        %v2766 = vpop.f32.mrf.mxu0
        %v2767 = vadd.f32 %v2519, %v2766
        %v2768 = vpop.f32.mrf.mxu0
        %v2769 = vadd.f32 %v2519, %v2768
        %2770 = vmatmul.bf16.gmra.mxu0 %v2415
        %v2771 = vpop.f32.mrf.mxu0
        %v2772 = vadd.f32 %v2519, %v2771
        %v2773 = vpop.f32.mrf.mxu0
        %v2774 = vadd.f32 %v2519, %v2773
        %2775 = vmatmul.bf16.gmra.mxu0 %v2417
        %v2776 = vpop.f32.mrf.mxu0
        %v2777 = vadd.f32 %v2519, %v2776
        %v2778 = vpop.f32.mrf.mxu0
        %v2779 = vadd.f32 %v2519, %v2778
        %2780 = vmatmul.bf16.gmra.mxu0 %v2419
        %v2781 = vpop.f32.mrf.mxu0
        %v2782 = vadd.f32 %v2519, %v2781
        %v2783 = vpop.f32.mrf.mxu0
        %v2784 = vadd.f32 %v2519, %v2783
        %2785 = vmatmul.bf16.gmra.mxu0 %v2421
        %v2786 = vpop.f32.mrf.mxu0
        %v2787 = vadd.f32 %v2519, %v2786
        %v2788 = vpop.f32.mrf.mxu0
        %v2789 = vadd.f32 %v2519, %v2788
        %2790 = vmatmul.bf16.gmra.mxu0 %v2423
        %v2791 = vpop.f32.mrf.mxu0
        %v2792 = vadd.f32 %v2519, %v2791
        %v2793 = vpop.f32.mrf.mxu0
        %v2794 = vadd.f32 %v2519, %v2793
        %2795 = vmatmul.bf16.gmra.mxu0 %v2425
        %v2796 = vpop.f32.mrf.mxu0
        %v2797 = vadd.f32 %v2519, %v2796
        %v2798 = vpop.f32.mrf.mxu0
        %v2799 = vadd.f32 %v2519, %v2798
        %2800 = vmatmul.bf16.gmra.mxu0 %v2427
        %v2801 = vpop.f32.mrf.mxu0
        %v2802 = vadd.f32 %v2519, %v2801
        %v2803 = vpop.f32.mrf.mxu0
        %v2804 = vadd.f32 %v2519, %v2803
        %2805 = vmatmul.bf16.gmra.mxu0 %v2429
        %v2806 = vpop.f32.mrf.mxu0
        %v2807 = vadd.f32 %v2519, %v2806
        %v2808 = vpop.f32.mrf.mxu0
        %v2809 = vadd.f32 %v2519, %v2808
        %2810 = vmatmul.bf16.gmra.mxu0 %v2431
        %v2811 = vpop.f32.mrf.mxu0
        %v2812 = vadd.f32 %v2519, %v2811
        %v2813 = vpop.f32.mrf.mxu0
        %v2814 = vadd.f32 %v2519, %v2813
        %2815 = vmatmul.bf16.gmra.mxu0 %v2433
        %v2816 = vpop.f32.mrf.mxu0
        %v2817 = vadd.f32 %v2519, %v2816
        %v2818 = vpop.f32.mrf.mxu0
        %v2819 = vadd.f32 %v2519, %v2818
        %2820 = vmatmul.bf16.gmra.mxu0 %v2435
        %v2821 = vpop.f32.mrf.mxu0
        %v2822 = vadd.f32 %v2519, %v2821
        %v2823 = vpop.f32.mrf.mxu0
        %v2824 = vadd.f32 %v2519, %v2823
        %2825 = vmatmul.bf16.gmra.mxu0 %v2437
        %v2826 = vpop.f32.mrf.mxu0
        %v2827 = vadd.f32 %v2519, %v2826
        %v2828 = vpop.f32.mrf.mxu0
        %v2829 = vadd.f32 %v2519, %v2828
        %2830 = vmatmul.bf16.gmra.mxu0 %v2439
        %v2831 = vpop.f32.mrf.mxu0
        %v2832 = vadd.f32 %v2519, %v2831
        %v2833 = vpop.f32.mrf.mxu0
        %v2834 = vadd.f32 %v2519, %v2833
        %2835 = vmatmul.bf16.gmra.mxu0 %v2441
        %v2836 = vpop.f32.mrf.mxu0
        %v2837 = vadd.f32 %v2519, %v2836
        %v2838 = vpop.f32.mrf.mxu0
        %v2839 = vadd.f32 %v2519, %v2838
        %2840 = vmatmul.bf16.gmra.mxu0 %v2443
        %v2841 = vpop.f32.mrf.mxu0
        %v2842 = vadd.f32 %v2519, %v2841
        %v2843 = vpop.f32.mrf.mxu0
        %v2844 = vadd.f32 %v2519, %v2843
        %2845 = vmatmul.bf16.gmra.mxu0 %v2445
        %v2846 = vpop.f32.mrf.mxu0
        %v2847 = vadd.f32 %v2519, %v2846
        %v2848 = vpop.f32.mrf.mxu0
        %v2849 = vadd.f32 %v2519, %v2848
        %2850 = vmatmul.bf16.gmra.mxu0 %v2447
        %v2851 = vpop.f32.mrf.mxu0
        %v2852 = vadd.f32 %v2519, %v2851
        %v2853 = vpop.f32.mrf.mxu0
        %v2854 = vadd.f32 %v2519, %v2853
        %2855 = vmatmul.bf16.gmra.mxu0 %v2449
        %v2856 = vpop.f32.mrf.mxu0
        %v2857 = vadd.f32 %v2519, %v2856
        %v2858 = vpop.f32.mrf.mxu0
        %v2859 = vadd.f32 %v2519, %v2858
        %2860 = vmatmul.bf16.gmra.mxu0 %v2451
        %v2861 = vpop.f32.mrf.mxu0
        %v2862 = vadd.f32 %v2519, %v2861
        %v2863 = vpop.f32.mrf.mxu0
        %v2864 = vadd.f32 %v2519, %v2863
        %2865 = vmatmul.bf16.gmra.mxu0 %v2453
        %v2866 = vpop.f32.mrf.mxu0
        %v2867 = vadd.f32 %v2519, %v2866
        %v2868 = vpop.f32.mrf.mxu0
        %v2869 = vadd.f32 %v2519, %v2868
        %2870 = vmatmul.bf16.gmra.mxu0 %v2455
        %v2871 = vpop.f32.mrf.mxu0
        %v2872 = vadd.f32 %v2519, %v2871
        %v2873 = vpop.f32.mrf.mxu0
        %v2874 = vadd.f32 %v2519, %v2873
        %2875 = vmatmul.bf16.gmra.mxu0 %v2457
        %v2876 = vpop.f32.mrf.mxu0
        %v2877 = vadd.f32 %v2519, %v2876
        %v2878 = vpop.f32.mrf.mxu0
        %v2879 = vadd.f32 %v2519, %v2878
        %2880 = vmatmul.bf16.gmra.mxu0 %v2459
        %v2881 = vpop.f32.mrf.mxu0
        %v2882 = vadd.f32 %v2519, %v2881
        %v2883 = vpop.f32.mrf.mxu0
        %v2884 = vadd.f32 %v2519, %v2883
        %2885 = vmatmul.bf16.gmra.mxu0 %v2461
        %v2886 = vpop.f32.mrf.mxu0
        %v2887 = vadd.f32 %v2519, %v2886
        %v2888 = vpop.f32.mrf.mxu0
        %v2889 = vadd.f32 %v2519, %v2888
        %2890 = vmatmul.bf16.gmra.mxu0 %v2463
        %v2891 = vpop.f32.mrf.mxu0
        %v2892 = vadd.f32 %v2519, %v2891
        %v2893 = vpop.f32.mrf.mxu0
        %v2894 = vadd.f32 %v2519, %v2893
        %2895 = vmatmul.bf16.gmra.mxu0 %v2465
        %v2896 = vpop.f32.mrf.mxu0
        %v2897 = vadd.f32 %v2519, %v2896
        %v2898 = vpop.f32.mrf.mxu0
        %v2899 = vadd.f32 %v2519, %v2898
        %2900 = vmatmul.bf16.gmra.mxu0 %v2467
        %v2901 = vpop.f32.mrf.mxu0
        %v2902 = vadd.f32 %v2519, %v2901
        %v2903 = vpop.f32.mrf.mxu0
        %v2904 = vadd.f32 %v2519, %v2903
        %2905 = vmatmul.bf16.gmra.mxu0 %v2469
        %v2906 = vpop.f32.mrf.mxu0
        %v2907 = vadd.f32 %v2519, %v2906
        %v2908 = vpop.f32.mrf.mxu0
        %v2909 = vadd.f32 %v2519, %v2908
        %2910 = vmatmul.bf16.gmra.mxu0 %v2471
        %v2911 = vpop.f32.mrf.mxu0
        %v2912 = vadd.f32 %v2519, %v2911
        %v2913 = vpop.f32.mrf.mxu0
        %v2914 = vadd.f32 %v2519, %v2913
        %2915 = vmatmul.bf16.gmra.mxu0 %v2473
        %v2916 = vpop.f32.mrf.mxu0
        %v2917 = vadd.f32 %v2519, %v2916
        %v2918 = vpop.f32.mrf.mxu0
        %v2919 = vadd.f32 %v2519, %v2918
        %2920 = vmatmul.bf16.gmra.mxu0 %v2475
        %v2921 = vpop.f32.mrf.mxu0
        %v2922 = vadd.f32 %v2519, %v2921
        %v2923 = vpop.f32.mrf.mxu0
        %v2924 = vadd.f32 %v2519, %v2923
        %2925 = vmatmul.bf16.gmra.mxu0 %v2477
        %v2926 = vpop.f32.mrf.mxu0
        %v2927 = vadd.f32 %v2519, %v2926
        %v2928 = vpop.f32.mrf.mxu0
        %v2929 = vadd.f32 %v2519, %v2928
        %2930 = vmatmul.bf16.gmra.mxu0 %v2479
        %v2931 = vpop.f32.mrf.mxu0
        %v2932 = vadd.f32 %v2519, %v2931
        %v2933 = vpop.f32.mrf.mxu0
        %v2934 = vadd.f32 %v2519, %v2933
        %2935 = vmatmul.bf16.gmra.mxu0 %v2481
        %v2936 = vpop.f32.mrf.mxu0
        %v2937 = vadd.f32 %v2519, %v2936
        %v2938 = vpop.f32.mrf.mxu0
        %v2939 = vadd.f32 %v2519, %v2938
        %2940 = vmatmul.bf16.gmra.mxu0 %v2483
        %v2941 = vpop.f32.mrf.mxu0
        %v2942 = vadd.f32 %v2519, %v2941
        %v2943 = vpop.f32.mrf.mxu0
        %v2944 = vadd.f32 %v2519, %v2943
        %2945 = vdwg.mxu0
        %2946 = vmatpush.bf16.msra.mxu0 %v2600
        %2947 = vmatpush.bf16.msra.mxu0 %v2599
        %2948 = vmatpush.bf16.msra.mxu0 %v2598
        %2949 = vmatpush.bf16.msra.mxu0 %v2597
        %2950 = vmatpush.bf16.msra.mxu0 %v2596
        %2951 = vmatpush.bf16.msra.mxu0 %v2595
        %2952 = vmatpush.bf16.msra.mxu0 %v2594
        %2953 = vmatpush.bf16.msra.mxu0 %v2593
        %2954 = vmatmul.bf16.gmra.mxu0 %v2358
        %v2955 = vpop.f32.mrf.mxu0
        %v2956 = vadd.f32 %v2627, %v2955
        %v2957 = vpop.f32.mrf.mxu0
        %v2958 = vadd.f32 %v2629, %v2957
        %2959 = vmatmul.bf16.gmra.mxu0 %v2360
        %v2960 = vpop.f32.mrf.mxu0
        %v2961 = vadd.f32 %v2632, %v2960
        %v2962 = vpop.f32.mrf.mxu0
        %v2963 = vadd.f32 %v2634, %v2962
        %2964 = vmatmul.bf16.gmra.mxu0 %v2362
        %v2965 = vpop.f32.mrf.mxu0
        %v2966 = vadd.f32 %v2637, %v2965
        %v2967 = vpop.f32.mrf.mxu0
        %v2968 = vadd.f32 %v2639, %v2967
        %2969 = vmatmul.bf16.gmra.mxu0 %v2364
        %v2970 = vpop.f32.mrf.mxu0
        %v2971 = vadd.f32 %v2642, %v2970
        %v2972 = vpop.f32.mrf.mxu0
        %v2973 = vadd.f32 %v2644, %v2972
        %2974 = vmatmul.bf16.gmra.mxu0 %v2366
        %v2975 = vpop.f32.mrf.mxu0
        %v2976 = vadd.f32 %v2647, %v2975
        %v2977 = vpop.f32.mrf.mxu0
        %v2978 = vadd.f32 %v2649, %v2977
        %2979 = vmatmul.bf16.gmra.mxu0 %v2368
        %v2980 = vpop.f32.mrf.mxu0
        %v2981 = vadd.f32 %v2652, %v2980
        %v2982 = vpop.f32.mrf.mxu0
        %v2983 = vadd.f32 %v2654, %v2982
        %2984 = vmatmul.bf16.gmra.mxu0 %v2370
        %v2985 = vpop.f32.mrf.mxu0
        %v2986 = vadd.f32 %v2657, %v2985
        %v2987 = vpop.f32.mrf.mxu0
        %v2988 = vadd.f32 %v2659, %v2987
        %2989 = vmatmul.bf16.gmra.mxu0 %v2372
        %v2990 = vpop.f32.mrf.mxu0
        %v2991 = vadd.f32 %v2662, %v2990
        %v2992 = vpop.f32.mrf.mxu0
        %v2993 = vadd.f32 %v2664, %v2992
        %2994 = vmatmul.bf16.gmra.mxu0 %v2374
        %v2995 = vpop.f32.mrf.mxu0
        %v2996 = vadd.f32 %v2667, %v2995
        %v2997 = vpop.f32.mrf.mxu0
        %v2998 = vadd.f32 %v2669, %v2997
        %2999 = vmatmul.bf16.gmra.mxu0 %v2376
        %v3000 = vpop.f32.mrf.mxu0
        %v3001 = vadd.f32 %v2672, %v3000
        %v3002 = vpop.f32.mrf.mxu0
        %v3003 = vadd.f32 %v2674, %v3002
        %3004 = vmatmul.bf16.gmra.mxu0 %v2378
        %v3005 = vpop.f32.mrf.mxu0
        %v3006 = vadd.f32 %v2677, %v3005
        %v3007 = vpop.f32.mrf.mxu0
        %v3008 = vadd.f32 %v2679, %v3007
        %3009 = vmatmul.bf16.gmra.mxu0 %v2380
        %v3010 = vpop.f32.mrf.mxu0
        %v3011 = vadd.f32 %v2682, %v3010
        %v3012 = vpop.f32.mrf.mxu0
        %v3013 = vadd.f32 %v2684, %v3012
        %3014 = vmatmul.bf16.gmra.mxu0 %v2382
        %v3015 = vpop.f32.mrf.mxu0
        %v3016 = vadd.f32 %v2687, %v3015
        %v3017 = vpop.f32.mrf.mxu0
        %v3018 = vadd.f32 %v2689, %v3017
        %3019 = vmatmul.bf16.gmra.mxu0 %v2384
        %v3020 = vpop.f32.mrf.mxu0
        %v3021 = vadd.f32 %v2692, %v3020
        %v3022 = vpop.f32.mrf.mxu0
        %v3023 = vadd.f32 %v2694, %v3022
        %3024 = vmatmul.bf16.gmra.mxu0 %v2386
        %v3025 = vpop.f32.mrf.mxu0
        %v3026 = vadd.f32 %v2697, %v3025
        %v3027 = vpop.f32.mrf.mxu0
        %v3028 = vadd.f32 %v2699, %v3027
        %3029 = vmatmul.bf16.gmra.mxu0 %v2388
        %v3030 = vpop.f32.mrf.mxu0
        %v3031 = vadd.f32 %v2702, %v3030
        %v3032 = vpop.f32.mrf.mxu0
        %v3033 = vadd.f32 %v2704, %v3032
        %3034 = vmatmul.bf16.gmra.mxu0 %v2390
        %v3035 = vpop.f32.mrf.mxu0
        %v3036 = vadd.f32 %v2707, %v3035
        %v3037 = vpop.f32.mrf.mxu0
        %v3038 = vadd.f32 %v2709, %v3037
        %3039 = vmatmul.bf16.gmra.mxu0 %v2392
        %v3040 = vpop.f32.mrf.mxu0
        %v3041 = vadd.f32 %v2712, %v3040
        %v3042 = vpop.f32.mrf.mxu0
        %v3043 = vadd.f32 %v2714, %v3042
        %3044 = vmatmul.bf16.gmra.mxu0 %v2394
        %v3045 = vpop.f32.mrf.mxu0
        %v3046 = vadd.f32 %v2717, %v3045
        %v3047 = vpop.f32.mrf.mxu0
        %v3048 = vadd.f32 %v2719, %v3047
        %3049 = vmatmul.bf16.gmra.mxu0 %v2396
        %v3050 = vpop.f32.mrf.mxu0
        %v3051 = vadd.f32 %v2722, %v3050
        %v3052 = vpop.f32.mrf.mxu0
        %v3053 = vadd.f32 %v2724, %v3052
        %3054 = vmatmul.bf16.gmra.mxu0 %v2398
        %v3055 = vpop.f32.mrf.mxu0
        %v3056 = vadd.f32 %v2727, %v3055
        %v3057 = vpop.f32.mrf.mxu0
        %v3058 = vadd.f32 %v2729, %v3057
        %3059 = vmatmul.bf16.gmra.mxu0 %v2400
        %v3060 = vpop.f32.mrf.mxu0
        %v3061 = vadd.f32 %v2732, %v3060
        %v3062 = vpop.f32.mrf.mxu0
        %v3063 = vadd.f32 %v2734, %v3062
        %3064 = vmatmul.bf16.gmra.mxu0 %v2402
        %v3065 = vpop.f32.mrf.mxu0
        %v3066 = vadd.f32 %v2737, %v3065
        %v3067 = vpop.f32.mrf.mxu0
        %v3068 = vadd.f32 %v2739, %v3067
        %3069 = vmatmul.bf16.gmra.mxu0 %v2404
        %v3070 = vpop.f32.mrf.mxu0
        %v3071 = vadd.f32 %v2742, %v3070
        %v3072 = vpop.f32.mrf.mxu0
        %v3073 = vadd.f32 %v2744, %v3072
        %3074 = vmatmul.bf16.gmra.mxu0 %v2406
        %v3075 = vpop.f32.mrf.mxu0
        %v3076 = vadd.f32 %v2747, %v3075
        %v3077 = vpop.f32.mrf.mxu0
        %v3078 = vadd.f32 %v2749, %v3077
        %3079 = vmatmul.bf16.gmra.mxu0 %v2408
        %v3080 = vpop.f32.mrf.mxu0
        %v3081 = vadd.f32 %v2752, %v3080
        %v3082 = vpop.f32.mrf.mxu0
        %v3083 = vadd.f32 %v2754, %v3082
        %3084 = vmatmul.bf16.gmra.mxu0 %v2410
        %v3085 = vpop.f32.mrf.mxu0
        %v3086 = vadd.f32 %v2757, %v3085
        %v3087 = vpop.f32.mrf.mxu0
        %v3088 = vadd.f32 %v2759, %v3087
        %3089 = vmatmul.bf16.gmra.mxu0 %v2412
        %v3090 = vpop.f32.mrf.mxu0
        %v3091 = vadd.f32 %v2762, %v3090
        %v3092 = vpop.f32.mrf.mxu0
        %v3093 = vadd.f32 %v2764, %v3092
        %3094 = vmatmul.bf16.gmra.mxu0 %v2414
        %v3095 = vpop.f32.mrf.mxu0
        %v3096 = vadd.f32 %v2767, %v3095
        %v3097 = vpop.f32.mrf.mxu0
        %v3098 = vadd.f32 %v2769, %v3097
        %3099 = vmatmul.bf16.gmra.mxu0 %v2416
        %v3100 = vpop.f32.mrf.mxu0
        %v3101 = vadd.f32 %v2772, %v3100
        %v3102 = vpop.f32.mrf.mxu0
        %v3103 = vadd.f32 %v2774, %v3102
        %3104 = vmatmul.bf16.gmra.mxu0 %v2418
        %v3105 = vpop.f32.mrf.mxu0
        %v3106 = vadd.f32 %v2777, %v3105
        %v3107 = vpop.f32.mrf.mxu0
        %v3108 = vadd.f32 %v2779, %v3107
        %3109 = vmatmul.bf16.gmra.mxu0 %v2420
        %v3110 = vpop.f32.mrf.mxu0
        %v3111 = vadd.f32 %v2782, %v3110
        %v3112 = vpop.f32.mrf.mxu0
        %v3113 = vadd.f32 %v2784, %v3112
        %3114 = vmatmul.bf16.gmra.mxu0 %v2422
        %v3115 = vpop.f32.mrf.mxu0
        %v3116 = vadd.f32 %v2787, %v3115
        %v3117 = vpop.f32.mrf.mxu0
        %v3118 = vadd.f32 %v2789, %v3117
        %3119 = vmatmul.bf16.gmra.mxu0 %v2424
        %v3120 = vpop.f32.mrf.mxu0
        %v3121 = vadd.f32 %v2792, %v3120
        %v3122 = vpop.f32.mrf.mxu0
        %v3123 = vadd.f32 %v2794, %v3122
        %3124 = vmatmul.bf16.gmra.mxu0 %v2426
        %v3125 = vpop.f32.mrf.mxu0
        %v3126 = vadd.f32 %v2797, %v3125
        %v3127 = vpop.f32.mrf.mxu0
        %v3128 = vadd.f32 %v2799, %v3127
        %3129 = vmatmul.bf16.gmra.mxu0 %v2428
        %v3130 = vpop.f32.mrf.mxu0
        %v3131 = vadd.f32 %v2802, %v3130
        %v3132 = vpop.f32.mrf.mxu0
        %v3133 = vadd.f32 %v2804, %v3132
        %3134 = vmatmul.bf16.gmra.mxu0 %v2430
        %v3135 = vpop.f32.mrf.mxu0
        %v3136 = vadd.f32 %v2807, %v3135
        %v3137 = vpop.f32.mrf.mxu0
        %v3138 = vadd.f32 %v2809, %v3137
        %3139 = vmatmul.bf16.gmra.mxu0 %v2432
        %v3140 = vpop.f32.mrf.mxu0
        %v3141 = vadd.f32 %v2812, %v3140
        %v3142 = vpop.f32.mrf.mxu0
        %v3143 = vadd.f32 %v2814, %v3142
        %3144 = vmatmul.bf16.gmra.mxu0 %v2434
        %v3145 = vpop.f32.mrf.mxu0
        %v3146 = vadd.f32 %v2817, %v3145
        %v3147 = vpop.f32.mrf.mxu0
        %v3148 = vadd.f32 %v2819, %v3147
        %3149 = vmatmul.bf16.gmra.mxu0 %v2436
        %v3150 = vpop.f32.mrf.mxu0
        %v3151 = vadd.f32 %v2822, %v3150
        %v3152 = vpop.f32.mrf.mxu0
        %v3153 = vadd.f32 %v2824, %v3152
        %3154 = vmatmul.bf16.gmra.mxu0 %v2438
        %v3155 = vpop.f32.mrf.mxu0
        %v3156 = vadd.f32 %v2827, %v3155
        %v3157 = vpop.f32.mrf.mxu0
        %v3158 = vadd.f32 %v2829, %v3157
        %3159 = vmatmul.bf16.gmra.mxu0 %v2440
        %v3160 = vpop.f32.mrf.mxu0
        %v3161 = vadd.f32 %v2832, %v3160
        %v3162 = vpop.f32.mrf.mxu0
        %v3163 = vadd.f32 %v2834, %v3162
        %3164 = vmatmul.bf16.gmra.mxu0 %v2442
        %v3165 = vpop.f32.mrf.mxu0
        %v3166 = vadd.f32 %v2837, %v3165
        %v3167 = vpop.f32.mrf.mxu0
        %v3168 = vadd.f32 %v2839, %v3167
        %3169 = vmatmul.bf16.gmra.mxu0 %v2444
        %v3170 = vpop.f32.mrf.mxu0
        %v3171 = vadd.f32 %v2842, %v3170
        %v3172 = vpop.f32.mrf.mxu0
        %v3173 = vadd.f32 %v2844, %v3172
        %3174 = vmatmul.bf16.gmra.mxu0 %v2446
        %v3175 = vpop.f32.mrf.mxu0
        %v3176 = vadd.f32 %v2847, %v3175
        %v3177 = vpop.f32.mrf.mxu0
        %v3178 = vadd.f32 %v2849, %v3177
        %3179 = vmatmul.bf16.gmra.mxu0 %v2448
        %v3180 = vpop.f32.mrf.mxu0
        %v3181 = vadd.f32 %v2852, %v3180
        %v3182 = vpop.f32.mrf.mxu0
        %v3183 = vadd.f32 %v2854, %v3182
        %3184 = vmatmul.bf16.gmra.mxu0 %v2450
        %v3185 = vpop.f32.mrf.mxu0
        %v3186 = vadd.f32 %v2857, %v3185
        %v3187 = vpop.f32.mrf.mxu0
        %v3188 = vadd.f32 %v2859, %v3187
        %3189 = vmatmul.bf16.gmra.mxu0 %v2452
        %v3190 = vpop.f32.mrf.mxu0
        %v3191 = vadd.f32 %v2862, %v3190
        %v3192 = vpop.f32.mrf.mxu0
        %v3193 = vadd.f32 %v2864, %v3192
        %3194 = vmatmul.bf16.gmra.mxu0 %v2454
        %v3195 = vpop.f32.mrf.mxu0
        %v3196 = vadd.f32 %v2867, %v3195
        %v3197 = vpop.f32.mrf.mxu0
        %v3198 = vadd.f32 %v2869, %v3197
        %3199 = vmatmul.bf16.gmra.mxu0 %v2456
        %v3200 = vpop.f32.mrf.mxu0
        %v3201 = vadd.f32 %v2872, %v3200
        %v3202 = vpop.f32.mrf.mxu0
        %v3203 = vadd.f32 %v2874, %v3202
        %3204 = vmatmul.bf16.gmra.mxu0 %v2458
        %v3205 = vpop.f32.mrf.mxu0
        %v3206 = vadd.f32 %v2877, %v3205
        %v3207 = vpop.f32.mrf.mxu0
        %v3208 = vadd.f32 %v2879, %v3207
        %3209 = vmatmul.bf16.gmra.mxu0 %v2460
        %v3210 = vpop.f32.mrf.mxu0
        %v3211 = vadd.f32 %v2882, %v3210
        %v3212 = vpop.f32.mrf.mxu0
        %v3213 = vadd.f32 %v2884, %v3212
        %3214 = vmatmul.bf16.gmra.mxu0 %v2462
        %v3215 = vpop.f32.mrf.mxu0
        %v3216 = vadd.f32 %v2887, %v3215
        %v3217 = vpop.f32.mrf.mxu0
        %v3218 = vadd.f32 %v2889, %v3217
        %3219 = vmatmul.bf16.gmra.mxu0 %v2464
        %v3220 = vpop.f32.mrf.mxu0
        %v3221 = vadd.f32 %v2892, %v3220
        %v3222 = vpop.f32.mrf.mxu0
        %v3223 = vadd.f32 %v2894, %v3222
        %3224 = vmatmul.bf16.gmra.mxu0 %v2466
        %v3225 = vpop.f32.mrf.mxu0
        %v3226 = vadd.f32 %v2897, %v3225
        %v3227 = vpop.f32.mrf.mxu0
        %v3228 = vadd.f32 %v2899, %v3227
        %3229 = vmatmul.bf16.gmra.mxu0 %v2468
        %v3230 = vpop.f32.mrf.mxu0
        %v3231 = vadd.f32 %v2902, %v3230
        %v3232 = vpop.f32.mrf.mxu0
        %v3233 = vadd.f32 %v2904, %v3232
        %3234 = vmatmul.bf16.gmra.mxu0 %v2470
        %v3235 = vpop.f32.mrf.mxu0
        %v3236 = vadd.f32 %v2907, %v3235
        %v3237 = vpop.f32.mrf.mxu0
        %v3238 = vadd.f32 %v2909, %v3237
        %3239 = vmatmul.bf16.gmra.mxu0 %v2472
        %v3240 = vpop.f32.mrf.mxu0
        %v3241 = vadd.f32 %v2912, %v3240
        %v3242 = vpop.f32.mrf.mxu0
        %v3243 = vadd.f32 %v2914, %v3242
        %3244 = vmatmul.bf16.gmra.mxu0 %v2474
        %v3245 = vpop.f32.mrf.mxu0
        %v3246 = vadd.f32 %v2917, %v3245
        %v3247 = vpop.f32.mrf.mxu0
        %v3248 = vadd.f32 %v2919, %v3247
        %3249 = vmatmul.bf16.gmra.mxu0 %v2476
        %v3250 = vpop.f32.mrf.mxu0
        %v3251 = vadd.f32 %v2922, %v3250
        %v3252 = vpop.f32.mrf.mxu0
        %v3253 = vadd.f32 %v2924, %v3252
        %3254 = vmatmul.bf16.gmra.mxu0 %v2478
        %v3255 = vpop.f32.mrf.mxu0
        %v3256 = vadd.f32 %v2927, %v3255
        %v3257 = vpop.f32.mrf.mxu0
        %v3258 = vadd.f32 %v2929, %v3257
        %3259 = vmatmul.bf16.gmra.mxu0 %v2480
        %v3260 = vpop.f32.mrf.mxu0
        %v3261 = vadd.f32 %v2932, %v3260
        %v3262 = vpop.f32.mrf.mxu0
        %v3263 = vadd.f32 %v2934, %v3262
        %3264 = vmatmul.bf16.gmra.mxu0 %v2482
        %v3265 = vpop.f32.mrf.mxu0
        %v3266 = vadd.f32 %v2937, %v3265
        %v3267 = vpop.f32.mrf.mxu0
        %v3268 = vadd.f32 %v2939, %v3267
        %3269 = vmatmul.bf16.gmra.mxu0 %v2484
        %v3270 = vpop.f32.mrf.mxu0
        %v3271 = vadd.f32 %v2942, %v3270
        %v3272 = vpop.f32.mrf.mxu0
        %v3273 = vadd.f32 %v2944, %v3272
        %3274 = vdwg.mxu0
        %v3275 = vmax.f32 %v2956, 0.0
        %v3276 = vmax.f32 %v2958, 0.0
        %v3277 = vmax.f32 %v2961, 0.0
        %v3278 = vmax.f32 %v2963, 0.0
        %v3279 = vmax.f32 %v2966, 0.0
        %v3280 = vmax.f32 %v2968, 0.0
        %v3281 = vmax.f32 %v2971, 0.0
        %v3282 = vmax.f32 %v2973, 0.0
        %v3283 = vmax.f32 %v2976, 0.0
        %v3284 = vmax.f32 %v2978, 0.0
        %v3285 = vmax.f32 %v2981, 0.0
        %v3286 = vmax.f32 %v2983, 0.0
        %v3287 = vmax.f32 %v2986, 0.0
        %v3288 = vmax.f32 %v2988, 0.0
        %v3289 = vmax.f32 %v2991, 0.0
        %v3290 = vmax.f32 %v2993, 0.0
        %v3291 = vmax.f32 %v2996, 0.0
        %v3292 = vmax.f32 %v2998, 0.0
        %v3293 = vmax.f32 %v3001, 0.0
        %v3294 = vmax.f32 %v3003, 0.0
        %v3295 = vmax.f32 %v3006, 0.0
        %v3296 = vmax.f32 %v3008, 0.0
        %v3297 = vmax.f32 %v3011, 0.0
        %v3298 = vmax.f32 %v3013, 0.0
        %v3299 = vmax.f32 %v3016, 0.0
        %v3300 = vmax.f32 %v3018, 0.0
        %v3301 = vmax.f32 %v3021, 0.0
        %v3302 = vmax.f32 %v3023, 0.0
        %v3303 = vmax.f32 %v3026, 0.0
        %v3304 = vmax.f32 %v3028, 0.0
        %v3305 = vmax.f32 %v3031, 0.0
        %v3306 = vmax.f32 %v3033, 0.0
        %v3307 = vmax.f32 %v3036, 0.0
        %v3308 = vmax.f32 %v3038, 0.0
        %v3309 = vmax.f32 %v3041, 0.0
        %v3310 = vmax.f32 %v3043, 0.0
        %v3311 = vmax.f32 %v3046, 0.0
        %v3312 = vmax.f32 %v3048, 0.0
        %v3313 = vmax.f32 %v3051, 0.0
        %v3314 = vmax.f32 %v3053, 0.0
        %v3315 = vmax.f32 %v3056, 0.0
        %v3316 = vmax.f32 %v3058, 0.0
        %v3317 = vmax.f32 %v3061, 0.0
        %v3318 = vmax.f32 %v3063, 0.0
        %v3319 = vmax.f32 %v3066, 0.0
        %v3320 = vmax.f32 %v3068, 0.0
        %v3321 = vmax.f32 %v3071, 0.0
        %v3322 = vmax.f32 %v3073, 0.0
        %v3323 = vmax.f32 %v3076, 0.0
        %v3324 = vmax.f32 %v3078, 0.0
        %v3325 = vmax.f32 %v3081, 0.0
        %v3326 = vmax.f32 %v3083, 0.0
        %v3327 = vmax.f32 %v3086, 0.0
        %v3328 = vmax.f32 %v3088, 0.0
        %v3329 = vmax.f32 %v3091, 0.0
        %v3330 = vmax.f32 %v3093, 0.0
        %v3331 = vmax.f32 %v3096, 0.0
        %v3332 = vmax.f32 %v3098, 0.0
        %v3333 = vmax.f32 %v3101, 0.0
        %v3334 = vmax.f32 %v3103, 0.0
        %v3335 = vmax.f32 %v3106, 0.0
        %v3336 = vmax.f32 %v3108, 0.0
        %v3337 = vmax.f32 %v3111, 0.0
        %v3338 = vmax.f32 %v3113, 0.0
        %v3339 = vmax.f32 %v3116, 0.0
        %v3340 = vmax.f32 %v3118, 0.0
        %v3341 = vmax.f32 %v3121, 0.0
        %v3342 = vmax.f32 %v3123, 0.0
        %v3343 = vmax.f32 %v3126, 0.0
        %v3344 = vmax.f32 %v3128, 0.0
        %v3345 = vmax.f32 %v3131, 0.0
        %v3346 = vmax.f32 %v3133, 0.0
        %v3347 = vmax.f32 %v3136, 0.0
        %v3348 = vmax.f32 %v3138, 0.0
        %v3349 = vmax.f32 %v3141, 0.0
        %v3350 = vmax.f32 %v3143, 0.0
        %v3351 = vmax.f32 %v3146, 0.0
        %v3352 = vmax.f32 %v3148, 0.0
        %v3353 = vmax.f32 %v3151, 0.0
        %v3354 = vmax.f32 %v3153, 0.0
        %v3355 = vmax.f32 %v3156, 0.0
        %v3356 = vmax.f32 %v3158, 0.0
        %v3357 = vmax.f32 %v3161, 0.0
        %v3358 = vmax.f32 %v3163, 0.0
        %v3359 = vmax.f32 %v3166, 0.0
        %v3360 = vmax.f32 %v3168, 0.0
        %v3361 = vmax.f32 %v3171, 0.0
        %v3362 = vmax.f32 %v3173, 0.0
        %v3363 = vmax.f32 %v3176, 0.0
        %v3364 = vmax.f32 %v3178, 0.0
        %v3365 = vmax.f32 %v3181, 0.0
        %v3366 = vmax.f32 %v3183, 0.0
        %v3367 = vmax.f32 %v3186, 0.0
        %v3368 = vmax.f32 %v3188, 0.0
        %v3369 = vmax.f32 %v3191, 0.0
        %v3370 = vmax.f32 %v3193, 0.0
        %v3371 = vmax.f32 %v3196, 0.0
        %v3372 = vmax.f32 %v3198, 0.0
        %v3373 = vmax.f32 %v3201, 0.0
        %v3374 = vmax.f32 %v3203, 0.0
        %v3375 = vmax.f32 %v3206, 0.0
        %v3376 = vmax.f32 %v3208, 0.0
        %v3377 = vmax.f32 %v3211, 0.0
        %v3378 = vmax.f32 %v3213, 0.0
        %v3379 = vmax.f32 %v3216, 0.0
        %v3380 = vmax.f32 %v3218, 0.0
        %v3381 = vmax.f32 %v3221, 0.0
        %v3382 = vmax.f32 %v3223, 0.0
        %v3383 = vmax.f32 %v3226, 0.0
        %v3384 = vmax.f32 %v3228, 0.0
        %v3385 = vmax.f32 %v3231, 0.0
        %v3386 = vmax.f32 %v3233, 0.0
        %v3387 = vmax.f32 %v3236, 0.0
        %v3388 = vmax.f32 %v3238, 0.0
        %v3389 = vmax.f32 %v3241, 0.0
        %v3390 = vmax.f32 %v3243, 0.0
        %v3391 = vmax.f32 %v3246, 0.0
        %v3392 = vmax.f32 %v3248, 0.0
        %v3393 = vmax.f32 %v3251, 0.0
        %v3394 = vmax.f32 %v3253, 0.0
        %v3395 = vmax.f32 %v3256, 0.0
        %v3396 = vmax.f32 %v3258, 0.0
        %v3397 = vmax.f32 %v3261, 0.0
        %v3398 = vmax.f32 %v3263, 0.0
        %v3399 = vmax.f32 %v3266, 0.0
        %v3400 = vmax.f32 %v3268, 0.0
        %v3401 = vmax.f32 %v3271, 0.0
        %v3402 = vmax.f32 %v3273, 0.0
        %v3403 = vpack.c.bf16 %v3276, %v3275
        %v3404 = vpack.c.bf16 %v3278, %v3277
        %v3405 = vpack.c.bf16 %v3280, %v3279
        %v3406 = vpack.c.bf16 %v3282, %v3281
        %v3407 = vpack.c.bf16 %v3284, %v3283
        %v3408 = vpack.c.bf16 %v3286, %v3285
        %v3409 = vpack.c.bf16 %v3288, %v3287
        %v3410 = vpack.c.bf16 %v3290, %v3289
        %v3411 = vpack.c.bf16 %v3292, %v3291
        %v3412 = vpack.c.bf16 %v3294, %v3293
        %v3413 = vpack.c.bf16 %v3296, %v3295
        %v3414 = vpack.c.bf16 %v3298, %v3297
        %v3415 = vpack.c.bf16 %v3300, %v3299
        %v3416 = vpack.c.bf16 %v3302, %v3301
        %v3417 = vpack.c.bf16 %v3304, %v3303
        %v3418 = vpack.c.bf16 %v3306, %v3305
        %v3419 = vpack.c.bf16 %v3308, %v3307
        %v3420 = vpack.c.bf16 %v3310, %v3309
        %v3421 = vpack.c.bf16 %v3312, %v3311
        %v3422 = vpack.c.bf16 %v3314, %v3313
        %v3423 = vpack.c.bf16 %v3316, %v3315
        %v3424 = vpack.c.bf16 %v3318, %v3317
        %v3425 = vpack.c.bf16 %v3320, %v3319
        %v3426 = vpack.c.bf16 %v3322, %v3321
        %v3427 = vpack.c.bf16 %v3324, %v3323
        %v3428 = vpack.c.bf16 %v3326, %v3325
        %v3429 = vpack.c.bf16 %v3328, %v3327
        %v3430 = vpack.c.bf16 %v3330, %v3329
        %v3431 = vpack.c.bf16 %v3332, %v3331
        %v3432 = vpack.c.bf16 %v3334, %v3333
        %v3433 = vpack.c.bf16 %v3336, %v3335
        %v3434 = vpack.c.bf16 %v3338, %v3337
        %v3435 = vpack.c.bf16 %v3340, %v3339
        %v3436 = vpack.c.bf16 %v3342, %v3341
        %v3437 = vpack.c.bf16 %v3344, %v3343
        %v3438 = vpack.c.bf16 %v3346, %v3345
        %v3439 = vpack.c.bf16 %v3348, %v3347
        %v3440 = vpack.c.bf16 %v3350, %v3349
        %v3441 = vpack.c.bf16 %v3352, %v3351
        %v3442 = vpack.c.bf16 %v3354, %v3353
        %v3443 = vpack.c.bf16 %v3356, %v3355
        %v3444 = vpack.c.bf16 %v3358, %v3357
        %v3445 = vpack.c.bf16 %v3360, %v3359
        %v3446 = vpack.c.bf16 %v3362, %v3361
        %v3447 = vpack.c.bf16 %v3364, %v3363
        %v3448 = vpack.c.bf16 %v3366, %v3365
        %v3449 = vpack.c.bf16 %v3368, %v3367
        %v3450 = vpack.c.bf16 %v3370, %v3369
        %v3451 = vpack.c.bf16 %v3372, %v3371
        %v3452 = vpack.c.bf16 %v3374, %v3373
        %v3453 = vpack.c.bf16 %v3376, %v3375
        %v3454 = vpack.c.bf16 %v3378, %v3377
        %v3455 = vpack.c.bf16 %v3380, %v3379
        %v3456 = vpack.c.bf16 %v3382, %v3381
        %v3457 = vpack.c.bf16 %v3384, %v3383
        %v3458 = vpack.c.bf16 %v3386, %v3385
        %v3459 = vpack.c.bf16 %v3388, %v3387
        %v3460 = vpack.c.bf16 %v3390, %v3389
        %v3461 = vpack.c.bf16 %v3392, %v3391
        %v3462 = vpack.c.bf16 %v3394, %v3393
        %v3463 = vpack.c.bf16 %v3396, %v3395
        %v3464 = vpack.c.bf16 %v3398, %v3397
        %v3465 = vpack.c.bf16 %v3400, %v3399
        %v3466 = vpack.c.bf16 %v3402, %v3401
        %v3467 = vld [vmem:[#allocation7] sm:$0xf]
        %v3468 = vld [vmem:[#allocation7 + $0x4] sm:$0xf]
        %v3469 = vld [vmem:[#allocation7 + $0x8] sm:$0xf]
        %v3470 = vld [vmem:[#allocation7 + $0xc] sm:$0xf]
        %v3471 = vld [vmem:[#allocation7 + $0x10] sm:$0xf]
        %v3472 = vld [vmem:[#allocation7 + $0x14] sm:$0xf]
        %v3473 = vld [vmem:[#allocation7 + $0x18] sm:$0xf]
        %v3474 = vld [vmem:[#allocation7 + $0x1c] sm:$0xf]
        %v3475 = vld [vmem:[#allocation7 + $0x20] sm:$0xf]
        %v3476 = vld [vmem:[#allocation7 + $0x24] sm:$0xf]
        %v3477 = vld [vmem:[#allocation7 + $0x28] sm:$0xf]
        %v3478 = vld [vmem:[#allocation7 + $0x2c] sm:$0xf]
        %v3479 = vld [vmem:[#allocation7 + $0x30] sm:$0xf]
        %v3480 = vld [vmem:[#allocation7 + $0x34] sm:$0xf]
        %v3481 = vld [vmem:[#allocation7 + $0x38] sm:$0xf]
        %v3482 = vld [vmem:[#allocation7 + $0x3c] sm:$0xf]
        %v3483 = vld [vmem:[%s6] sm:$0x1]
        %v3485 = vperm.slane %v3483, 0
        %v3503 = vunpack.c.l.b16 %v3467
        %v3504 = vunpack.c.l.b16 %v3468
        %v3505 = vunpack.c.l.b16 %v3469
        %v3506 = vunpack.c.l.b16 %v3470
        %v3507 = vunpack.c.l.b16 %v3471
        %v3508 = vunpack.c.l.b16 %v3472
        %v3509 = vunpack.c.l.b16 %v3473
        %v3510 = vunpack.c.l.b16 %v3474
        %v3511 = vunpack.c.l.b16 %v3475
        %v3512 = vunpack.c.l.b16 %v3476
        %v3513 = vunpack.c.l.b16 %v3477
        %v3514 = vunpack.c.l.b16 %v3478
        %v3515 = vunpack.c.l.b16 %v3479
        %v3516 = vunpack.c.l.b16 %v3480
        %v3517 = vunpack.c.l.b16 %v3481
        %v3518 = vunpack.c.l.b16 %v3482
        %v3519 = vpack.c.b16 %v3504, %v3503
        %v3520 = vpack.c.b16 %v3506, %v3505
        %v3521 = vpack.c.b16 %v3508, %v3507
        %v3522 = vpack.c.b16 %v3510, %v3509
        %v3523 = vpack.c.b16 %v3512, %v3511
        %v3524 = vpack.c.b16 %v3514, %v3513
        %v3525 = vpack.c.b16 %v3516, %v3515
        %v3526 = vpack.c.b16 %v3518, %v3517
        %3535 = vmatpush.bf16.msra.mxu0 %v3526
        %3536 = vmatpush.bf16.msra.mxu0 %v3525
        %3537 = vmatpush.bf16.msra.mxu0 %v3524
        %3538 = vmatpush.bf16.msra.mxu0 %v3523
        %3539 = vmatpush.bf16.msra.mxu0 %v3522
        %3540 = vmatpush.bf16.msra.mxu0 %v3521
        %3541 = vmatpush.bf16.msra.mxu0 %v3520
        %3542 = vmatpush.bf16.msra.mxu0 %v3519
        %3543 = vmatmul.bf16.gmra.mxu0 %v3403
        %v3544 = vpop.f32.mrf.mxu0
        %v3545 = vadd.f32 %v3485, %v3544
        %v3546 = vpop.f32.mrf.mxu0
        %v3547 = vadd.f32 %v3485, %v3546
        %3548 = vmatmul.bf16.gmra.mxu0 %v3404
        %v3549 = vpop.f32.mrf.mxu0
        %v3550 = vadd.f32 %v3485, %v3549
        %v3551 = vpop.f32.mrf.mxu0
        %v3552 = vadd.f32 %v3485, %v3551
        %3553 = vmatmul.bf16.gmra.mxu0 %v3405
        %v3554 = vpop.f32.mrf.mxu0
        %v3555 = vadd.f32 %v3485, %v3554
        %v3556 = vpop.f32.mrf.mxu0
        %v3557 = vadd.f32 %v3485, %v3556
        %3558 = vmatmul.bf16.gmra.mxu0 %v3406
        %v3559 = vpop.f32.mrf.mxu0
        %v3560 = vadd.f32 %v3485, %v3559
        %v3561 = vpop.f32.mrf.mxu0
        %v3562 = vadd.f32 %v3485, %v3561
        %3563 = vmatmul.bf16.gmra.mxu0 %v3407
        %v3564 = vpop.f32.mrf.mxu0
        %v3565 = vadd.f32 %v3485, %v3564
        %v3566 = vpop.f32.mrf.mxu0
        %v3567 = vadd.f32 %v3485, %v3566
        %3568 = vmatmul.bf16.gmra.mxu0 %v3408
        %v3569 = vpop.f32.mrf.mxu0
        %v3570 = vadd.f32 %v3485, %v3569
        %v3571 = vpop.f32.mrf.mxu0
        %v3572 = vadd.f32 %v3485, %v3571
        %3573 = vmatmul.bf16.gmra.mxu0 %v3409
        %v3574 = vpop.f32.mrf.mxu0
        %v3575 = vadd.f32 %v3485, %v3574
        %v3576 = vpop.f32.mrf.mxu0
        %v3577 = vadd.f32 %v3485, %v3576
        %3578 = vmatmul.bf16.gmra.mxu0 %v3410
        %v3579 = vpop.f32.mrf.mxu0
        %v3580 = vadd.f32 %v3485, %v3579
        %v3581 = vpop.f32.mrf.mxu0
        %v3582 = vadd.f32 %v3485, %v3581
        %3583 = vmatmul.bf16.gmra.mxu0 %v3411
        %v3584 = vpop.f32.mrf.mxu0
        %v3585 = vadd.f32 %v3485, %v3584
        %v3586 = vpop.f32.mrf.mxu0
        %v3587 = vadd.f32 %v3485, %v3586
        %3588 = vmatmul.bf16.gmra.mxu0 %v3412
        %v3589 = vpop.f32.mrf.mxu0
        %v3590 = vadd.f32 %v3485, %v3589
        %v3591 = vpop.f32.mrf.mxu0
        %v3592 = vadd.f32 %v3485, %v3591
        %3593 = vmatmul.bf16.gmra.mxu0 %v3413
        %v3594 = vpop.f32.mrf.mxu0
        %v3595 = vadd.f32 %v3485, %v3594
        %v3596 = vpop.f32.mrf.mxu0
        %v3597 = vadd.f32 %v3485, %v3596
        %3598 = vmatmul.bf16.gmra.mxu0 %v3414
        %v3599 = vpop.f32.mrf.mxu0
        %v3600 = vadd.f32 %v3485, %v3599
        %v3601 = vpop.f32.mrf.mxu0
        %v3602 = vadd.f32 %v3485, %v3601
        %3603 = vmatmul.bf16.gmra.mxu0 %v3415
        %v3604 = vpop.f32.mrf.mxu0
        %v3605 = vadd.f32 %v3485, %v3604
        %v3606 = vpop.f32.mrf.mxu0
        %v3607 = vadd.f32 %v3485, %v3606
        %3608 = vmatmul.bf16.gmra.mxu0 %v3416
        %v3609 = vpop.f32.mrf.mxu0
        %v3610 = vadd.f32 %v3485, %v3609
        %v3611 = vpop.f32.mrf.mxu0
        %v3612 = vadd.f32 %v3485, %v3611
        %3613 = vmatmul.bf16.gmra.mxu0 %v3417
        %v3614 = vpop.f32.mrf.mxu0
        %v3615 = vadd.f32 %v3485, %v3614
        %v3616 = vpop.f32.mrf.mxu0
        %v3617 = vadd.f32 %v3485, %v3616
        %3618 = vmatmul.bf16.gmra.mxu0 %v3418
        %v3619 = vpop.f32.mrf.mxu0
        %v3620 = vadd.f32 %v3485, %v3619
        %v3621 = vpop.f32.mrf.mxu0
        %v3622 = vadd.f32 %v3485, %v3621
        %3623 = vmatmul.bf16.gmra.mxu0 %v3419
        %v3624 = vpop.f32.mrf.mxu0
        %v3625 = vadd.f32 %v3485, %v3624
        %v3626 = vpop.f32.mrf.mxu0
        %v3627 = vadd.f32 %v3485, %v3626
        %3628 = vmatmul.bf16.gmra.mxu0 %v3420
        %v3629 = vpop.f32.mrf.mxu0
        %v3630 = vadd.f32 %v3485, %v3629
        %v3631 = vpop.f32.mrf.mxu0
        %v3632 = vadd.f32 %v3485, %v3631
        %3633 = vmatmul.bf16.gmra.mxu0 %v3421
        %v3634 = vpop.f32.mrf.mxu0
        %v3635 = vadd.f32 %v3485, %v3634
        %v3636 = vpop.f32.mrf.mxu0
        %v3637 = vadd.f32 %v3485, %v3636
        %3638 = vmatmul.bf16.gmra.mxu0 %v3422
        %v3639 = vpop.f32.mrf.mxu0
        %v3640 = vadd.f32 %v3485, %v3639
        %v3641 = vpop.f32.mrf.mxu0
        %v3642 = vadd.f32 %v3485, %v3641
        %3643 = vmatmul.bf16.gmra.mxu0 %v3423
        %v3644 = vpop.f32.mrf.mxu0
        %v3645 = vadd.f32 %v3485, %v3644
        %v3646 = vpop.f32.mrf.mxu0
        %v3647 = vadd.f32 %v3485, %v3646
        %3648 = vmatmul.bf16.gmra.mxu0 %v3424
        %v3649 = vpop.f32.mrf.mxu0
        %v3650 = vadd.f32 %v3485, %v3649
        %v3651 = vpop.f32.mrf.mxu0
        %v3652 = vadd.f32 %v3485, %v3651
        %3653 = vmatmul.bf16.gmra.mxu0 %v3425
        %v3654 = vpop.f32.mrf.mxu0
        %v3655 = vadd.f32 %v3485, %v3654
        %v3656 = vpop.f32.mrf.mxu0
        %v3657 = vadd.f32 %v3485, %v3656
        %3658 = vmatmul.bf16.gmra.mxu0 %v3426
        %v3659 = vpop.f32.mrf.mxu0
        %v3660 = vadd.f32 %v3485, %v3659
        %v3661 = vpop.f32.mrf.mxu0
        %v3662 = vadd.f32 %v3485, %v3661
        %3663 = vmatmul.bf16.gmra.mxu0 %v3427
        %v3664 = vpop.f32.mrf.mxu0
        %v3665 = vadd.f32 %v3485, %v3664
        %v3666 = vpop.f32.mrf.mxu0
        %v3667 = vadd.f32 %v3485, %v3666
        %3668 = vmatmul.bf16.gmra.mxu0 %v3428
        %v3669 = vpop.f32.mrf.mxu0
        %v3670 = vadd.f32 %v3485, %v3669
        %v3671 = vpop.f32.mrf.mxu0
        %v3672 = vadd.f32 %v3485, %v3671
        %3673 = vmatmul.bf16.gmra.mxu0 %v3429
        %v3674 = vpop.f32.mrf.mxu0
        %v3675 = vadd.f32 %v3485, %v3674
        %v3676 = vpop.f32.mrf.mxu0
        %v3677 = vadd.f32 %v3485, %v3676
        %3678 = vmatmul.bf16.gmra.mxu0 %v3430
        %v3679 = vpop.f32.mrf.mxu0
        %v3680 = vadd.f32 %v3485, %v3679
        %v3681 = vpop.f32.mrf.mxu0
        %v3682 = vadd.f32 %v3485, %v3681
        %3683 = vmatmul.bf16.gmra.mxu0 %v3431
        %v3684 = vpop.f32.mrf.mxu0
        %v3685 = vadd.f32 %v3485, %v3684
        %v3686 = vpop.f32.mrf.mxu0
        %v3687 = vadd.f32 %v3485, %v3686
        %3688 = vmatmul.bf16.gmra.mxu0 %v3432
        %v3689 = vpop.f32.mrf.mxu0
        %v3690 = vadd.f32 %v3485, %v3689
        %v3691 = vpop.f32.mrf.mxu0
        %v3692 = vadd.f32 %v3485, %v3691
        %3693 = vmatmul.bf16.gmra.mxu0 %v3433
        %v3694 = vpop.f32.mrf.mxu0
        %v3695 = vadd.f32 %v3485, %v3694
        %v3696 = vpop.f32.mrf.mxu0
        %v3697 = vadd.f32 %v3485, %v3696
        %3698 = vmatmul.bf16.gmra.mxu0 %v3434
        %v3699 = vpop.f32.mrf.mxu0
        %v3700 = vadd.f32 %v3485, %v3699
        %v3701 = vpop.f32.mrf.mxu0
        %v3702 = vadd.f32 %v3485, %v3701
        %3703 = vmatmul.bf16.gmra.mxu0 %v3435
        %v3704 = vpop.f32.mrf.mxu0
        %v3705 = vadd.f32 %v3485, %v3704
        %v3706 = vpop.f32.mrf.mxu0
        %v3707 = vadd.f32 %v3485, %v3706
        %3708 = vmatmul.bf16.gmra.mxu0 %v3436
        %v3709 = vpop.f32.mrf.mxu0
        %v3710 = vadd.f32 %v3485, %v3709
        %v3711 = vpop.f32.mrf.mxu0
        %v3712 = vadd.f32 %v3485, %v3711
        %3713 = vmatmul.bf16.gmra.mxu0 %v3437
        %v3714 = vpop.f32.mrf.mxu0
        %v3715 = vadd.f32 %v3485, %v3714
        %v3716 = vpop.f32.mrf.mxu0
        %v3717 = vadd.f32 %v3485, %v3716
        %3718 = vmatmul.bf16.gmra.mxu0 %v3438
        %v3719 = vpop.f32.mrf.mxu0
        %v3720 = vadd.f32 %v3485, %v3719
        %v3721 = vpop.f32.mrf.mxu0
        %v3722 = vadd.f32 %v3485, %v3721
        %3723 = vmatmul.bf16.gmra.mxu0 %v3439
        %v3724 = vpop.f32.mrf.mxu0
        %v3725 = vadd.f32 %v3485, %v3724
        %v3726 = vpop.f32.mrf.mxu0
        %v3727 = vadd.f32 %v3485, %v3726
        %3728 = vmatmul.bf16.gmra.mxu0 %v3440
        %v3729 = vpop.f32.mrf.mxu0
        %v3730 = vadd.f32 %v3485, %v3729
        %v3731 = vpop.f32.mrf.mxu0
        %v3732 = vadd.f32 %v3485, %v3731
        %3733 = vmatmul.bf16.gmra.mxu0 %v3441
        %v3734 = vpop.f32.mrf.mxu0
        %v3735 = vadd.f32 %v3485, %v3734
        %v3736 = vpop.f32.mrf.mxu0
        %v3737 = vadd.f32 %v3485, %v3736
        %3738 = vmatmul.bf16.gmra.mxu0 %v3442
        %v3739 = vpop.f32.mrf.mxu0
        %v3740 = vadd.f32 %v3485, %v3739
        %v3741 = vpop.f32.mrf.mxu0
        %v3742 = vadd.f32 %v3485, %v3741
        %3743 = vmatmul.bf16.gmra.mxu0 %v3443
        %v3744 = vpop.f32.mrf.mxu0
        %v3745 = vadd.f32 %v3485, %v3744
        %v3746 = vpop.f32.mrf.mxu0
        %v3747 = vadd.f32 %v3485, %v3746
        %3748 = vmatmul.bf16.gmra.mxu0 %v3444
        %v3749 = vpop.f32.mrf.mxu0
        %v3750 = vadd.f32 %v3485, %v3749
        %v3751 = vpop.f32.mrf.mxu0
        %v3752 = vadd.f32 %v3485, %v3751
        %3753 = vmatmul.bf16.gmra.mxu0 %v3445
        %v3754 = vpop.f32.mrf.mxu0
        %v3755 = vadd.f32 %v3485, %v3754
        %v3756 = vpop.f32.mrf.mxu0
        %v3757 = vadd.f32 %v3485, %v3756
        %3758 = vmatmul.bf16.gmra.mxu0 %v3446
        %v3759 = vpop.f32.mrf.mxu0
        %v3760 = vadd.f32 %v3485, %v3759
        %v3761 = vpop.f32.mrf.mxu0
        %v3762 = vadd.f32 %v3485, %v3761
        %3763 = vmatmul.bf16.gmra.mxu0 %v3447
        %v3764 = vpop.f32.mrf.mxu0
        %v3765 = vadd.f32 %v3485, %v3764
        %v3766 = vpop.f32.mrf.mxu0
        %v3767 = vadd.f32 %v3485, %v3766
        %3768 = vmatmul.bf16.gmra.mxu0 %v3448
        %v3769 = vpop.f32.mrf.mxu0
        %v3770 = vadd.f32 %v3485, %v3769
        %v3771 = vpop.f32.mrf.mxu0
        %v3772 = vadd.f32 %v3485, %v3771
        %3773 = vmatmul.bf16.gmra.mxu0 %v3449
        %v3774 = vpop.f32.mrf.mxu0
        %v3775 = vadd.f32 %v3485, %v3774
        %v3776 = vpop.f32.mrf.mxu0
        %v3777 = vadd.f32 %v3485, %v3776
        %3778 = vmatmul.bf16.gmra.mxu0 %v3450
        %v3779 = vpop.f32.mrf.mxu0
        %v3780 = vadd.f32 %v3485, %v3779
        %v3781 = vpop.f32.mrf.mxu0
        %v3782 = vadd.f32 %v3485, %v3781
        %3783 = vmatmul.bf16.gmra.mxu0 %v3451
        %v3784 = vpop.f32.mrf.mxu0
        %v3785 = vadd.f32 %v3485, %v3784
        %v3786 = vpop.f32.mrf.mxu0
        %v3787 = vadd.f32 %v3485, %v3786
        %3788 = vmatmul.bf16.gmra.mxu0 %v3452
        %v3789 = vpop.f32.mrf.mxu0
        %v3790 = vadd.f32 %v3485, %v3789
        %v3791 = vpop.f32.mrf.mxu0
        %v3792 = vadd.f32 %v3485, %v3791
        %3793 = vmatmul.bf16.gmra.mxu0 %v3453
        %v3794 = vpop.f32.mrf.mxu0
        %v3795 = vadd.f32 %v3485, %v3794
        %v3796 = vpop.f32.mrf.mxu0
        %v3797 = vadd.f32 %v3485, %v3796
        %3798 = vmatmul.bf16.gmra.mxu0 %v3454
        %v3799 = vpop.f32.mrf.mxu0
        %v3800 = vadd.f32 %v3485, %v3799
        %v3801 = vpop.f32.mrf.mxu0
        %v3802 = vadd.f32 %v3485, %v3801
        %3803 = vmatmul.bf16.gmra.mxu0 %v3455
        %v3804 = vpop.f32.mrf.mxu0
        %v3805 = vadd.f32 %v3485, %v3804
        %v3806 = vpop.f32.mrf.mxu0
        %v3807 = vadd.f32 %v3485, %v3806
        %3808 = vmatmul.bf16.gmra.mxu0 %v3456
        %v3809 = vpop.f32.mrf.mxu0
        %v3810 = vadd.f32 %v3485, %v3809
        %v3811 = vpop.f32.mrf.mxu0
        %v3812 = vadd.f32 %v3485, %v3811
        %3813 = vmatmul.bf16.gmra.mxu0 %v3457
        %v3814 = vpop.f32.mrf.mxu0
        %v3815 = vadd.f32 %v3485, %v3814
        %v3816 = vpop.f32.mrf.mxu0
        %v3817 = vadd.f32 %v3485, %v3816
        %3818 = vmatmul.bf16.gmra.mxu0 %v3458
        %v3819 = vpop.f32.mrf.mxu0
        %v3820 = vadd.f32 %v3485, %v3819
        %v3821 = vpop.f32.mrf.mxu0
        %v3822 = vadd.f32 %v3485, %v3821
        %3823 = vmatmul.bf16.gmra.mxu0 %v3459
        %v3824 = vpop.f32.mrf.mxu0
        %v3825 = vadd.f32 %v3485, %v3824
        %v3826 = vpop.f32.mrf.mxu0
        %v3827 = vadd.f32 %v3485, %v3826
        %3828 = vmatmul.bf16.gmra.mxu0 %v3460
        %v3829 = vpop.f32.mrf.mxu0
        %v3830 = vadd.f32 %v3485, %v3829
        %v3831 = vpop.f32.mrf.mxu0
        %v3832 = vadd.f32 %v3485, %v3831
        %3833 = vmatmul.bf16.gmra.mxu0 %v3461
        %v3834 = vpop.f32.mrf.mxu0
        %v3835 = vadd.f32 %v3485, %v3834
        %v3836 = vpop.f32.mrf.mxu0
        %v3837 = vadd.f32 %v3485, %v3836
        %3838 = vmatmul.bf16.gmra.mxu0 %v3462
        %v3839 = vpop.f32.mrf.mxu0
        %v3840 = vadd.f32 %v3485, %v3839
        %v3841 = vpop.f32.mrf.mxu0
        %v3842 = vadd.f32 %v3485, %v3841
        %3843 = vmatmul.bf16.gmra.mxu0 %v3463
        %v3844 = vpop.f32.mrf.mxu0
        %v3845 = vadd.f32 %v3485, %v3844
        %v3846 = vpop.f32.mrf.mxu0
        %v3847 = vadd.f32 %v3485, %v3846
        %3848 = vmatmul.bf16.gmra.mxu0 %v3464
        %v3849 = vpop.f32.mrf.mxu0
        %v3850 = vadd.f32 %v3485, %v3849
        %v3851 = vpop.f32.mrf.mxu0
        %v3852 = vadd.f32 %v3485, %v3851
        %3853 = vmatmul.bf16.gmra.mxu0 %v3465
        %v3854 = vpop.f32.mrf.mxu0
        %v3855 = vadd.f32 %v3485, %v3854
        %v3856 = vpop.f32.mrf.mxu0
        %v3857 = vadd.f32 %v3485, %v3856
        %3858 = vmatmul.bf16.gmra.mxu0 %v3466
        %v3859 = vpop.f32.mrf.mxu0
        %v3860 = vadd.f32 %v3485, %v3859
        %v3861 = vpop.f32.mrf.mxu0
        %v3862 = vadd.f32 %v3485, %v3861
        %3863 = vdwg.mxu0
        %v3864 = vmul.f32 %v3545, 0.5
        %v3865 = vmul.f32 %v3547, 0.5
        %v3866 = vmul.f32 %v3550, 0.5
        %v3867 = vmul.f32 %v3552, 0.5
        %v3868 = vmul.f32 %v3555, 0.5
        %v3869 = vmul.f32 %v3557, 0.5
        %v3870 = vmul.f32 %v3560, 0.5
        %v3871 = vmul.f32 %v3562, 0.5
        %v3872 = vmul.f32 %v3565, 0.5
        %v3873 = vmul.f32 %v3567, 0.5
        %v3874 = vmul.f32 %v3570, 0.5
        %v3875 = vmul.f32 %v3572, 0.5
        %v3876 = vmul.f32 %v3575, 0.5
        %v3877 = vmul.f32 %v3577, 0.5
        %v3878 = vmul.f32 %v3580, 0.5
        %v3879 = vmul.f32 %v3582, 0.5
        %v3880 = vmul.f32 %v3585, 0.5
        %v3881 = vmul.f32 %v3587, 0.5
        %v3882 = vmul.f32 %v3590, 0.5
        %v3883 = vmul.f32 %v3592, 0.5
        %v3884 = vmul.f32 %v3595, 0.5
        %v3885 = vmul.f32 %v3597, 0.5
        %v3886 = vmul.f32 %v3600, 0.5
        %v3887 = vmul.f32 %v3602, 0.5
        %v3888 = vmul.f32 %v3605, 0.5
        %v3889 = vmul.f32 %v3607, 0.5
        %v3890 = vmul.f32 %v3610, 0.5
        %v3891 = vmul.f32 %v3612, 0.5
        %v3892 = vmul.f32 %v3615, 0.5
        %v3893 = vmul.f32 %v3617, 0.5
        %v3894 = vmul.f32 %v3620, 0.5
        %v3895 = vmul.f32 %v3622, 0.5
        %v3896 = vmul.f32 %v3625, 0.5
        %v3897 = vmul.f32 %v3627, 0.5
        %v3898 = vmul.f32 %v3630, 0.5
        %v3899 = vmul.f32 %v3632, 0.5
        %v3900 = vmul.f32 %v3635, 0.5
        %v3901 = vmul.f32 %v3637, 0.5
        %v3902 = vmul.f32 %v3640, 0.5
        %v3903 = vmul.f32 %v3642, 0.5
        %v3904 = vmul.f32 %v3645, 0.5
        %v3905 = vmul.f32 %v3647, 0.5
        %v3906 = vmul.f32 %v3650, 0.5
        %v3907 = vmul.f32 %v3652, 0.5
        %v3908 = vmul.f32 %v3655, 0.5
        %v3909 = vmul.f32 %v3657, 0.5
        %v3910 = vmul.f32 %v3660, 0.5
        %v3911 = vmul.f32 %v3662, 0.5
        %v3912 = vmul.f32 %v3665, 0.5
        %v3913 = vmul.f32 %v3667, 0.5
        %v3914 = vmul.f32 %v3670, 0.5
        %v3915 = vmul.f32 %v3672, 0.5
        %v3916 = vmul.f32 %v3675, 0.5
        %v3917 = vmul.f32 %v3677, 0.5
        %v3918 = vmul.f32 %v3680, 0.5
        %v3919 = vmul.f32 %v3682, 0.5
        %v3920 = vmul.f32 %v3685, 0.5
        %v3921 = vmul.f32 %v3687, 0.5
        %v3922 = vmul.f32 %v3690, 0.5
        %v3923 = vmul.f32 %v3692, 0.5
        %v3924 = vmul.f32 %v3695, 0.5
        %v3925 = vmul.f32 %v3697, 0.5
        %v3926 = vmul.f32 %v3700, 0.5
        %v3927 = vmul.f32 %v3702, 0.5
        %v3928 = vmul.f32 %v3705, 0.5
        %v3929 = vmul.f32 %v3707, 0.5
        %v3930 = vmul.f32 %v3710, 0.5
        %v3931 = vmul.f32 %v3712, 0.5
        %v3932 = vmul.f32 %v3715, 0.5
        %v3933 = vmul.f32 %v3717, 0.5
        %v3934 = vmul.f32 %v3720, 0.5
        %v3935 = vmul.f32 %v3722, 0.5
        %v3936 = vmul.f32 %v3725, 0.5
        %v3937 = vmul.f32 %v3727, 0.5
        %v3938 = vmul.f32 %v3730, 0.5
        %v3939 = vmul.f32 %v3732, 0.5
        %v3940 = vmul.f32 %v3735, 0.5
        %v3941 = vmul.f32 %v3737, 0.5
        %v3942 = vmul.f32 %v3740, 0.5
        %v3943 = vmul.f32 %v3742, 0.5
        %v3944 = vmul.f32 %v3745, 0.5
        %v3945 = vmul.f32 %v3747, 0.5
        %v3946 = vmul.f32 %v3750, 0.5
        %v3947 = vmul.f32 %v3752, 0.5
        %v3948 = vmul.f32 %v3755, 0.5
        %v3949 = vmul.f32 %v3757, 0.5
        %v3950 = vmul.f32 %v3760, 0.5
        %v3951 = vmul.f32 %v3762, 0.5
        %v3952 = vmul.f32 %v3765, 0.5
        %v3953 = vmul.f32 %v3767, 0.5
        %v3954 = vmul.f32 %v3770, 0.5
        %v3955 = vmul.f32 %v3772, 0.5
        %v3956 = vmul.f32 %v3775, 0.5
        %v3957 = vmul.f32 %v3777, 0.5
        %v3958 = vmul.f32 %v3780, 0.5
        %v3959 = vmul.f32 %v3782, 0.5
        %v3960 = vmul.f32 %v3785, 0.5
        %v3961 = vmul.f32 %v3787, 0.5
        %v3962 = vmul.f32 %v3790, 0.5
        %v3963 = vmul.f32 %v3792, 0.5
        %v3964 = vmul.f32 %v3795, 0.5
        %v3965 = vmul.f32 %v3797, 0.5
        %v3966 = vmul.f32 %v3800, 0.5
        %v3967 = vmul.f32 %v3802, 0.5
        %v3968 = vmul.f32 %v3805, 0.5
        %v3969 = vmul.f32 %v3807, 0.5
        %v3970 = vmul.f32 %v3810, 0.5
        %v3971 = vmul.f32 %v3812, 0.5
        %v3972 = vmul.f32 %v3815, 0.5
        %v3973 = vmul.f32 %v3817, 0.5
        %v3974 = vmul.f32 %v3820, 0.5
        %v3975 = vmul.f32 %v3822, 0.5
        %v3976 = vmul.f32 %v3825, 0.5
        %v3977 = vmul.f32 %v3827, 0.5
        %v3978 = vmul.f32 %v3830, 0.5
        %v3979 = vmul.f32 %v3832, 0.5
        %v3980 = vmul.f32 %v3835, 0.5
        %v3981 = vmul.f32 %v3837, 0.5
        %v3982 = vmul.f32 %v3840, 0.5
        %v3983 = vmul.f32 %v3842, 0.5
        %v3984 = vmul.f32 %v3845, 0.5
        %v3985 = vmul.f32 %v3847, 0.5
        %v3986 = vmul.f32 %v3850, 0.5
        %v3987 = vmul.f32 %v3852, 0.5
        %v3988 = vmul.f32 %v3855, 0.5
        %v3989 = vmul.f32 %v3857, 0.5
        %v3990 = vmul.f32 %v3860, 0.5
        %v3991 = vmul.f32 %v3862, 0.5
        %v3992 = vmul.f32 %v3864, 1.442695
        %v3993 = vpow.pop %v3992
        %v3994 = vmul.f32 %v3865, 1.442695
        %v3995 = vpow.pop %v3994
        %v3996 = vmul.f32 %v3866, 1.442695
        %v3997 = vpow.pop %v3996
        %v3998 = vmul.f32 %v3867, 1.442695
        %v3999 = vpow.pop %v3998
        %v4000 = vmul.f32 %v3868, 1.442695
        %v4001 = vpow.pop %v4000
        %v4002 = vmul.f32 %v3869, 1.442695
        %v4003 = vpow.pop %v4002
        %v4004 = vmul.f32 %v3870, 1.442695
        %v4005 = vpow.pop %v4004
        %v4006 = vmul.f32 %v3871, 1.442695
        %v4007 = vpow.pop %v4006
        %v4008 = vmul.f32 %v3872, 1.442695
        %v4009 = vpow.pop %v4008
        %v4010 = vmul.f32 %v3873, 1.442695
        %v4011 = vpow.pop %v4010
        %v4012 = vmul.f32 %v3874, 1.442695
        %v4013 = vpow.pop %v4012
        %v4014 = vmul.f32 %v3875, 1.442695
        %v4015 = vpow.pop %v4014
        %v4016 = vmul.f32 %v3876, 1.442695
        %v4017 = vpow.pop %v4016
        %v4018 = vmul.f32 %v3877, 1.442695
        %v4019 = vpow.pop %v4018
        %v4020 = vmul.f32 %v3878, 1.442695
        %v4021 = vpow.pop %v4020
        %v4022 = vmul.f32 %v3879, 1.442695
        %v4023 = vpow.pop %v4022
        %v4024 = vmul.f32 %v3880, 1.442695
        %v4025 = vpow.pop %v4024
        %v4026 = vmul.f32 %v3881, 1.442695
        %v4027 = vpow.pop %v4026
        %v4028 = vmul.f32 %v3882, 1.442695
        %v4029 = vpow.pop %v4028
        %v4030 = vmul.f32 %v3883, 1.442695
        %v4031 = vpow.pop %v4030
        %v4032 = vmul.f32 %v3884, 1.442695
        %v4033 = vpow.pop %v4032
        %v4034 = vmul.f32 %v3885, 1.442695
        %v4035 = vpow.pop %v4034
        %v4036 = vmul.f32 %v3886, 1.442695
        %v4037 = vpow.pop %v4036
        %v4038 = vmul.f32 %v3887, 1.442695
        %v4039 = vpow.pop %v4038
        %v4040 = vmul.f32 %v3888, 1.442695
        %v4041 = vpow.pop %v4040
        %v4042 = vmul.f32 %v3889, 1.442695
        %v4043 = vpow.pop %v4042
        %v4044 = vmul.f32 %v3890, 1.442695
        %v4045 = vpow.pop %v4044
        %v4046 = vmul.f32 %v3891, 1.442695
        %v4047 = vpow.pop %v4046
        %v4048 = vmul.f32 %v3892, 1.442695
        %v4049 = vpow.pop %v4048
        %v4050 = vmul.f32 %v3893, 1.442695
        %v4051 = vpow.pop %v4050
        %v4052 = vmul.f32 %v3894, 1.442695
        %v4053 = vpow.pop %v4052
        %v4054 = vmul.f32 %v3895, 1.442695
        %v4055 = vpow.pop %v4054
        %v4056 = vmul.f32 %v3896, 1.442695
        %v4057 = vpow.pop %v4056
        %v4058 = vmul.f32 %v3897, 1.442695
        %v4059 = vpow.pop %v4058
        %v4060 = vmul.f32 %v3898, 1.442695
        %v4061 = vpow.pop %v4060
        %v4062 = vmul.f32 %v3899, 1.442695
        %v4063 = vpow.pop %v4062
        %v4064 = vmul.f32 %v3900, 1.442695
        %v4065 = vpow.pop %v4064
        %v4066 = vmul.f32 %v3901, 1.442695
        %v4067 = vpow.pop %v4066
        %v4068 = vmul.f32 %v3902, 1.442695
        %v4069 = vpow.pop %v4068
        %v4070 = vmul.f32 %v3903, 1.442695
        %v4071 = vpow.pop %v4070
        %v4072 = vmul.f32 %v3904, 1.442695
        %v4073 = vpow.pop %v4072
        %v4074 = vmul.f32 %v3905, 1.442695
        %v4075 = vpow.pop %v4074
        %v4076 = vmul.f32 %v3906, 1.442695
        %v4077 = vpow.pop %v4076
        %v4078 = vmul.f32 %v3907, 1.442695
        %v4079 = vpow.pop %v4078
        %v4080 = vmul.f32 %v3908, 1.442695
        %v4081 = vpow.pop %v4080
        %v4082 = vmul.f32 %v3909, 1.442695
        %v4083 = vpow.pop %v4082
        %v4084 = vmul.f32 %v3910, 1.442695
        %v4085 = vpow.pop %v4084
        %v4086 = vmul.f32 %v3911, 1.442695
        %v4087 = vpow.pop %v4086
        %v4088 = vmul.f32 %v3912, 1.442695
        %v4089 = vpow.pop %v4088
        %v4090 = vmul.f32 %v3913, 1.442695
        %v4091 = vpow.pop %v4090
        %v4092 = vmul.f32 %v3914, 1.442695
        %v4093 = vpow.pop %v4092
        %v4094 = vmul.f32 %v3915, 1.442695
        %v4095 = vpow.pop %v4094
        %v4096 = vmul.f32 %v3916, 1.442695
        %v4097 = vpow.pop %v4096
        %v4098 = vmul.f32 %v3917, 1.442695
        %v4099 = vpow.pop %v4098
        %v4100 = vmul.f32 %v3918, 1.442695
        %v4101 = vpow.pop %v4100
        %v4102 = vmul.f32 %v3919, 1.442695
        %v4103 = vpow.pop %v4102
        %v4104 = vmul.f32 %v3920, 1.442695
        %v4105 = vpow.pop %v4104
        %v4106 = vmul.f32 %v3921, 1.442695
        %v4107 = vpow.pop %v4106
        %v4108 = vmul.f32 %v3922, 1.442695
        %v4109 = vpow.pop %v4108
        %v4110 = vmul.f32 %v3923, 1.442695
        %v4111 = vpow.pop %v4110
        %v4112 = vmul.f32 %v3924, 1.442695
        %v4113 = vpow.pop %v4112
        %v4114 = vmul.f32 %v3925, 1.442695
        %v4115 = vpow.pop %v4114
        %v4116 = vmul.f32 %v3926, 1.442695
        %v4117 = vpow.pop %v4116
        %v4118 = vmul.f32 %v3927, 1.442695
        %v4119 = vpow.pop %v4118
        %v4120 = vmul.f32 %v3928, 1.442695
        %v4121 = vpow.pop %v4120
        %v4122 = vmul.f32 %v3929, 1.442695
        %v4123 = vpow.pop %v4122
        %v4124 = vmul.f32 %v3930, 1.442695
        %v4125 = vpow.pop %v4124
        %v4126 = vmul.f32 %v3931, 1.442695
        %v4127 = vpow.pop %v4126
        %v4128 = vmul.f32 %v3932, 1.442695
        %v4129 = vpow.pop %v4128
        %v4130 = vmul.f32 %v3933, 1.442695
        %v4131 = vpow.pop %v4130
        %v4132 = vmul.f32 %v3934, 1.442695
        %v4133 = vpow.pop %v4132
        %v4134 = vmul.f32 %v3935, 1.442695
        %v4135 = vpow.pop %v4134
        %v4136 = vmul.f32 %v3936, 1.442695
        %v4137 = vpow.pop %v4136
        %v4138 = vmul.f32 %v3937, 1.442695
        %v4139 = vpow.pop %v4138
        %v4140 = vmul.f32 %v3938, 1.442695
        %v4141 = vpow.pop %v4140
        %v4142 = vmul.f32 %v3939, 1.442695
        %v4143 = vpow.pop %v4142
        %v4144 = vmul.f32 %v3940, 1.442695
        %v4145 = vpow.pop %v4144
        %v4146 = vmul.f32 %v3941, 1.442695
        %v4147 = vpow.pop %v4146
        %v4148 = vmul.f32 %v3942, 1.442695
        %v4149 = vpow.pop %v4148
        %v4150 = vmul.f32 %v3943, 1.442695
        %v4151 = vpow.pop %v4150
        %v4152 = vmul.f32 %v3944, 1.442695
        %v4153 = vpow.pop %v4152
        %v4154 = vmul.f32 %v3945, 1.442695
        %v4155 = vpow.pop %v4154
        %v4156 = vmul.f32 %v3946, 1.442695
        %v4157 = vpow.pop %v4156
        %v4158 = vmul.f32 %v3947, 1.442695
        %v4159 = vpow.pop %v4158
        %v4160 = vmul.f32 %v3948, 1.442695
        %v4161 = vpow.pop %v4160
        %v4162 = vmul.f32 %v3949, 1.442695
        %v4163 = vpow.pop %v4162
        %v4164 = vmul.f32 %v3950, 1.442695
        %v4165 = vpow.pop %v4164
        %v4166 = vmul.f32 %v3951, 1.442695
        %v4167 = vpow.pop %v4166
        %v4168 = vmul.f32 %v3952, 1.442695
        %v4169 = vpow.pop %v4168
        %v4170 = vmul.f32 %v3953, 1.442695
        %v4171 = vpow.pop %v4170
        %v4172 = vmul.f32 %v3954, 1.442695
        %v4173 = vpow.pop %v4172
        %v4174 = vmul.f32 %v3955, 1.442695
        %v4175 = vpow.pop %v4174
        %v4176 = vmul.f32 %v3956, 1.442695
        %v4177 = vpow.pop %v4176
        %v4178 = vmul.f32 %v3957, 1.442695
        %v4179 = vpow.pop %v4178
        %v4180 = vmul.f32 %v3958, 1.442695
        %v4181 = vpow.pop %v4180
        %v4182 = vmul.f32 %v3959, 1.442695
        %v4183 = vpow.pop %v4182
        %v4184 = vmul.f32 %v3960, 1.442695
        %v4185 = vpow.pop %v4184
        %v4186 = vmul.f32 %v3961, 1.442695
        %v4187 = vpow.pop %v4186
        %v4188 = vmul.f32 %v3962, 1.442695
        %v4189 = vpow.pop %v4188
        %v4190 = vmul.f32 %v3963, 1.442695
        %v4191 = vpow.pop %v4190
        %v4192 = vmul.f32 %v3964, 1.442695
        %v4193 = vpow.pop %v4192
        %v4194 = vmul.f32 %v3965, 1.442695
        %v4195 = vpow.pop %v4194
        %v4196 = vmul.f32 %v3966, 1.442695
        %v4197 = vpow.pop %v4196
        %v4198 = vmul.f32 %v3967, 1.442695
        %v4199 = vpow.pop %v4198
        %v4200 = vmul.f32 %v3968, 1.442695
        %v4201 = vpow.pop %v4200
        %v4202 = vmul.f32 %v3969, 1.442695
        %v4203 = vpow.pop %v4202
        %v4204 = vmul.f32 %v3970, 1.442695
        %v4205 = vpow.pop %v4204
        %v4206 = vmul.f32 %v3971, 1.442695
        %v4207 = vpow.pop %v4206
        %v4208 = vmul.f32 %v3972, 1.442695
        %v4209 = vpow.pop %v4208
        %v4210 = vmul.f32 %v3973, 1.442695
        %v4211 = vpow.pop %v4210
        %v4212 = vmul.f32 %v3974, 1.442695
        %v4213 = vpow.pop %v4212
        %v4214 = vmul.f32 %v3975, 1.442695
        %v4215 = vpow.pop %v4214
        %v4216 = vmul.f32 %v3976, 1.442695
        %v4217 = vpow.pop %v4216
        %v4218 = vmul.f32 %v3977, 1.442695
        %v4219 = vpow.pop %v4218
        %v4220 = vmul.f32 %v3978, 1.442695
        %v4221 = vpow.pop %v4220
        %v4222 = vmul.f32 %v3979, 1.442695
        %v4223 = vpow.pop %v4222
        %v4224 = vmul.f32 %v3980, 1.442695
        %v4225 = vpow.pop %v4224
        %v4226 = vmul.f32 %v3981, 1.442695
        %v4227 = vpow.pop %v4226
        %v4228 = vmul.f32 %v3982, 1.442695
        %v4229 = vpow.pop %v4228
        %v4230 = vmul.f32 %v3983, 1.442695
        %v4231 = vpow.pop %v4230
        %v4232 = vmul.f32 %v3984, 1.442695
        %v4233 = vpow.pop %v4232
        %v4234 = vmul.f32 %v3985, 1.442695
        %v4235 = vpow.pop %v4234
        %v4236 = vmul.f32 %v3986, 1.442695
        %v4237 = vpow.pop %v4236
        %v4238 = vmul.f32 %v3987, 1.442695
        %v4239 = vpow.pop %v4238
        %v4240 = vmul.f32 %v3988, 1.442695
        %v4241 = vpow.pop %v4240
        %v4242 = vmul.f32 %v3989, 1.442695
        %v4243 = vpow.pop %v4242
        %v4244 = vmul.f32 %v3990, 1.442695
        %v4245 = vpow.pop %v4244
        %v4246 = vmul.f32 %v3991, 1.442695
        %v4247 = vpow.pop %v4246
        %v4248 = vld [vmem:[%s376] sm:$0xff]
        %v4249 = vld [vmem:[%s376 + $0x8] sm:$0xff]
        %v4250 = vld [vmem:[%s376 + $0x10] sm:$0xff]
        %v4251 = vld [vmem:[%s376 + $0x18] sm:$0xff]
        %v4252 = vld [vmem:[%s376 + $0x20] sm:$0xff]
        %v4253 = vld [vmem:[%s376 + $0x28] sm:$0xff]
        %v4254 = vld [vmem:[%s376 + $0x30] sm:$0xff]
        %v4255 = vld [vmem:[%s376 + $0x38] sm:$0xff]
        %v4256 = vld [vmem:[%s376 + $0x40] sm:$0xff]
        %v4257 = vld [vmem:[%s376 + $0x48] sm:$0xff]
        %v4258 = vld [vmem:[%s376 + $0x50] sm:$0xff]
        %v4259 = vld [vmem:[%s376 + $0x58] sm:$0xff]
        %v4260 = vld [vmem:[%s376 + $0x60] sm:$0xff]
        %v4261 = vld [vmem:[%s376 + $0x68] sm:$0xff]
        %v4262 = vld [vmem:[%s376 + $0x70] sm:$0xff]
        %v4263 = vld [vmem:[%s376 + $0x78] sm:$0xff]
        %v4264 = vld [vmem:[%s376 + $0x80] sm:$0xff]
        %v4265 = vld [vmem:[%s376 + $0x88] sm:$0xff]
        %v4266 = vld [vmem:[%s376 + $0x90] sm:$0xff]
        %v4267 = vld [vmem:[%s376 + $0x98] sm:$0xff]
        %v4268 = vld [vmem:[%s376 + $0xa0] sm:$0xff]
        %v4269 = vld [vmem:[%s376 + $0xa8] sm:$0xff]
        %v4270 = vld [vmem:[%s376 + $0xb0] sm:$0xff]
        %v4271 = vld [vmem:[%s376 + $0xb8] sm:$0xff]
        %v4272 = vld [vmem:[%s376 + $0xc0] sm:$0xff]
        %v4273 = vld [vmem:[%s376 + $0xc8] sm:$0xff]
        %v4274 = vld [vmem:[%s376 + $0xd0] sm:$0xff]
        %v4275 = vld [vmem:[%s376 + $0xd8] sm:$0xff]
        %v4276 = vld [vmem:[%s376 + $0xe0] sm:$0xff]
        %v4277 = vld [vmem:[%s376 + $0xe8] sm:$0xff]
        %v4278 = vld [vmem:[%s376 + $0xf0] sm:$0xff]
        %v4279 = vld [vmem:[%s376 + $0xf8] sm:$0xff]
        %v4280 = vld [vmem:[%s376 + $0x100] sm:$0xff]
        %v4281 = vld [vmem:[%s376 + $0x108] sm:$0xff]
        %v4282 = vld [vmem:[%s376 + $0x110] sm:$0xff]
        %v4283 = vld [vmem:[%s376 + $0x118] sm:$0xff]
        %v4284 = vld [vmem:[%s376 + $0x120] sm:$0xff]
        %v4285 = vld [vmem:[%s376 + $0x128] sm:$0xff]
        %v4286 = vld [vmem:[%s376 + $0x130] sm:$0xff]
        %v4287 = vld [vmem:[%s376 + $0x138] sm:$0xff]
        %v4288 = vld [vmem:[%s376 + $0x140] sm:$0xff]
        %v4289 = vld [vmem:[%s376 + $0x148] sm:$0xff]
        %v4290 = vld [vmem:[%s376 + $0x150] sm:$0xff]
        %v4291 = vld [vmem:[%s376 + $0x158] sm:$0xff]
        %v4292 = vld [vmem:[%s376 + $0x160] sm:$0xff]
        %v4293 = vld [vmem:[%s376 + $0x168] sm:$0xff]
        %v4294 = vld [vmem:[%s376 + $0x170] sm:$0xff]
        %v4295 = vld [vmem:[%s376 + $0x178] sm:$0xff]
        %v4296 = vld [vmem:[%s376 + $0x180] sm:$0xff]
        %v4297 = vld [vmem:[%s376 + $0x188] sm:$0xff]
        %v4298 = vld [vmem:[%s376 + $0x190] sm:$0xff]
        %v4299 = vld [vmem:[%s376 + $0x198] sm:$0xff]
        %v4300 = vld [vmem:[%s376 + $0x1a0] sm:$0xff]
        %v4301 = vld [vmem:[%s376 + $0x1a8] sm:$0xff]
        %v4302 = vld [vmem:[%s376 + $0x1b0] sm:$0xff]
        %v4303 = vld [vmem:[%s376 + $0x1b8] sm:$0xff]
        %v4304 = vld [vmem:[%s376 + $0x1c0] sm:$0xff]
        %v4305 = vld [vmem:[%s376 + $0x1c8] sm:$0xff]
        %v4306 = vld [vmem:[%s376 + $0x1d0] sm:$0xff]
        %v4307 = vld [vmem:[%s376 + $0x1d8] sm:$0xff]
        %v4308 = vld [vmem:[%s376 + $0x1e0] sm:$0xff]
        %v4309 = vld [vmem:[%s376 + $0x1e8] sm:$0xff]
        %v4310 = vld [vmem:[%s376 + $0x1f0] sm:$0xff]
        %v4311 = vld [vmem:[%s376 + $0x1f8] sm:$0xff]
        %v4312 = vld [vmem:[%s376 + $0x200] sm:$0xff]
        %v4313 = vld [vmem:[%s376 + $0x208] sm:$0xff]
        %v4314 = vld [vmem:[%s376 + $0x210] sm:$0xff]
        %v4315 = vld [vmem:[%s376 + $0x218] sm:$0xff]
        %v4316 = vld [vmem:[%s376 + $0x220] sm:$0xff]
        %v4317 = vld [vmem:[%s376 + $0x228] sm:$0xff]
        %v4318 = vld [vmem:[%s376 + $0x230] sm:$0xff]
        %v4319 = vld [vmem:[%s376 + $0x238] sm:$0xff]
        %v4320 = vld [vmem:[%s376 + $0x240] sm:$0xff]
        %v4321 = vld [vmem:[%s376 + $0x248] sm:$0xff]
        %v4322 = vld [vmem:[%s376 + $0x250] sm:$0xff]
        %v4323 = vld [vmem:[%s376 + $0x258] sm:$0xff]
        %v4324 = vld [vmem:[%s376 + $0x260] sm:$0xff]
        %v4325 = vld [vmem:[%s376 + $0x268] sm:$0xff]
        %v4326 = vld [vmem:[%s376 + $0x270] sm:$0xff]
        %v4327 = vld [vmem:[%s376 + $0x278] sm:$0xff]
        %v4328 = vld [vmem:[%s376 + $0x280] sm:$0xff]
        %v4329 = vld [vmem:[%s376 + $0x288] sm:$0xff]
        %v4330 = vld [vmem:[%s376 + $0x290] sm:$0xff]
        %v4331 = vld [vmem:[%s376 + $0x298] sm:$0xff]
        %v4332 = vld [vmem:[%s376 + $0x2a0] sm:$0xff]
        %v4333 = vld [vmem:[%s376 + $0x2a8] sm:$0xff]
        %v4334 = vld [vmem:[%s376 + $0x2b0] sm:$0xff]
        %v4335 = vld [vmem:[%s376 + $0x2b8] sm:$0xff]
        %v4336 = vld [vmem:[%s376 + $0x2c0] sm:$0xff]
        %v4337 = vld [vmem:[%s376 + $0x2c8] sm:$0xff]
        %v4338 = vld [vmem:[%s376 + $0x2d0] sm:$0xff]
        %v4339 = vld [vmem:[%s376 + $0x2d8] sm:$0xff]
        %v4340 = vld [vmem:[%s376 + $0x2e0] sm:$0xff]
        %v4341 = vld [vmem:[%s376 + $0x2e8] sm:$0xff]
        %v4342 = vld [vmem:[%s376 + $0x2f0] sm:$0xff]
        %v4343 = vld [vmem:[%s376 + $0x2f8] sm:$0xff]
        %v4344 = vld [vmem:[%s376 + $0x300] sm:$0xff]
        %v4345 = vld [vmem:[%s376 + $0x308] sm:$0xff]
        %v4346 = vld [vmem:[%s376 + $0x310] sm:$0xff]
        %v4347 = vld [vmem:[%s376 + $0x318] sm:$0xff]
        %v4348 = vld [vmem:[%s376 + $0x320] sm:$0xff]
        %v4349 = vld [vmem:[%s376 + $0x328] sm:$0xff]
        %v4350 = vld [vmem:[%s376 + $0x330] sm:$0xff]
        %v4351 = vld [vmem:[%s376 + $0x338] sm:$0xff]
        %v4352 = vld [vmem:[%s376 + $0x340] sm:$0xff]
        %v4353 = vld [vmem:[%s376 + $0x348] sm:$0xff]
        %v4354 = vld [vmem:[%s376 + $0x350] sm:$0xff]
        %v4355 = vld [vmem:[%s376 + $0x358] sm:$0xff]
        %v4356 = vld [vmem:[%s376 + $0x360] sm:$0xff]
        %v4357 = vld [vmem:[%s376 + $0x368] sm:$0xff]
        %v4358 = vld [vmem:[%s376 + $0x370] sm:$0xff]
        %v4359 = vld [vmem:[%s376 + $0x378] sm:$0xff]
        %v4360 = vld [vmem:[%s376 + $0x380] sm:$0xff]
        %v4361 = vld [vmem:[%s376 + $0x388] sm:$0xff]
        %v4362 = vld [vmem:[%s376 + $0x390] sm:$0xff]
        %v4363 = vld [vmem:[%s376 + $0x398] sm:$0xff]
        %v4364 = vld [vmem:[%s376 + $0x3a0] sm:$0xff]
        %v4365 = vld [vmem:[%s376 + $0x3a8] sm:$0xff]
        %v4366 = vld [vmem:[%s376 + $0x3b0] sm:$0xff]
        %v4367 = vld [vmem:[%s376 + $0x3b8] sm:$0xff]
        %v4368 = vld [vmem:[%s376 + $0x3c0] sm:$0xff]
        %v4369 = vld [vmem:[%s376 + $0x3c8] sm:$0xff]
        %v4370 = vld [vmem:[%s376 + $0x3d0] sm:$0xff]
        %v4371 = vld [vmem:[%s376 + $0x3d8] sm:$0xff]
        %v4372 = vld [vmem:[%s376 + $0x3e0] sm:$0xff]
        %v4373 = vld [vmem:[%s376 + $0x3e8] sm:$0xff]
        %v4374 = vld [vmem:[%s376 + $0x3f0] sm:$0xff]
        %v4375 = vld [vmem:[%s376 + $0x3f8] sm:$0xff]
        %v4376 = vmul.f32 %v3993, %v4248
        %v4377 = vmul.f32 %v3995, %v4249
        %v4378 = vmul.f32 %v3997, %v4250
        %v4379 = vmul.f32 %v3999, %v4251
        %v4380 = vmul.f32 %v4001, %v4252
        %v4381 = vmul.f32 %v4003, %v4253
        %v4382 = vmul.f32 %v4005, %v4254
        %v4383 = vmul.f32 %v4007, %v4255
        %v4384 = vmul.f32 %v4009, %v4256
        %v4385 = vmul.f32 %v4011, %v4257
        %v4386 = vmul.f32 %v4013, %v4258
        %v4387 = vmul.f32 %v4015, %v4259
        %v4388 = vmul.f32 %v4017, %v4260
        %v4389 = vmul.f32 %v4019, %v4261
        %v4390 = vmul.f32 %v4021, %v4262
        %v4391 = vmul.f32 %v4023, %v4263
        %v4392 = vmul.f32 %v4025, %v4264
        %v4393 = vmul.f32 %v4027, %v4265
        %v4394 = vmul.f32 %v4029, %v4266
        %v4395 = vmul.f32 %v4031, %v4267
        %v4396 = vmul.f32 %v4033, %v4268
        %v4397 = vmul.f32 %v4035, %v4269
        %v4398 = vmul.f32 %v4037, %v4270
        %v4399 = vmul.f32 %v4039, %v4271
        %v4400 = vmul.f32 %v4041, %v4272
        %v4401 = vmul.f32 %v4043, %v4273
        %v4402 = vmul.f32 %v4045, %v4274
        %v4403 = vmul.f32 %v4047, %v4275
        %v4404 = vmul.f32 %v4049, %v4276
        %v4405 = vmul.f32 %v4051, %v4277
        %v4406 = vmul.f32 %v4053, %v4278
        %v4407 = vmul.f32 %v4055, %v4279
        %v4408 = vmul.f32 %v4057, %v4280
        %v4409 = vmul.f32 %v4059, %v4281
        %v4410 = vmul.f32 %v4061, %v4282
        %v4411 = vmul.f32 %v4063, %v4283
        %v4412 = vmul.f32 %v4065, %v4284
        %v4413 = vmul.f32 %v4067, %v4285
        %v4414 = vmul.f32 %v4069, %v4286
        %v4415 = vmul.f32 %v4071, %v4287
        %v4416 = vmul.f32 %v4073, %v4288
        %v4417 = vmul.f32 %v4075, %v4289
        %v4418 = vmul.f32 %v4077, %v4290
        %v4419 = vmul.f32 %v4079, %v4291
        %v4420 = vmul.f32 %v4081, %v4292
        %v4421 = vmul.f32 %v4083, %v4293
        %v4422 = vmul.f32 %v4085, %v4294
        %v4423 = vmul.f32 %v4087, %v4295
        %v4424 = vmul.f32 %v4089, %v4296
        %v4425 = vmul.f32 %v4091, %v4297
        %v4426 = vmul.f32 %v4093, %v4298
        %v4427 = vmul.f32 %v4095, %v4299
        %v4428 = vmul.f32 %v4097, %v4300
        %v4429 = vmul.f32 %v4099, %v4301
        %v4430 = vmul.f32 %v4101, %v4302
        %v4431 = vmul.f32 %v4103, %v4303
        %v4432 = vmul.f32 %v4105, %v4304
        %v4433 = vmul.f32 %v4107, %v4305
        %v4434 = vmul.f32 %v4109, %v4306
        %v4435 = vmul.f32 %v4111, %v4307
        %v4436 = vmul.f32 %v4113, %v4308
        %v4437 = vmul.f32 %v4115, %v4309
        %v4438 = vmul.f32 %v4117, %v4310
        %v4439 = vmul.f32 %v4119, %v4311
        %v4440 = vmul.f32 %v4121, %v4312
        %v4441 = vmul.f32 %v4123, %v4313
        %v4442 = vmul.f32 %v4125, %v4314
        %v4443 = vmul.f32 %v4127, %v4315
        %v4444 = vmul.f32 %v4129, %v4316
        %v4445 = vmul.f32 %v4131, %v4317
        %v4446 = vmul.f32 %v4133, %v4318
        %v4447 = vmul.f32 %v4135, %v4319
        %v4448 = vmul.f32 %v4137, %v4320
        %v4449 = vmul.f32 %v4139, %v4321
        %v4450 = vmul.f32 %v4141, %v4322
        %v4451 = vmul.f32 %v4143, %v4323
        %v4452 = vmul.f32 %v4145, %v4324
        %v4453 = vmul.f32 %v4147, %v4325
        %v4454 = vmul.f32 %v4149, %v4326
        %v4455 = vmul.f32 %v4151, %v4327
        %v4456 = vmul.f32 %v4153, %v4328
        %v4457 = vmul.f32 %v4155, %v4329
        %v4458 = vmul.f32 %v4157, %v4330
        %v4459 = vmul.f32 %v4159, %v4331
        %v4460 = vmul.f32 %v4161, %v4332
        %v4461 = vmul.f32 %v4163, %v4333
        %v4462 = vmul.f32 %v4165, %v4334
        %v4463 = vmul.f32 %v4167, %v4335
        %v4464 = vmul.f32 %v4169, %v4336
        %v4465 = vmul.f32 %v4171, %v4337
        %v4466 = vmul.f32 %v4173, %v4338
        %v4467 = vmul.f32 %v4175, %v4339
        %v4468 = vmul.f32 %v4177, %v4340
        %v4469 = vmul.f32 %v4179, %v4341
        %v4470 = vmul.f32 %v4181, %v4342
        %v4471 = vmul.f32 %v4183, %v4343
        %v4472 = vmul.f32 %v4185, %v4344
        %v4473 = vmul.f32 %v4187, %v4345
        %v4474 = vmul.f32 %v4189, %v4346
        %v4475 = vmul.f32 %v4191, %v4347
        %v4476 = vmul.f32 %v4193, %v4348
        %v4477 = vmul.f32 %v4195, %v4349
        %v4478 = vmul.f32 %v4197, %v4350
        %v4479 = vmul.f32 %v4199, %v4351
        %v4480 = vmul.f32 %v4201, %v4352
        %v4481 = vmul.f32 %v4203, %v4353
        %v4482 = vmul.f32 %v4205, %v4354
        %v4483 = vmul.f32 %v4207, %v4355
        %v4484 = vmul.f32 %v4209, %v4356
        %v4485 = vmul.f32 %v4211, %v4357
        %v4486 = vmul.f32 %v4213, %v4358
        %v4487 = vmul.f32 %v4215, %v4359
        %v4488 = vmul.f32 %v4217, %v4360
        %v4489 = vmul.f32 %v4219, %v4361
        %v4490 = vmul.f32 %v4221, %v4362
        %v4491 = vmul.f32 %v4223, %v4363
        %v4492 = vmul.f32 %v4225, %v4364
        %v4493 = vmul.f32 %v4227, %v4365
        %v4494 = vmul.f32 %v4229, %v4366
        %v4495 = vmul.f32 %v4231, %v4367
        %v4496 = vmul.f32 %v4233, %v4368
        %v4497 = vmul.f32 %v4235, %v4369
        %v4498 = vmul.f32 %v4237, %v4370
        %v4499 = vmul.f32 %v4239, %v4371
        %v4500 = vmul.f32 %v4241, %v4372
        %v4501 = vmul.f32 %v4243, %v4373
        %v4502 = vmul.f32 %v4245, %v4374
        %v4503 = vmul.f32 %v4247, %v4375
        %v4504 = vadd.f32 %v3545, %v4376
        %v4505 = vadd.f32 %v3547, %v4377
        %v4506 = vadd.f32 %v3550, %v4378
        %v4507 = vadd.f32 %v3552, %v4379
        %v4508 = vadd.f32 %v3555, %v4380
        %v4509 = vadd.f32 %v3557, %v4381
        %v4510 = vadd.f32 %v3560, %v4382
        %v4511 = vadd.f32 %v3562, %v4383
        %v4512 = vadd.f32 %v3565, %v4384
        %v4513 = vadd.f32 %v3567, %v4385
        %v4514 = vadd.f32 %v3570, %v4386
        %v4515 = vadd.f32 %v3572, %v4387
        %v4516 = vadd.f32 %v3575, %v4388
        %v4517 = vadd.f32 %v3577, %v4389
        %v4518 = vadd.f32 %v3580, %v4390
        %v4519 = vadd.f32 %v3582, %v4391
        %v4520 = vadd.f32 %v3585, %v4392
        %v4521 = vadd.f32 %v3587, %v4393
        %v4522 = vadd.f32 %v3590, %v4394
        %v4523 = vadd.f32 %v3592, %v4395
        %v4524 = vadd.f32 %v3595, %v4396
        %v4525 = vadd.f32 %v3597, %v4397
        %v4526 = vadd.f32 %v3600, %v4398
        %v4527 = vadd.f32 %v3602, %v4399
        %v4528 = vadd.f32 %v3605, %v4400
        %v4529 = vadd.f32 %v3607, %v4401
        %v4530 = vadd.f32 %v3610, %v4402
        %v4531 = vadd.f32 %v3612, %v4403
        %v4532 = vadd.f32 %v3615, %v4404
        %v4533 = vadd.f32 %v3617, %v4405
        %v4534 = vadd.f32 %v3620, %v4406
        %v4535 = vadd.f32 %v3622, %v4407
        %v4536 = vadd.f32 %v3625, %v4408
        %v4537 = vadd.f32 %v3627, %v4409
        %v4538 = vadd.f32 %v3630, %v4410
        %v4539 = vadd.f32 %v3632, %v4411
        %v4540 = vadd.f32 %v3635, %v4412
        %v4541 = vadd.f32 %v3637, %v4413
        %v4542 = vadd.f32 %v3640, %v4414
        %v4543 = vadd.f32 %v3642, %v4415
        %v4544 = vadd.f32 %v3645, %v4416
        %v4545 = vadd.f32 %v3647, %v4417
        %v4546 = vadd.f32 %v3650, %v4418
        %v4547 = vadd.f32 %v3652, %v4419
        %v4548 = vadd.f32 %v3655, %v4420
        %v4549 = vadd.f32 %v3657, %v4421
        %v4550 = vadd.f32 %v3660, %v4422
        %v4551 = vadd.f32 %v3662, %v4423
        %v4552 = vadd.f32 %v3665, %v4424
        %v4553 = vadd.f32 %v3667, %v4425
        %v4554 = vadd.f32 %v3670, %v4426
        %v4555 = vadd.f32 %v3672, %v4427
        %v4556 = vadd.f32 %v3675, %v4428
        %v4557 = vadd.f32 %v3677, %v4429
        %v4558 = vadd.f32 %v3680, %v4430
        %v4559 = vadd.f32 %v3682, %v4431
        %v4560 = vadd.f32 %v3685, %v4432
        %v4561 = vadd.f32 %v3687, %v4433
        %v4562 = vadd.f32 %v3690, %v4434
        %v4563 = vadd.f32 %v3692, %v4435
        %v4564 = vadd.f32 %v3695, %v4436
        %v4565 = vadd.f32 %v3697, %v4437
        %v4566 = vadd.f32 %v3700, %v4438
        %v4567 = vadd.f32 %v3702, %v4439
        %v4568 = vadd.f32 %v3705, %v4440
        %v4569 = vadd.f32 %v3707, %v4441
        %v4570 = vadd.f32 %v3710, %v4442
        %v4571 = vadd.f32 %v3712, %v4443
        %v4572 = vadd.f32 %v3715, %v4444
        %v4573 = vadd.f32 %v3717, %v4445
        %v4574 = vadd.f32 %v3720, %v4446
        %v4575 = vadd.f32 %v3722, %v4447
        %v4576 = vadd.f32 %v3725, %v4448
        %v4577 = vadd.f32 %v3727, %v4449
        %v4578 = vadd.f32 %v3730, %v4450
        %v4579 = vadd.f32 %v3732, %v4451
        %v4580 = vadd.f32 %v3735, %v4452
        %v4581 = vadd.f32 %v3737, %v4453
        %v4582 = vadd.f32 %v3740, %v4454
        %v4583 = vadd.f32 %v3742, %v4455
        %v4584 = vadd.f32 %v3745, %v4456
        %v4585 = vadd.f32 %v3747, %v4457
        %v4586 = vadd.f32 %v3750, %v4458
        %v4587 = vadd.f32 %v3752, %v4459
        %v4588 = vadd.f32 %v3755, %v4460
        %v4589 = vadd.f32 %v3757, %v4461
        %v4590 = vadd.f32 %v3760, %v4462
        %v4591 = vadd.f32 %v3762, %v4463
        %v4592 = vadd.f32 %v3765, %v4464
        %v4593 = vadd.f32 %v3767, %v4465
        %v4594 = vadd.f32 %v3770, %v4466
        %v4595 = vadd.f32 %v3772, %v4467
        %v4596 = vadd.f32 %v3775, %v4468
        %v4597 = vadd.f32 %v3777, %v4469
        %v4598 = vadd.f32 %v3780, %v4470
        %v4599 = vadd.f32 %v3782, %v4471
        %v4600 = vadd.f32 %v3785, %v4472
        %v4601 = vadd.f32 %v3787, %v4473
        %v4602 = vadd.f32 %v3790, %v4474
        %v4603 = vadd.f32 %v3792, %v4475
        %v4604 = vadd.f32 %v3795, %v4476
        %v4605 = vadd.f32 %v3797, %v4477
        %v4606 = vadd.f32 %v3800, %v4478
        %v4607 = vadd.f32 %v3802, %v4479
        %v4608 = vadd.f32 %v3805, %v4480
        %v4609 = vadd.f32 %v3807, %v4481
        %v4610 = vadd.f32 %v3810, %v4482
        %v4611 = vadd.f32 %v3812, %v4483
        %v4612 = vadd.f32 %v3815, %v4484
        %v4613 = vadd.f32 %v3817, %v4485
        %v4614 = vadd.f32 %v3820, %v4486
        %v4615 = vadd.f32 %v3822, %v4487
        %v4616 = vadd.f32 %v3825, %v4488
        %v4617 = vadd.f32 %v3827, %v4489
        %v4618 = vadd.f32 %v3830, %v4490
        %v4619 = vadd.f32 %v3832, %v4491
        %v4620 = vadd.f32 %v3835, %v4492
        %v4621 = vadd.f32 %v3837, %v4493
        %v4622 = vadd.f32 %v3840, %v4494
        %v4623 = vadd.f32 %v3842, %v4495
        %v4624 = vadd.f32 %v3845, %v4496
        %v4625 = vadd.f32 %v3847, %v4497
        %v4626 = vadd.f32 %v3850, %v4498
        %v4627 = vadd.f32 %v3852, %v4499
        %v4628 = vadd.f32 %v3855, %v4500
        %v4629 = vadd.f32 %v3857, %v4501
        %v4630 = vadd.f32 %v3860, %v4502
        %v4631 = vadd.f32 %v3862, %v4503
        %4632 = vst [vmem:[%s365] sm:$0xff] %v4504
        %4633 = vst [vmem:[%s365 + $0x8] sm:$0xff] %v4505
        %4634 = vst [vmem:[%s365 + $0x10] sm:$0xff] %v4506
        %4635 = vst [vmem:[%s365 + $0x18] sm:$0xff] %v4507
        %4636 = vst [vmem:[%s365 + $0x20] sm:$0xff] %v4508
        %4637 = vst [vmem:[%s365 + $0x28] sm:$0xff] %v4509
        %4638 = vst [vmem:[%s365 + $0x30] sm:$0xff] %v4510
        %4639 = vst [vmem:[%s365 + $0x38] sm:$0xff] %v4511
        %4640 = vst [vmem:[%s365 + $0x40] sm:$0xff] %v4512
        %4641 = vst [vmem:[%s365 + $0x48] sm:$0xff] %v4513
        %4642 = vst [vmem:[%s365 + $0x50] sm:$0xff] %v4514
        %4643 = vst [vmem:[%s365 + $0x58] sm:$0xff] %v4515
        %4644 = vst [vmem:[%s365 + $0x60] sm:$0xff] %v4516
        %4645 = vst [vmem:[%s365 + $0x68] sm:$0xff] %v4517
        %4646 = vst [vmem:[%s365 + $0x70] sm:$0xff] %v4518
        %4647 = vst [vmem:[%s365 + $0x78] sm:$0xff] %v4519
        %4648 = vst [vmem:[%s365 + $0x80] sm:$0xff] %v4520
        %4649 = vst [vmem:[%s365 + $0x88] sm:$0xff] %v4521
        %4650 = vst [vmem:[%s365 + $0x90] sm:$0xff] %v4522
        %4651 = vst [vmem:[%s365 + $0x98] sm:$0xff] %v4523
        %4652 = vst [vmem:[%s365 + $0xa0] sm:$0xff] %v4524
        %4653 = vst [vmem:[%s365 + $0xa8] sm:$0xff] %v4525
        %4654 = vst [vmem:[%s365 + $0xb0] sm:$0xff] %v4526
        %4655 = vst [vmem:[%s365 + $0xb8] sm:$0xff] %v4527
        %4656 = vst [vmem:[%s365 + $0xc0] sm:$0xff] %v4528
        %4657 = vst [vmem:[%s365 + $0xc8] sm:$0xff] %v4529
        %4658 = vst [vmem:[%s365 + $0xd0] sm:$0xff] %v4530
        %4659 = vst [vmem:[%s365 + $0xd8] sm:$0xff] %v4531
        %4660 = vst [vmem:[%s365 + $0xe0] sm:$0xff] %v4532
        %4661 = vst [vmem:[%s365 + $0xe8] sm:$0xff] %v4533
        %4662 = vst [vmem:[%s365 + $0xf0] sm:$0xff] %v4534
        %4663 = vst [vmem:[%s365 + $0xf8] sm:$0xff] %v4535
        %4664 = vst [vmem:[%s365 + $0x100] sm:$0xff] %v4536
        %4665 = vst [vmem:[%s365 + $0x108] sm:$0xff] %v4537
        %4666 = vst [vmem:[%s365 + $0x110] sm:$0xff] %v4538
        %4667 = vst [vmem:[%s365 + $0x118] sm:$0xff] %v4539
        %4668 = vst [vmem:[%s365 + $0x120] sm:$0xff] %v4540
        %4669 = vst [vmem:[%s365 + $0x128] sm:$0xff] %v4541
        %4670 = vst [vmem:[%s365 + $0x130] sm:$0xff] %v4542
        %4671 = vst [vmem:[%s365 + $0x138] sm:$0xff] %v4543
        %4672 = vst [vmem:[%s365 + $0x140] sm:$0xff] %v4544
        %4673 = vst [vmem:[%s365 + $0x148] sm:$0xff] %v4545
        %4674 = vst [vmem:[%s365 + $0x150] sm:$0xff] %v4546
        %4675 = vst [vmem:[%s365 + $0x158] sm:$0xff] %v4547
        %4676 = vst [vmem:[%s365 + $0x160] sm:$0xff] %v4548
        %4677 = vst [vmem:[%s365 + $0x168] sm:$0xff] %v4549
        %4678 = vst [vmem:[%s365 + $0x170] sm:$0xff] %v4550
        %4679 = vst [vmem:[%s365 + $0x178] sm:$0xff] %v4551
        %4680 = vst [vmem:[%s365 + $0x180] sm:$0xff] %v4552
        %4681 = vst [vmem:[%s365 + $0x188] sm:$0xff] %v4553
        %4682 = vst [vmem:[%s365 + $0x190] sm:$0xff] %v4554
        %4683 = vst [vmem:[%s365 + $0x198] sm:$0xff] %v4555
        %4684 = vst [vmem:[%s365 + $0x1a0] sm:$0xff] %v4556
        %4685 = vst [vmem:[%s365 + $0x1a8] sm:$0xff] %v4557
        %4686 = vst [vmem:[%s365 + $0x1b0] sm:$0xff] %v4558
        %4687 = vst [vmem:[%s365 + $0x1b8] sm:$0xff] %v4559
        %4688 = vst [vmem:[%s365 + $0x1c0] sm:$0xff] %v4560
        %4689 = vst [vmem:[%s365 + $0x1c8] sm:$0xff] %v4561
        %4690 = vst [vmem:[%s365 + $0x1d0] sm:$0xff] %v4562
        %4691 = vst [vmem:[%s365 + $0x1d8] sm:$0xff] %v4563
        %4692 = vst [vmem:[%s365 + $0x1e0] sm:$0xff] %v4564
        %4693 = vst [vmem:[%s365 + $0x1e8] sm:$0xff] %v4565
        %4694 = vst [vmem:[%s365 + $0x1f0] sm:$0xff] %v4566
        %4695 = vst [vmem:[%s365 + $0x1f8] sm:$0xff] %v4567
        %4696 = vst [vmem:[%s365 + $0x200] sm:$0xff] %v4568
        %4697 = vst [vmem:[%s365 + $0x208] sm:$0xff] %v4569
        %4698 = vst [vmem:[%s365 + $0x210] sm:$0xff] %v4570
        %4699 = vst [vmem:[%s365 + $0x218] sm:$0xff] %v4571
        %4700 = vst [vmem:[%s365 + $0x220] sm:$0xff] %v4572
        %4701 = vst [vmem:[%s365 + $0x228] sm:$0xff] %v4573
        %4702 = vst [vmem:[%s365 + $0x230] sm:$0xff] %v4574
        %4703 = vst [vmem:[%s365 + $0x238] sm:$0xff] %v4575
        %4704 = vst [vmem:[%s365 + $0x240] sm:$0xff] %v4576
        %4705 = vst [vmem:[%s365 + $0x248] sm:$0xff] %v4577
        %4706 = vst [vmem:[%s365 + $0x250] sm:$0xff] %v4578
        %4707 = vst [vmem:[%s365 + $0x258] sm:$0xff] %v4579
        %4708 = vst [vmem:[%s365 + $0x260] sm:$0xff] %v4580
        %4709 = vst [vmem:[%s365 + $0x268] sm:$0xff] %v4581
        %4710 = vst [vmem:[%s365 + $0x270] sm:$0xff] %v4582
        %4711 = vst [vmem:[%s365 + $0x278] sm:$0xff] %v4583
        %4712 = vst [vmem:[%s365 + $0x280] sm:$0xff] %v4584
        %4713 = vst [vmem:[%s365 + $0x288] sm:$0xff] %v4585
        %4714 = vst [vmem:[%s365 + $0x290] sm:$0xff] %v4586
        %4715 = vst [vmem:[%s365 + $0x298] sm:$0xff] %v4587
        %4716 = vst [vmem:[%s365 + $0x2a0] sm:$0xff] %v4588
        %4717 = vst [vmem:[%s365 + $0x2a8] sm:$0xff] %v4589
        %4718 = vst [vmem:[%s365 + $0x2b0] sm:$0xff] %v4590
        %4719 = vst [vmem:[%s365 + $0x2b8] sm:$0xff] %v4591
        %4720 = vst [vmem:[%s365 + $0x2c0] sm:$0xff] %v4592
        %4721 = vst [vmem:[%s365 + $0x2c8] sm:$0xff] %v4593
        %4722 = vst [vmem:[%s365 + $0x2d0] sm:$0xff] %v4594
        %4723 = vst [vmem:[%s365 + $0x2d8] sm:$0xff] %v4595
        %4724 = vst [vmem:[%s365 + $0x2e0] sm:$0xff] %v4596
        %4725 = vst [vmem:[%s365 + $0x2e8] sm:$0xff] %v4597
        %4726 = vst [vmem:[%s365 + $0x2f0] sm:$0xff] %v4598
        %4727 = vst [vmem:[%s365 + $0x2f8] sm:$0xff] %v4599
        %4728 = vst [vmem:[%s365 + $0x300] sm:$0xff] %v4600
        %4729 = vst [vmem:[%s365 + $0x308] sm:$0xff] %v4601
        %4730 = vst [vmem:[%s365 + $0x310] sm:$0xff] %v4602
        %4731 = vst [vmem:[%s365 + $0x318] sm:$0xff] %v4603
        %4732 = vst [vmem:[%s365 + $0x320] sm:$0xff] %v4604
        %4733 = vst [vmem:[%s365 + $0x328] sm:$0xff] %v4605
        %4734 = vst [vmem:[%s365 + $0x330] sm:$0xff] %v4606
        %4735 = vst [vmem:[%s365 + $0x338] sm:$0xff] %v4607
        %4736 = vst [vmem:[%s365 + $0x340] sm:$0xff] %v4608
        %4737 = vst [vmem:[%s365 + $0x348] sm:$0xff] %v4609
        %4738 = vst [vmem:[%s365 + $0x350] sm:$0xff] %v4610
        %4739 = vst [vmem:[%s365 + $0x358] sm:$0xff] %v4611
        %4740 = vst [vmem:[%s365 + $0x360] sm:$0xff] %v4612
        %4741 = vst [vmem:[%s365 + $0x368] sm:$0xff] %v4613
        %4742 = vst [vmem:[%s365 + $0x370] sm:$0xff] %v4614
        %4743 = vst [vmem:[%s365 + $0x378] sm:$0xff] %v4615
        %4744 = vst [vmem:[%s365 + $0x380] sm:$0xff] %v4616
        %4745 = vst [vmem:[%s365 + $0x388] sm:$0xff] %v4617
        %4746 = vst [vmem:[%s365 + $0x390] sm:$0xff] %v4618
        %4747 = vst [vmem:[%s365 + $0x398] sm:$0xff] %v4619
        %4748 = vst [vmem:[%s365 + $0x3a0] sm:$0xff] %v4620
        %4749 = vst [vmem:[%s365 + $0x3a8] sm:$0xff] %v4621
        %4750 = vst [vmem:[%s365 + $0x3b0] sm:$0xff] %v4622
        %4751 = vst [vmem:[%s365 + $0x3b8] sm:$0xff] %v4623
        %4752 = vst [vmem:[%s365 + $0x3c0] sm:$0xff] %v4624
        %4753 = vst [vmem:[%s365 + $0x3c8] sm:$0xff] %v4625
        %4754 = vst [vmem:[%s365 + $0x3d0] sm:$0xff] %v4626
        %4755 = vst [vmem:[%s365 + $0x3d8] sm:$0xff] %v4627
        %4756 = vst [vmem:[%s365 + $0x3e0] sm:$0xff] %v4628
        %4757 = vst [vmem:[%s365 + $0x3e8] sm:$0xff] %v4629
        %4758 = vst [vmem:[%s365 + $0x3f0] sm:$0xff] %v4630
        %4759 = vst [vmem:[%s365 + $0x3f8] sm:$0xff] %v4631
        %s4760 = sand.u32 %s210, 1
        %s4761 = scalar_lea.sflag [#allocation4], %s4760
        %s4762 = sand.u32 %s210, 1
        %s4763 = smul.addr %s4762, 1024
        %s4764 = scalar_lea.vmem [#allocation8], %s4763
        // Predicated region
        $region65: #{tpu_custom_call.1} parent=51 // pred_check
          %p4765 = pneg %p220
        $region66: #{tpu_custom_call.1} parent=51 // pred_check_branch
          %4767 = sbr.rel (%p4765) target = $region68
        $region67: #{tpu_custom_call.1} parent=51 // pred_region
          %s4768 = smul.u32 128, %s24
          %4770 = vsyncadd %s4761, 0
          %s4771 = smul.addr %s4768, 8
          %s4772 = scalar_lea.hbm %s8, %s4771
          %s4773 = sshll.u32 %s4764, 4
          %s4774 = int_to_ptr.vmem [resolvable:$true] %s4773
          %s4775 = sshll.u32 %s4772, 4
          %s4776 = int_to_ptr.hbm [resolvable:$true] %s4775
          %4781 = dma.vmem_to_hbm [thread:$0]  %s4774, 16384, %s4776, %s4761, 128, 128, 8
        $region68: #{tpu_custom_call.1} parent=51 // pred_fallthru
          _
      $region52: #{tpu_custom_call.1} parent=5 // pred_fallthru
        _
      %p4782 = scmp.le.s32.totalorder 2, %s19
      // Predicated region
      $region69: #{tpu_custom_call.1} parent=5 // pred_check
        %p4783 = pneg %p4782
      $region70: #{tpu_custom_call.1} parent=5 // pred_check_branch
        %4785 = sbr.rel (%p4783) target = $region72
      $region71: #{tpu_custom_call.1} parent=5 // pred_region
        %s4786 = ssub.s32 %s19, 2
        // Predicated region
        $region73: #{tpu_custom_call.1} parent=71 // pred_check
          %p4787 = pneg %p226
        $region74: #{tpu_custom_call.1} parent=71 // pred_check_branch
          %4789 = sbr.rel (%p4787) target = $region76
        $region75: #{tpu_custom_call.1} parent=71 // pred_region
          %s4790 = sand.u32 %s211, 1
          %s4791 = scalar_lea.sflag [#allocation4], %s4790
          %s4792 = sand.u32 %s211, 1
          %s4793 = smul.addr %s4792, 1024
          %s4794 = scalar_lea.vmem [#allocation8], %s4793
          %4796 = dma.done %s4791, 16384
        $region76: #{tpu_custom_call.1} parent=71 // pred_fallthru
          _
      $region72: #{tpu_custom_call.1} parent=5 // pred_fallthru
        _
    $region6: #{tpu_custom_call.1} parent=1 // loop_footer
      %s23 = sadd.s32 1, %s19
    $region7: #{tpu_custom_call.1} parent=1 // loop_footer_branch
      %18 = sbr.rel target = $region3
    $region8: #{tpu_custom_call.1} parent=1 // loop_exit
      _
    %4797 = vsyncpa [#allocation3], 1
    %s4798 = scalar_lea.sflag [#allocation3], 1
    %4799 = vsyncpa %s4798, 1
    %4800 = vsyncpa [#allocation6], 1
    %4801 = vsyncpa [#allocation4], 1
    %s4802 = scalar_lea.sflag [#allocation4], 1
    %4803 = vsyncpa %s4802, 1

</llo_original>
